<compile_context>
chip_gen: v7x
topology: tpu7x:2x2x1
jax: 0.10.0
libtpu: 0.0.40
codegen_flags: <defaults>
</compile_context>

<pallas_src>
import numpy as np
import jax
import jax.numpy as jnp
from jax import lax
from jax.experimental import pallas as pl
from jax.experimental.pallas import tpu as pltpu


# ----------------------------------------------------------------------------
# Model geometry (classic CIFAR LeNet implied by the 16*5*5 flatten).
# ----------------------------------------------------------------------------
B = 2
C0, H, W = 3, 32, 32
C1, C2 = 6, 16
KH = KW = 5
TAPS = KH * KW              # 25
PH2 = 5
S2 = PH2 * PH2              # 25 spatial features per channel after pool2
FEAT = C2 * S2              # 400
F1, F2, NOUT = 120, 84, 10
NPAD = 128                  # lane-dense padding for the fully-connected layers

# Flattened-canvas working widths (column p = y*W + x on the original 32x32 grid).
SEG = H * W                                    # 1024 columns per image
L1 = SEG - ((KH - 1) * W + (KW - 1))           # 892: conv1 output canvas width
L1P = L1 - (W + 1)                             # 859: pool1 output canvas width
L2 = L1P - (2 * (KH - 1) * W + 2 * (KW - 1))   # 595: conv2 output canvas width
L2P = L2 - (2 * W + 2)                         # 529: pool2 output canvas width

# Sublane (row) layout: batch fused on rows, padded to 8/16-aligned blocks.
XROWS = 8                   # padded input rows: 6 data + 1 ones + 1 zero
XONE = B * C0               # 6: index of the all-ones row in the padded input
R1 = 16                     # conv1 out rows: 12 data + 1 ones-propagator + 3 zero
PONE = B * C1               # 12: index of the all-ones row in pool1 output
R2 = B * C2                 # 32 conv2 output rows
K1 = TAPS * XROWS           # 200: conv1 stacked contraction dim
K2 = TAPS * R1              # 400: conv2 stacked contraction dim
FLAT = C2 * 32              # 512: 32-lane-aligned channel slots for fc1 input
SMPAD = 568                 # sel (529) + mask (32) rows, padded to mult. of 8

# fc pack row layout (lane width NPAD = 128).
FC1_OFF, FC2_OFF, FC3_OFF = 0, 512, 640
BSUM_OFF = 768              # 2 rows: 0/1 batch-sum matrix (lanes 0..31)
B1_OFF, B2_OFF, B3_OFF = 770, 771, 772
FCROWS = 776


# ----------------------------------------------------------------------------
# Fused Pallas kernel: conv1+ReLU+pool1 -> conv2+ReLU+pool2 -> fc1/fc2/fc3
# ----------------------------------------------------------------------------
def _lenet_fused_kernel(x_ref, w1_ref, w2_ref, sm_ref, fc_ref, o_ref,
                        stk1, stk2):
    f32 = jnp.float32
    x = x_ref[...]                                            # (8, 1024)

    # ---- conv1: stack 25 taps along K (8-row aligned blocks), one MXU dot ----
    for k in range(TAPS):
        s = (k // KW) * W + (k % KW)
        stk1[k * XROWS:(k + 1) * XROWS, :] = x[:, s:s + L1]
    acc1 = jnp.maximum(
        jnp.dot(w1_ref[...], stk1[...], preferred_element_type=f32), 0.0)   # (16, 892)

    # ---- pool1: 2x2 max as shifted maxima on the canvas (no compaction) -----
    p1 = jnp.maximum(jnp.maximum(acc1[:, 0:L1P], acc1[:, 1:1 + L1P]),
                     jnp.maximum(acc1[:, W:W + L1P], acc1[:, W + 1:W + 1 + L1P]))

    # ---- conv2 on the stride-2 grid: (400, 595) tap stack, one MXU dot -------
    for k in range(TAPS):
        s = 2 * ((k // KW) * W + (k % KW))
        stk2[k * R1:(k + 1) * R1, :] = p1[:, s:s + L2]
    acc2 = jnp.maximum(
        jnp.dot(w2_ref[...], stk2[...], preferred_element_type=f32), 0.0)   # (32, 595)

    # ---- pool2 (stride-2 grid -> shifts of 2 / 2*W) ---------------------------
    p2 = jnp.maximum(jnp.maximum(acc2[:, 0:L2P], acc2[:, 2:2 + L2P]),
                     jnp.maximum(acc2[:, 2 * W:2 * W + L2P],
                                 acc2[:, 2 * W + 2:2 * W + 2 + L2P]))        # (32, 529)

    # ---- flatten: channel c's 25 features land at lanes [32c, 32c+25) --------
    sel = sm_ref[0:L2P, :]                                    # (529, 512) 0/1
    msk = sm_ref[L2P:L2P + R2, :]                             # (32, 512)  0/1
    tm = jnp.dot(p2, sel, preferred_element_type=f32) * msk   # (32, 512)
    bsum = fc_ref[BSUM_OFF:BSUM_OFF + B, :][:, 0:R2]          # (2, 32) 0/1
    flat = jnp.dot(bsum, tm, preferred_element_type=f32)      # (2, 512)

    # ---- fc1 (+ReLU), fc2 (+ReLU), fc3 — all lane-padded to 128 --------------
    h = jnp.maximum(jnp.dot(flat, fc_ref[FC1_OFF:FC1_OFF + FLAT, :],
                            preferred_element_type=f32)
                    + fc_ref[B1_OFF:B1_OFF + 1, :], 0.0)
    h = jnp.maximum(jnp.dot(h, fc_ref[FC2_OFF:FC2_OFF + NPAD, :],
                            preferred_element_type=f32)
                    + fc_ref[B2_OFF:B2_OFF + 1, :], 0.0)
    o_ref[...] = (jnp.dot(h, fc_ref[FC3_OFF:FC3_OFF + NPAD, :],
                          preferred_element_type=f32)
                  + fc_ref[B3_OFF:B3_OFF + 1, :])


# ----------------------------------------------------------------------------
# Host-side parameter packing (done once, outside the jitted forward).
# ----------------------------------------------------------------------------
def pack_params(params):
    cw1 = np.asarray(params["conv1_w"], np.float32)   # (6, 3, 5, 5)
    cb1 = np.asarray(params["conv1_b"], np.float32)
    cw2 = np.asarray(params["conv2_w"], np.float32)   # (16, 6, 5, 5)
    cb2 = np.asarray(params["conv2_b"], np.float32)

    # conv1 weight: block-diagonal over batch, tap-k block = stack cols
    # [k*8, k*8+8); bias folded via the ones row (col 6 of tap 0).
    w1 = np.zeros((R1, K1), np.float32)
    for b in range(B):
        for oc in range(C1):
            m = b * C1 + oc
            for k in range(TAPS):
                i, j = divmod(k, KW)
                w1[m, k * XROWS + b * C0: k * XROWS + b * C0 + C0] = cw1[oc, :, i, j]
            w1[m, XONE] = cb1[oc]
    w1[PONE, XONE] = 1.0            # row 12 propagates the ones row for conv2's bias

    # conv2 weight: block-diagonal over batch, tap-k block = stack cols
    # [k*16, k*16+16); bias via the ones row of pool1 (col 12 of tap 0).
    w2 = np.zeros((R2, K2), np.float32)
    for b in range(B):
        for oc in range(C2):
            m = b * C2 + oc
            for k in range(TAPS):
                i, j = divmod(k, KW)
                w2[m, k * R1 + b * C1: k * R1 + b * C1 + C1] = cw2[oc, :, i, j]
            w2[m, PONE] = cb2[oc]

    # sel (529 x 512): pooled-2 value (py, px) at canvas col 128*py + 4*px maps
    # to lane 32*c + (5*py + px) of EVERY channel slot c (mask picks the right c).
    sm = np.zeros((SMPAD, FLAT), np.float32)
    for py in range(PH2):
        for px in range(PH2):
            s = py * PH2 + px
            col = 4 * W * py + 4 * px
            sm[col, 32 * np.arange(C2) + s] = 1.0
    # mask (32 x 512): row b*16+c keeps only its own 32-lane slot.
    for b in range(B):
        for c in range(C2):
            sm[L2P + b * C2 + c, 32 * c: 32 * c + 32] = 1.0

    # fc pack (776 x 128): fc1 rows scattered to 32-aligned slots, fc2, fc3,
    # the 0/1 batch-sum matrix and the three bias rows.
    fcp = np.zeros((FCROWS, NPAD), np.float32)
    f1w = np.asarray(params["fc1_w"], np.float32)     # (400, 120)
    for c in range(C2):
        fcp[32 * c: 32 * c + S2, :F1] = f1w[c * S2:(c + 1) * S2, :]
    fcp[FC2_OFF:FC2_OFF + F1, :F2] = np.asarray(params["fc2_w"], np.float32)
    fcp[FC3_OFF:FC3_OFF + F2, :NOUT] = np.asarray(params["fc3_w"], np.float32)
    for b in range(B):
        fcp[BSUM_OFF + b, b * C2:(b + 1) * C2] = 1.0
    fcp[B1_OFF, :F1] = np.asarray(params["fc1_b"], np.float32)
    fcp[B2_OFF, :F2] = np.asarray(params["fc2_b"], np.float32)
    fcp[B3_OFF, :NOUT] = np.asarray(params["fc3_b"], np.float32)

    return {"w1": jnp.asarray(w1), "w2": jnp.asarray(w2),
            "sm": jnp.asarray(sm), "fc": jnp.asarray(fcp)}


_COST = pl.CostEstimate(
    flops=2 * (R1 * K1 * L1 + R2 * K2 * L2 + R2 * L2P * FLAT
               + B * R2 * FLAT + B * FLAT * NPAD + 2 * B * NPAD * NPAD),
    transcendentals=0,
    bytes_accessed=4 * (XROWS * SEG + R1 * K1 + R2 * K2 + SMPAD * FLAT
                        + FCROWS * NPAD + B * NPAD),
)


@jax.jit
def custom_prediction_forward(packed, x):
    # x: (B, 3, 32, 32) NCHW.  Host glue: flatten rows + append ones/zero rows.
    xr = x.astype(jnp.float32).reshape(B * C0, SEG)
    xp = jnp.concatenate(
        [xr, jnp.ones((1, SEG), jnp.float32), jnp.zeros((1, SEG), jnp.float32)],
        axis=0)                                              # (8, 1024)
    vmem = pl.BlockSpec(memory_space=pltpu.MemorySpace.VMEM)
    out = pl.pallas_call(
        _lenet_fused_kernel,
        out_shape=jax.ShapeDtypeStruct((B, NPAD), jnp.float32),
        in_specs=[vmem] * 5,
        out_specs=vmem,
        scratch_shapes=[pltpu.VMEM((K1, L1), jnp.float32),   # conv1 tap stack
                        pltpu.VMEM((K2, L2), jnp.float32)],  # conv2 tap stack
        cost_estimate=_COST,
    )(xp, packed["w1"], packed["w2"], packed["sm"], packed["fc"])
    return out[:, :NOUT]


# ----------------------------------------------------------------------------
# Parameters + pure-JAX reference
# ----------------------------------------------------------------------------
def init_params(key):
    ks = jax.random.split(key, 10)

    def u(k, shape, fan_in):
        bound = 1.0 / float(fan_in) ** 0.5
        return jax.random.uniform(k, shape, jnp.float32, -bound, bound)

    return {
        "conv1_w": u(ks[0], (C1, C0, KH, KW), C0 * KH * KW),
        "conv1_b": u(ks[1], (C1,), C0 * KH * KW),
        "conv2_w": u(ks[2], (C2, C1, KH, KW), C1 * KH * KW),
        "conv2_b": u(ks[3], (C2,), C1 * KH * KW),
        "fc1_w": u(ks[4], (FEAT, F1), FEAT),
        "fc1_b": u(ks[5], (F1,), FEAT),
        "fc2_w": u(ks[6], (F1, F2), F1),
        "fc2_b": u(ks[7], (F2,), F1),
        "fc3_w": u(ks[8], (F2, NOUT), F2),
        "fc3_b": u(ks[9], (NOUT,), F2),
    }


def reference_forward(params, x):
    dn = ("NCHW", "OIHW", "NCHW")

    def conv(x, w, b):
        y = lax.conv_general_dilated(x, w, (1, 1), "VALID", dimension_numbers=dn)
        return jnp.maximum(y + b.reshape(1, -1, 1, 1), 0.0)

    def pool(x):
        return lax.reduce_window(
            x, -jnp.inf, lax.max, (1, 1, 2, 2), (1, 1, 2, 2), "VALID")

    x = pool(conv(x, params["conv1_w"], params["conv1_b"]))
    x = pool(conv(x, params["conv2_w"], params["conv2_b"]))
    x = x.reshape(-1, FEAT)
    x = jnp.maximum(x @ params["fc1_w"] + params["fc1_b"], 0.0)
    x = jnp.maximum(x @ params["fc2_w"] + params["fc2_b"], 0.0)
    return x @ params["fc3_w"] + params["fc3_b"]


if __name__ == "__main__":
    key = jax.random.PRNGKey(0)
    pkey, xkey = jax.random.split(key)
    params = init_params(pkey)
    packed = pack_params(params)
    x = jax.random.normal(xkey, (B, C0, H, W), dtype=jnp.float32)

    out = jax.block_until_ready(custom_prediction_forward(packed, x))
    assert out.shape == (B, NOUT), out.shape

    ref = jax.block_until_ready(reference_forward(params, x))
    assert jnp.allclose(out, ref, rtol=1e-3, atol=1e-3), (
        float(jnp.max(jnp.abs(out - ref))))
    print("KERNEL_OK")
</pallas_src>

<mosaic_0001>
module attributes {stable_mosaic.version = 11 : i64} {
  func.func @_lenet_fused_kernel(%arg0: memref<8x1024xf32, #tpu.memory_space<vmem>>, %arg1: memref<16x200xf32, #tpu.memory_space<vmem>>, %arg2: memref<32x400xf32, #tpu.memory_space<vmem>>, %arg3: memref<568x512xf32, #tpu.memory_space<vmem>>, %arg4: memref<776x128xf32, #tpu.memory_space<vmem>>, %arg5: memref<2x128xf32, #tpu.memory_space<vmem>>, %arg6: memref<200x892xf32, #tpu.memory_space<vmem>>, %arg7: memref<400x595xf32, #tpu.memory_space<vmem>>) attributes {dimension_semantics = [], scalar_prefetch = 0 : i64, scratch_operands = 2 : i64, tpu.core_type = #tpu.core_type<tc>} {
    %c0 = arith.constant 0 : index
    %c0_0 = arith.constant 0 : index
    %0 = vector.load %arg0[%c0, %c0_0] : memref<8x1024xf32, #tpu.memory_space<vmem>>, vector<8x1024xf32>
    %1 = vector.extract_strided_slice %0 {offsets = [0, 0], sizes = [8, 892], strides = [1, 1]} : vector<8x1024xf32> to vector<8x892xf32>
    %c0_1 = arith.constant 0 : index
    %c0_2 = arith.constant 0 : index
    %2 = vector.load %arg6[%c0_1, %c0_2] : memref<200x892xf32, #tpu.memory_space<vmem>>, vector<8x892xf32>
    tpu.vector_store %arg6[%c0_1, %c0_2], %1 {strides = array<i32>} : memref<200x892xf32, #tpu.memory_space<vmem>>, vector<8x892xf32>,
    %3 = vector.extract_strided_slice %0 {offsets = [0, 1], sizes = [8, 892], strides = [1, 1]} : vector<8x1024xf32> to vector<8x892xf32>
    %c8 = arith.constant 8 : index
    %c0_3 = arith.constant 0 : index
    %4 = vector.load %arg6[%c8, %c0_3] : memref<200x892xf32, #tpu.memory_space<vmem>>, vector<8x892xf32>
    tpu.vector_store %arg6[%c8, %c0_3], %3 {strides = array<i32>} : memref<200x892xf32, #tpu.memory_space<vmem>>, vector<8x892xf32>,
    %5 = vector.extract_strided_slice %0 {offsets = [0, 2], sizes = [8, 892], strides = [1, 1]} : vector<8x1024xf32> to vector<8x892xf32>
    %c16 = arith.constant 16 : index
    %c0_4 = arith.constant 0 : index
    %6 = vector.load %arg6[%c16, %c0_4] : memref<200x892xf32, #tpu.memory_space<vmem>>, vector<8x892xf32>
    tpu.vector_store %arg6[%c16, %c0_4], %5 {strides = array<i32>} : memref<200x892xf32, #tpu.memory_space<vmem>>, vector<8x892xf32>,
    %7 = vector.extract_strided_slice %0 {offsets = [0, 3], sizes = [8, 892], strides = [1, 1]} : vector<8x1024xf32> to vector<8x892xf32>
    %c24 = arith.constant 24 : index
    %c0_5 = arith.constant 0 : index
    %8 = vector.load %arg6[%c24, %c0_5] : memref<200x892xf32, #tpu.memory_space<vmem>>, vector<8x892xf32>
    tpu.vector_store %arg6[%c24, %c0_5], %7 {strides = array<i32>} : memref<200x892xf32, #tpu.memory_space<vmem>>, vector<8x892xf32>,
    %9 = vector.extract_strided_slice %0 {offsets = [0, 4], sizes = [8, 892], strides = [1, 1]} : vector<8x1024xf32> to vector<8x892xf32>
    %c32 = arith.constant 32 : index
    %c0_6 = arith.constant 0 : index
    %10 = vector.load %arg6[%c32, %c0_6] : memref<200x892xf32, #tpu.memory_space<vmem>>, vector<8x892xf32>
    tpu.vector_store %arg6[%c32, %c0_6], %9 {strides = array<i32>} : memref<200x892xf32, #tpu.memory_space<vmem>>, vector<8x892xf32>,
    %11 = vector.extract_strided_slice %0 {offsets = [0, 32], sizes = [8, 892], strides = [1, 1]} : vector<8x1024xf32> to vector<8x892xf32>
    %c40 = arith.constant 40 : index
    %c0_7 = arith.constant 0 : index
    %12 = vector.load %arg6[%c40, %c0_7] : memref<200x892xf32, #tpu.memory_space<vmem>>, vector<8x892xf32>
    tpu.vector_store %arg6[%c40, %c0_7], %11 {strides = array<i32>} : memref<200x892xf32, #tpu.memory_space<vmem>>, vector<8x892xf32>,
    %13 = vector.extract_strided_slice %0 {offsets = [0, 33], sizes = [8, 892], strides = [1, 1]} : vector<8x1024xf32> to vector<8x892xf32>
    %c48 = arith.constant 48 : index
    %c0_8 = arith.constant 0 : index
    %14 = vector.load %arg6[%c48, %c0_8] : memref<200x892xf32, #tpu.memory_space<vmem>>, vector<8x892xf32>
    tpu.vector_store %arg6[%c48, %c0_8], %13 {strides = array<i32>} : memref<200x892xf32, #tpu.memory_space<vmem>>, vector<8x892xf32>,
    %15 = vector.extract_strided_slice %0 {offsets = [0, 34], sizes = [8, 892], strides = [1, 1]} : vector<8x1024xf32> to vector<8x892xf32>
    %c56 = arith.constant 56 : index
    %c0_9 = arith.constant 0 : index
    %16 = vector.load %arg6[%c56, %c0_9] : memref<200x892xf32, #tpu.memory_space<vmem>>, vector<8x892xf32>
    tpu.vector_store %arg6[%c56, %c0_9], %15 {strides = array<i32>} : memref<200x892xf32, #tpu.memory_space<vmem>>, vector<8x892xf32>,
    %17 = vector.extract_strided_slice %0 {offsets = [0, 35], sizes = [8, 892], strides = [1, 1]} : vector<8x1024xf32> to vector<8x892xf32>
    %c64 = arith.constant 64 : index
    %c0_10 = arith.constant 0 : index
    %18 = vector.load %arg6[%c64, %c0_10] : memref<200x892xf32, #tpu.memory_space<vmem>>, vector<8x892xf32>
    tpu.vector_store %arg6[%c64, %c0_10], %17 {strides = array<i32>} : memref<200x892xf32, #tpu.memory_space<vmem>>, vector<8x892xf32>,
    %19 = vector.extract_strided_slice %0 {offsets = [0, 36], sizes = [8, 892], strides = [1, 1]} : vector<8x1024xf32> to vector<8x892xf32>
    %c72 = arith.constant 72 : index
    %c0_11 = arith.constant 0 : index
    %20 = vector.load %arg6[%c72, %c0_11] : memref<200x892xf32, #tpu.memory_space<vmem>>, vector<8x892xf32>
    tpu.vector_store %arg6[%c72, %c0_11], %19 {strides = array<i32>} : memref<200x892xf32, #tpu.memory_space<vmem>>, vector<8x892xf32>,
    %21 = vector.extract_strided_slice %0 {offsets = [0, 64], sizes = [8, 892], strides = [1, 1]} : vector<8x1024xf32> to vector<8x892xf32>
    %c80 = arith.constant 80 : index
    %c0_12 = arith.constant 0 : index
    %22 = vector.load %arg6[%c80, %c0_12] : memref<200x892xf32, #tpu.memory_space<vmem>>, vector<8x892xf32>
    tpu.vector_store %arg6[%c80, %c0_12], %21 {strides = array<i32>} : memref<200x892xf32, #tpu.memory_space<vmem>>, vector<8x892xf32>,
    %23 = vector.extract_strided_slice %0 {offsets = [0, 65], sizes = [8, 892], strides = [1, 1]} : vector<8x1024xf32> to vector<8x892xf32>
    %c88 = arith.constant 88 : index
    %c0_13 = arith.constant 0 : index
    %24 = vector.load %arg6[%c88, %c0_13] : memref<200x892xf32, #tpu.memory_space<vmem>>, vector<8x892xf32>
    tpu.vector_store %arg6[%c88, %c0_13], %23 {strides = array<i32>} : memref<200x892xf32, #tpu.memory_space<vmem>>, vector<8x892xf32>,
    %25 = vector.extract_strided_slice %0 {offsets = [0, 66], sizes = [8, 892], strides = [1, 1]} : vector<8x1024xf32> to vector<8x892xf32>
    %c96 = arith.constant 96 : index
    %c0_14 = arith.constant 0 : index
    %26 = vector.load %arg6[%c96, %c0_14] : memref<200x892xf32, #tpu.memory_space<vmem>>, vector<8x892xf32>
    tpu.vector_store %arg6[%c96, %c0_14], %25 {strides = array<i32>} : memref<200x892xf32, #tpu.memory_space<vmem>>, vector<8x892xf32>,
    %27 = vector.extract_strided_slice %0 {offsets = [0, 67], sizes = [8, 892], strides = [1, 1]} : vector<8x1024xf32> to vector<8x892xf32>
    %c104 = arith.constant 104 : index
    %c0_15 = arith.constant 0 : index
    %28 = vector.load %arg6[%c104, %c0_15] : memref<200x892xf32, #tpu.memory_space<vmem>>, vector<8x892xf32>
    tpu.vector_store %arg6[%c104, %c0_15], %27 {strides = array<i32>} : memref<200x892xf32, #tpu.memory_space<vmem>>, vector<8x892xf32>,
    %29 = vector.extract_strided_slice %0 {offsets = [0, 68], sizes = [8, 892], strides = [1, 1]} : vector<8x1024xf32> to vector<8x892xf32>
    %c112 = arith.constant 112 : index
    %c0_16 = arith.constant 0 : index
    %30 = vector.load %arg6[%c112, %c0_16] : memref<200x892xf32, #tpu.memory_space<vmem>>, vector<8x892xf32>
    tpu.vector_store %arg6[%c112, %c0_16], %29 {strides = array<i32>} : memref<200x892xf32, #tpu.memory_space<vmem>>, vector<8x892xf32>,
    %31 = vector.extract_strided_slice %0 {offsets = [0, 96], sizes = [8, 892], strides = [1, 1]} : vector<8x1024xf32> to vector<8x892xf32>
    %c120 = arith.constant 120 : index
    %c0_17 = arith.constant 0 : index
    %32 = vector.load %arg6[%c120, %c0_17] : memref<200x892xf32, #tpu.memory_space<vmem>>, vector<8x892xf32>
    tpu.vector_store %arg6[%c120, %c0_17], %31 {strides = array<i32>} : memref<200x892xf32, #tpu.memory_space<vmem>>, vector<8x892xf32>,
    %33 = vector.extract_strided_slice %0 {offsets = [0, 97], sizes = [8, 892], strides = [1, 1]} : vector<8x1024xf32> to vector<8x892xf32>
    %c128 = arith.constant 128 : index
    %c0_18 = arith.constant 0 : index
    %34 = vector.load %arg6[%c128, %c0_18] : memref<200x892xf32, #tpu.memory_space<vmem>>, vector<8x892xf32>
    tpu.vector_store %arg6[%c128, %c0_18], %33 {strides = array<i32>} : memref<200x892xf32, #tpu.memory_space<vmem>>, vector<8x892xf32>,
    %35 = vector.extract_strided_slice %0 {offsets = [0, 98], sizes = [8, 892], strides = [1, 1]} : vector<8x1024xf32> to vector<8x892xf32>
    %c136 = arith.constant 136 : index
    %c0_19 = arith.constant 0 : index
    %36 = vector.load %arg6[%c136, %c0_19] : memref<200x892xf32, #tpu.memory_space<vmem>>, vector<8x892xf32>
    tpu.vector_store %arg6[%c136, %c0_19], %35 {strides = array<i32>} : memref<200x892xf32, #tpu.memory_space<vmem>>, vector<8x892xf32>,
    %37 = vector.extract_strided_slice %0 {offsets = [0, 99], sizes = [8, 892], strides = [1, 1]} : vector<8x1024xf32> to vector<8x892xf32>
    %c144 = arith.constant 144 : index
    %c0_20 = arith.constant 0 : index
    %38 = vector.load %arg6[%c144, %c0_20] : memref<200x892xf32, #tpu.memory_space<vmem>>, vector<8x892xf32>
    tpu.vector_store %arg6[%c144, %c0_20], %37 {strides = array<i32>} : memref<200x892xf32, #tpu.memory_space<vmem>>, vector<8x892xf32>,
    %39 = vector.extract_strided_slice %0 {offsets = [0, 100], sizes = [8, 892], strides = [1, 1]} : vector<8x1024xf32> to vector<8x892xf32>
    %c152 = arith.constant 152 : index
    %c0_21 = arith.constant 0 : index
    %40 = vector.load %arg6[%c152, %c0_21] : memref<200x892xf32, #tpu.memory_space<vmem>>, vector<8x892xf32>
    tpu.vector_store %arg6[%c152, %c0_21], %39 {strides = array<i32>} : memref<200x892xf32, #tpu.memory_space<vmem>>, vector<8x892xf32>,
    %41 = vector.extract_strided_slice %0 {offsets = [0, 128], sizes = [8, 892], strides = [1, 1]} : vector<8x1024xf32> to vector<8x892xf32>
    %c160 = arith.constant 160 : index
    %c0_22 = arith.constant 0 : index
    %42 = vector.load %arg6[%c160, %c0_22] : memref<200x892xf32, #tpu.memory_space<vmem>>, vector<8x892xf32>
    tpu.vector_store %arg6[%c160, %c0_22], %41 {strides = array<i32>} : memref<200x892xf32, #tpu.memory_space<vmem>>, vector<8x892xf32>,
    %43 = vector.extract_strided_slice %0 {offsets = [0, 129], sizes = [8, 892], strides = [1, 1]} : vector<8x1024xf32> to vector<8x892xf32>
    %c168 = arith.constant 168 : index
    %c0_23 = arith.constant 0 : index
    %44 = vector.load %arg6[%c168, %c0_23] : memref<200x892xf32, #tpu.memory_space<vmem>>, vector<8x892xf32>
    tpu.vector_store %arg6[%c168, %c0_23], %43 {strides = array<i32>} : memref<200x892xf32, #tpu.memory_space<vmem>>, vector<8x892xf32>,
    %45 = vector.extract_strided_slice %0 {offsets = [0, 130], sizes = [8, 892], strides = [1, 1]} : vector<8x1024xf32> to vector<8x892xf32>
    %c176 = arith.constant 176 : index
    %c0_24 = arith.constant 0 : index
    %46 = vector.load %arg6[%c176, %c0_24] : memref<200x892xf32, #tpu.memory_space<vmem>>, vector<8x892xf32>
    tpu.vector_store %arg6[%c176, %c0_24], %45 {strides = array<i32>} : memref<200x892xf32, #tpu.memory_space<vmem>>, vector<8x892xf32>,
    %47 = vector.extract_strided_slice %0 {offsets = [0, 131], sizes = [8, 892], strides = [1, 1]} : vector<8x1024xf32> to vector<8x892xf32>
    %c184 = arith.constant 184 : index
    %c0_25 = arith.constant 0 : index
    %48 = vector.load %arg6[%c184, %c0_25] : memref<200x892xf32, #tpu.memory_space<vmem>>, vector<8x892xf32>
    tpu.vector_store %arg6[%c184, %c0_25], %47 {strides = array<i32>} : memref<200x892xf32, #tpu.memory_space<vmem>>, vector<8x892xf32>,
    %49 = vector.extract_strided_slice %0 {offsets = [0, 132], sizes = [8, 892], strides = [1, 1]} : vector<8x1024xf32> to vector<8x892xf32>
    %c192 = arith.constant 192 : index
    %c0_26 = arith.constant 0 : index
    %50 = vector.load %arg6[%c192, %c0_26] : memref<200x892xf32, #tpu.memory_space<vmem>>, vector<8x892xf32>
    tpu.vector_store %arg6[%c192, %c0_26], %49 {strides = array<i32>} : memref<200x892xf32, #tpu.memory_space<vmem>>, vector<8x892xf32>,
    %c0_27 = arith.constant 0 : index
    %c0_28 = arith.constant 0 : index
    %51 = vector.load %arg1[%c0_27, %c0_28] : memref<16x200xf32, #tpu.memory_space<vmem>>, vector<16x200xf32>
    %c0_29 = arith.constant 0 : index
    %c0_30 = arith.constant 0 : index
    %52 = vector.load %arg6[%c0_29, %c0_30] : memref<200x892xf32, #tpu.memory_space<vmem>>, vector<200x892xf32>
    %cst = arith.constant dense<0.000000e+00> : vector<16x892xf32>
    %53 = tpu.matmul %51, %52, %cst {dimension_numbers = #tpu.dot_dimension_numbers<[1], [0], [0], [1], [0, 0, 1, 1], [], []>} : vector<16x200xf32>, vector<200x892xf32>, vector<16x892xf32> -> vector<16x892xf32>
    %cst_31 = arith.constant 0.000000e+00 : f32
    %54 = vector.broadcast %cst_31 : f32 to vector<16x892xf32>
    %55 = arith.maximumf %53, %54 : vector<16x892xf32>
    %56 = vector.extract_strided_slice %55 {offsets = [0, 0], sizes = [16, 859], strides = [1, 1]} : vector<16x892xf32> to vector<16x859xf32>
    %57 = vector.extract_strided_slice %55 {offsets = [0, 1], sizes = [16, 859], strides = [1, 1]} : vector<16x892xf32> to vector<16x859xf32>
    %58 = arith.maximumf %56, %57 : vector<16x859xf32>
    %59 = vector.extract_strided_slice %55 {offsets = [0, 32], sizes = [16, 859], strides = [1, 1]} : vector<16x892xf32> to vector<16x859xf32>
    %60 = vector.extract_strided_slice %55 {offsets = [0, 33], sizes = [16, 859], strides = [1, 1]} : vector<16x892xf32> to vector<16x859xf32>
    %61 = arith.maximumf %59, %60 : vector<16x859xf32>
    %62 = arith.maximumf %58, %61 : vector<16x859xf32>
    %63 = vector.extract_strided_slice %62 {offsets = [0, 0], sizes = [16, 595], strides = [1, 1]} : vector<16x859xf32> to vector<16x595xf32>
    %c0_32 = arith.constant 0 : index
    %c0_33 = arith.constant 0 : index
    %64 = vector.load %arg7[%c0_32, %c0_33] : memref<400x595xf32, #tpu.memory_space<vmem>>, vector<16x595xf32>
    tpu.vector_store %arg7[%c0_32, %c0_33], %63 {strides = array<i32>} : memref<400x595xf32, #tpu.memory_space<vmem>>, vector<16x595xf32>,
    %65 = vector.extract_strided_slice %62 {offsets = [0, 2], sizes = [16, 595], strides = [1, 1]} : vector<16x859xf32> to vector<16x595xf32>
    %c16_34 = arith.constant 16 : index
    %c0_35 = arith.constant 0 : index
    %66 = vector.load %arg7[%c16_34, %c0_35] : memref<400x595xf32, #tpu.memory_space<vmem>>, vector<16x595xf32>
    tpu.vector_store %arg7[%c16_34, %c0_35], %65 {strides = array<i32>} : memref<400x595xf32, #tpu.memory_space<vmem>>, vector<16x595xf32>,
    %67 = vector.extract_strided_slice %62 {offsets = [0, 4], sizes = [16, 595], strides = [1, 1]} : vector<16x859xf32> to vector<16x595xf32>
    %c32_36 = arith.constant 32 : index
    %c0_37 = arith.constant 0 : index
    %68 = vector.load %arg7[%c32_36, %c0_37] : memref<400x595xf32, #tpu.memory_space<vmem>>, vector<16x595xf32>
    tpu.vector_store %arg7[%c32_36, %c0_37], %67 {strides = array<i32>} : memref<400x595xf32, #tpu.memory_space<vmem>>, vector<16x595xf32>,
    %69 = vector.extract_strided_slice %62 {offsets = [0, 6], sizes = [16, 595], strides = [1, 1]} : vector<16x859xf32> to vector<16x595xf32>
    %c48_38 = arith.constant 48 : index
    %c0_39 = arith.constant 0 : index
    %70 = vector.load %arg7[%c48_38, %c0_39] : memref<400x595xf32, #tpu.memory_space<vmem>>, vector<16x595xf32>
    tpu.vector_store %arg7[%c48_38, %c0_39], %69 {strides = array<i32>} : memref<400x595xf32, #tpu.memory_space<vmem>>, vector<16x595xf32>,
    %71 = vector.extract_strided_slice %62 {offsets = [0, 8], sizes = [16, 595], strides = [1, 1]} : vector<16x859xf32> to vector<16x595xf32>
    %c64_40 = arith.constant 64 : index
    %c0_41 = arith.constant 0 : index
    %72 = vector.load %arg7[%c64_40, %c0_41] : memref<400x595xf32, #tpu.memory_space<vmem>>, vector<16x595xf32>
    tpu.vector_store %arg7[%c64_40, %c0_41], %71 {strides = array<i32>} : memref<400x595xf32, #tpu.memory_space<vmem>>, vector<16x595xf32>,
    %73 = vector.extract_strided_slice %62 {offsets = [0, 64], sizes = [16, 595], strides = [1, 1]} : vector<16x859xf32> to vector<16x595xf32>
    %c80_42 = arith.constant 80 : index
    %c0_43 = arith.constant 0 : index
    %74 = vector.load %arg7[%c80_42, %c0_43] : memref<400x595xf32, #tpu.memory_space<vmem>>, vector<16x595xf32>
    tpu.vector_store %arg7[%c80_42, %c0_43], %73 {strides = array<i32>} : memref<400x595xf32, #tpu.memory_space<vmem>>, vector<16x595xf32>,
    %75 = vector.extract_strided_slice %62 {offsets = [0, 66], sizes = [16, 595], strides = [1, 1]} : vector<16x859xf32> to vector<16x595xf32>
    %c96_44 = arith.constant 96 : index
    %c0_45 = arith.constant 0 : index
    %76 = vector.load %arg7[%c96_44, %c0_45] : memref<400x595xf32, #tpu.memory_space<vmem>>, vector<16x595xf32>
    tpu.vector_store %arg7[%c96_44, %c0_45], %75 {strides = array<i32>} : memref<400x595xf32, #tpu.memory_space<vmem>>, vector<16x595xf32>,
    %77 = vector.extract_strided_slice %62 {offsets = [0, 68], sizes = [16, 595], strides = [1, 1]} : vector<16x859xf32> to vector<16x595xf32>
    %c112_46 = arith.constant 112 : index
    %c0_47 = arith.constant 0 : index
    %78 = vector.load %arg7[%c112_46, %c0_47] : memref<400x595xf32, #tpu.memory_space<vmem>>, vector<16x595xf32>
    tpu.vector_store %arg7[%c112_46, %c0_47], %77 {strides = array<i32>} : memref<400x595xf32, #tpu.memory_space<vmem>>, vector<16x595xf32>,
    %79 = vector.extract_strided_slice %62 {offsets = [0, 70], sizes = [16, 595], strides = [1, 1]} : vector<16x859xf32> to vector<16x595xf32>
    %c128_48 = arith.constant 128 : index
    %c0_49 = arith.constant 0 : index
    %80 = vector.load %arg7[%c128_48, %c0_49] : memref<400x595xf32, #tpu.memory_space<vmem>>, vector<16x595xf32>
    tpu.vector_store %arg7[%c128_48, %c0_49], %79 {strides = array<i32>} : memref<400x595xf32, #tpu.memory_space<vmem>>, vector<16x595xf32>,
    %81 = vector.extract_strided_slice %62 {offsets = [0, 72], sizes = [16, 595], strides = [1, 1]} : vector<16x859xf32> to vector<16x595xf32>
    %c144_50 = arith.constant 144 : index
    %c0_51 = arith.constant 0 : index
    %82 = vector.load %arg7[%c144_50, %c0_51] : memref<400x595xf32, #tpu.memory_space<vmem>>, vector<16x595xf32>
    tpu.vector_store %arg7[%c144_50, %c0_51], %81 {strides = array<i32>} : memref<400x595xf32, #tpu.memory_space<vmem>>, vector<16x595xf32>,
    %83 = vector.extract_strided_slice %62 {offsets = [0, 128], sizes = [16, 595], strides = [1, 1]} : vector<16x859xf32> to vector<16x595xf32>
    %c160_52 = arith.constant 160 : index
    %c0_53 = arith.constant 0 : index
    %84 = vector.load %arg7[%c160_52, %c0_53] : memref<400x595xf32, #tpu.memory_space<vmem>>, vector<16x595xf32>
    tpu.vector_store %arg7[%c160_52, %c0_53], %83 {strides = array<i32>} : memref<400x595xf32, #tpu.memory_space<vmem>>, vector<16x595xf32>,
    %85 = vector.extract_strided_slice %62 {offsets = [0, 130], sizes = [16, 595], strides = [1, 1]} : vector<16x859xf32> to vector<16x595xf32>
    %c176_54 = arith.constant 176 : index
    %c0_55 = arith.constant 0 : index
    %86 = vector.load %arg7[%c176_54, %c0_55] : memref<400x595xf32, #tpu.memory_space<vmem>>, vector<16x595xf32>
    tpu.vector_store %arg7[%c176_54, %c0_55], %85 {strides = array<i32>} : memref<400x595xf32, #tpu.memory_space<vmem>>, vector<16x595xf32>,
    %87 = vector.extract_strided_slice %62 {offsets = [0, 132], sizes = [16, 595], strides = [1, 1]} : vector<16x859xf32> to vector<16x595xf32>
    %c192_56 = arith.constant 192 : index
    %c0_57 = arith.constant 0 : index
    %88 = vector.load %arg7[%c192_56, %c0_57] : memref<400x595xf32, #tpu.memory_space<vmem>>, vector<16x595xf32>
    tpu.vector_store %arg7[%c192_56, %c0_57], %87 {strides = array<i32>} : memref<400x595xf32, #tpu.memory_space<vmem>>, vector<16x595xf32>,
    %89 = vector.extract_strided_slice %62 {offsets = [0, 134], sizes = [16, 595], strides = [1, 1]} : vector<16x859xf32> to vector<16x595xf32>
    %c208 = arith.constant 208 : index
    %c0_58 = arith.constant 0 : index
    %90 = vector.load %arg7[%c208, %c0_58] : memref<400x595xf32, #tpu.memory_space<vmem>>, vector<16x595xf32>
    tpu.vector_store %arg7[%c208, %c0_58], %89 {strides = array<i32>} : memref<400x595xf32, #tpu.memory_space<vmem>>, vector<16x595xf32>,
    %91 = vector.extract_strided_slice %62 {offsets = [0, 136], sizes = [16, 595], strides = [1, 1]} : vector<16x859xf32> to vector<16x595xf32>
    %c224 = arith.constant 224 : index
    %c0_59 = arith.constant 0 : index
    %92 = vector.load %arg7[%c224, %c0_59] : memref<400x595xf32, #tpu.memory_space<vmem>>, vector<16x595xf32>
    tpu.vector_store %arg7[%c224, %c0_59], %91 {strides = array<i32>} : memref<400x595xf32, #tpu.memory_space<vmem>>, vector<16x595xf32>,
    %93 = vector.extract_strided_slice %62 {offsets = [0, 192], sizes = [16, 595], strides = [1, 1]} : vector<16x859xf32> to vector<16x595xf32>
    %c240 = arith.constant 240 : index
    %c0_60 = arith.constant 0 : index
    %94 = vector.load %arg7[%c240, %c0_60] : memref<400x595xf32, #tpu.memory_space<vmem>>, vector<16x595xf32>
    tpu.vector_store %arg7[%c240, %c0_60], %93 {strides = array<i32>} : memref<400x595xf32, #tpu.memory_space<vmem>>, vector<16x595xf32>,
    %95 = vector.extract_strided_slice %62 {offsets = [0, 194], sizes = [16, 595], strides = [1, 1]} : vector<16x859xf32> to vector<16x595xf32>
    %c256 = arith.constant 256 : index
    %c0_61 = arith.constant 0 : index
    %96 = vector.load %arg7[%c256, %c0_61] : memref<400x595xf32, #tpu.memory_space<vmem>>, vector<16x595xf32>
    tpu.vector_store %arg7[%c256, %c0_61], %95 {strides = array<i32>} : memref<400x595xf32, #tpu.memory_space<vmem>>, vector<16x595xf32>,
    %97 = vector.extract_strided_slice %62 {offsets = [0, 196], sizes = [16, 595], strides = [1, 1]} : vector<16x859xf32> to vector<16x595xf32>
    %c272 = arith.constant 272 : index
    %c0_62 = arith.constant 0 : index
    %98 = vector.load %arg7[%c272, %c0_62] : memref<400x595xf32, #tpu.memory_space<vmem>>, vector<16x595xf32>
    tpu.vector_store %arg7[%c272, %c0_62], %97 {strides = array<i32>} : memref<400x595xf32, #tpu.memory_space<vmem>>, vector<16x595xf32>,
    %99 = vector.extract_strided_slice %62 {offsets = [0, 198], sizes = [16, 595], strides = [1, 1]} : vector<16x859xf32> to vector<16x595xf32>
    %c288 = arith.constant 288 : index
    %c0_63 = arith.constant 0 : index
    %100 = vector.load %arg7[%c288, %c0_63] : memref<400x595xf32, #tpu.memory_space<vmem>>, vector<16x595xf32>
    tpu.vector_store %arg7[%c288, %c0_63], %99 {strides = array<i32>} : memref<400x595xf32, #tpu.memory_space<vmem>>, vector<16x595xf32>,
    %101 = vector.extract_strided_slice %62 {offsets = [0, 200], sizes = [16, 595], strides = [1, 1]} : vector<16x859xf32> to vector<16x595xf32>
    %c304 = arith.constant 304 : index
    %c0_64 = arith.constant 0 : index
    %102 = vector.load %arg7[%c304, %c0_64] : memref<400x595xf32, #tpu.memory_space<vmem>>, vector<16x595xf32>
    tpu.vector_store %arg7[%c304, %c0_64], %101 {strides = array<i32>} : memref<400x595xf32, #tpu.memory_space<vmem>>, vector<16x595xf32>,
    %103 = vector.extract_strided_slice %62 {offsets = [0, 256], sizes = [16, 595], strides = [1, 1]} : vector<16x859xf32> to vector<16x595xf32>
    %c320 = arith.constant 320 : index
    %c0_65 = arith.constant 0 : index
    %104 = vector.load %arg7[%c320, %c0_65] : memref<400x595xf32, #tpu.memory_space<vmem>>, vector<16x595xf32>
    tpu.vector_store %arg7[%c320, %c0_65], %103 {strides = array<i32>} : memref<400x595xf32, #tpu.memory_space<vmem>>, vector<16x595xf32>,
    %105 = vector.extract_strided_slice %62 {offsets = [0, 258], sizes = [16, 595], strides = [1, 1]} : vector<16x859xf32> to vector<16x595xf32>
    %c336 = arith.constant 336 : index
    %c0_66 = arith.constant 0 : index
    %106 = vector.load %arg7[%c336, %c0_66] : memref<400x595xf32, #tpu.memory_space<vmem>>, vector<16x595xf32>
    tpu.vector_store %arg7[%c336, %c0_66], %105 {strides = array<i32>} : memref<400x595xf32, #tpu.memory_space<vmem>>, vector<16x595xf32>,
    %107 = vector.extract_strided_slice %62 {offsets = [0, 260], sizes = [16, 595], strides = [1, 1]} : vector<16x859xf32> to vector<16x595xf32>
    %c352 = arith.constant 352 : index
    %c0_67 = arith.constant 0 : index
    %108 = vector.load %arg7[%c352, %c0_67] : memref<400x595xf32, #tpu.memory_space<vmem>>, vector<16x595xf32>
    tpu.vector_store %arg7[%c352, %c0_67], %107 {strides = array<i32>} : memref<400x595xf32, #tpu.memory_space<vmem>>, vector<16x595xf32>,
    %109 = vector.extract_strided_slice %62 {offsets = [0, 262], sizes = [16, 595], strides = [1, 1]} : vector<16x859xf32> to vector<16x595xf32>
    %c368 = arith.constant 368 : index
    %c0_68 = arith.constant 0 : index
    %110 = vector.load %arg7[%c368, %c0_68] : memref<400x595xf32, #tpu.memory_space<vmem>>, vector<16x595xf32>
    tpu.vector_store %arg7[%c368, %c0_68], %109 {strides = array<i32>} : memref<400x595xf32, #tpu.memory_space<vmem>>, vector<16x595xf32>,
    %111 = vector.extract_strided_slice %62 {offsets = [0, 264], sizes = [16, 595], strides = [1, 1]} : vector<16x859xf32> to vector<16x595xf32>
    %c384 = arith.constant 384 : index
    %c0_69 = arith.constant 0 : index
    %112 = vector.load %arg7[%c384, %c0_69] : memref<400x595xf32, #tpu.memory_space<vmem>>, vector<16x595xf32>
    tpu.vector_store %arg7[%c384, %c0_69], %111 {strides = array<i32>} : memref<400x595xf32, #tpu.memory_space<vmem>>, vector<16x595xf32>,
    %c0_70 = arith.constant 0 : index
    %c0_71 = arith.constant 0 : index
    %113 = vector.load %arg2[%c0_70, %c0_71] : memref<32x400xf32, #tpu.memory_space<vmem>>, vector<32x400xf32>
    %c0_72 = arith.constant 0 : index
    %c0_73 = arith.constant 0 : index
    %114 = vector.load %arg7[%c0_72, %c0_73] : memref<400x595xf32, #tpu.memory_space<vmem>>, vector<400x595xf32>
    %cst_74 = arith.constant dense<0.000000e+00> : vector<32x595xf32>
    %115 = tpu.matmul %113, %114, %cst_74 {dimension_numbers = #tpu.dot_dimension_numbers<[1], [0], [0], [1], [0, 0, 1, 1], [], []>} : vector<32x400xf32>, vector<400x595xf32>, vector<32x595xf32> -> vector<32x595xf32>
    %cst_75 = arith.constant 0.000000e+00 : f32
    %116 = vector.broadcast %cst_75 : f32 to vector<32x595xf32>
    %117 = arith.maximumf %115, %116 : vector<32x595xf32>
    %118 = vector.extract_strided_slice %117 {offsets = [0, 0], sizes = [32, 529], strides = [1, 1]} : vector<32x595xf32> to vector<32x529xf32>
    %119 = vector.extract_strided_slice %117 {offsets = [0, 2], sizes = [32, 529], strides = [1, 1]} : vector<32x595xf32> to vector<32x529xf32>
    %120 = arith.maximumf %118, %119 : vector<32x529xf32>
    %121 = vector.extract_strided_slice %117 {offsets = [0, 64], sizes = [32, 529], strides = [1, 1]} : vector<32x595xf32> to vector<32x529xf32>
    %122 = vector.extract_strided_slice %117 {offsets = [0, 66], sizes = [32, 529], strides = [1, 1]} : vector<32x595xf32> to vector<32x529xf32>
    %123 = arith.maximumf %121, %122 : vector<32x529xf32>
    %124 = arith.maximumf %120, %123 : vector<32x529xf32>
    %c0_76 = arith.constant 0 : index
    %c0_77 = arith.constant 0 : index
    %125 = vector.load %arg3[%c0_76, %c0_77] : memref<568x512xf32, #tpu.memory_space<vmem>>, vector<529x512xf32>
    %c529 = arith.constant 529 : index
    %c0_78 = arith.constant 0 : index
    %126 = vector.load %arg3[%c529, %c0_78] : memref<568x512xf32, #tpu.memory_space<vmem>>, vector<32x512xf32>
    %cst_79 = arith.constant dense<0.000000e+00> : vector<32x512xf32>
    %127 = tpu.matmul %124, %125, %cst_79 {dimension_numbers = #tpu.dot_dimension_numbers<[1], [0], [0], [1], [0, 0, 1, 1], [], []>} : vector<32x529xf32>, vector<529x512xf32>, vector<32x512xf32> -> vector<32x512xf32>
    %128 = arith.mulf %127, %126 : vector<32x512xf32>
    %c768 = arith.constant 768 : index
    %c0_80 = arith.constant 0 : index
    %129 = vector.load %arg4[%c768, %c0_80] : memref<776x128xf32, #tpu.memory_space<vmem>>, vector<2x128xf32>
    %130 = vector.extract_strided_slice %129 {offsets = [0, 0], sizes = [2, 32], strides = [1, 1]} : vector<2x128xf32> to vector<2x32xf32>
    %cst_81 = arith.constant dense<0.000000e+00> : vector<2x512xf32>
    %131 = tpu.matmul %130, %128, %cst_81 {dimension_numbers = #tpu.dot_dimension_numbers<[1], [0], [0], [1], [0, 0, 1, 1], [], []>} : vector<2x32xf32>, vector<32x512xf32>, vector<2x512xf32> -> vector<2x512xf32>
    %c0_82 = arith.constant 0 : index
    %c0_83 = arith.constant 0 : index
    %132 = vector.load %arg4[%c0_82, %c0_83] : memref<776x128xf32, #tpu.memory_space<vmem>>, vector<512x128xf32>
    %cst_84 = arith.constant dense<0.000000e+00> : vector<2x128xf32>
    %133 = tpu.matmul %131, %132, %cst_84 {dimension_numbers = #tpu.dot_dimension_numbers<[1], [0], [0], [1], [0, 0, 1, 1], [], []>} : vector<2x512xf32>, vector<512x128xf32>, vector<2x128xf32> -> vector<2x128xf32>
    %c770 = arith.constant 770 : index
    %c0_85 = arith.constant 0 : index
    %134 = vector.load %arg4[%c770, %c0_85] : memref<776x128xf32, #tpu.memory_space<vmem>>, vector<1x128xf32>
    %135 = vector.broadcast %134 : vector<1x128xf32> to vector<2x128xf32>
    %136 = arith.addf %133, %135 : vector<2x128xf32>
    %cst_86 = arith.constant 0.000000e+00 : f32
    %137 = vector.broadcast %cst_86 : f32 to vector<2x128xf32>
    %138 = arith.maximumf %136, %137 : vector<2x128xf32>
    %c512 = arith.constant 512 : index
    %c0_87 = arith.constant 0 : index
    %139 = vector.load %arg4[%c512, %c0_87] : memref<776x128xf32, #tpu.memory_space<vmem>>, vector<128x128xf32>
    %cst_88 = arith.constant dense<0.000000e+00> : vector<2x128xf32>
    %140 = tpu.matmul %138, %139, %cst_88 {dimension_numbers = #tpu.dot_dimension_numbers<[1], [0], [0], [1], [0, 0, 1, 1], [], []>} : vector<2x128xf32>, vector<128x128xf32>, vector<2x128xf32> -> vector<2x128xf32>
    %c771 = arith.constant 771 : index
    %c0_89 = arith.constant 0 : index
    %141 = vector.load %arg4[%c771, %c0_89] : memref<776x128xf32, #tpu.memory_space<vmem>>, vector<1x128xf32>
    %142 = vector.broadcast %141 : vector<1x128xf32> to vector<2x128xf32>
    %143 = arith.addf %140, %142 : vector<2x128xf32>
    %cst_90 = arith.constant 0.000000e+00 : f32
    %144 = vector.broadcast %cst_90 : f32 to vector<2x128xf32>
    %145 = arith.maximumf %143, %144 : vector<2x128xf32>
    %c640 = arith.constant 640 : index
    %c0_91 = arith.constant 0 : index
    %146 = vector.load %arg4[%c640, %c0_91] : memref<776x128xf32, #tpu.memory_space<vmem>>, vector<128x128xf32>
    %cst_92 = arith.constant dense<0.000000e+00> : vector<2x128xf32>
    %147 = tpu.matmul %145, %146, %cst_92 {dimension_numbers = #tpu.dot_dimension_numbers<[1], [0], [0], [1], [0, 0, 1, 1], [], []>} : vector<2x128xf32>, vector<128x128xf32>, vector<2x128xf32> -> vector<2x128xf32>
    %c772 = arith.constant 772 : index
    %c0_93 = arith.constant 0 : index
    %148 = vector.load %arg4[%c772, %c0_93] : memref<776x128xf32, #tpu.memory_space<vmem>>, vector<1x128xf32>
    %149 = vector.broadcast %148 : vector<1x128xf32> to vector<2x128xf32>
    %150 = arith.addf %147, %149 : vector<2x128xf32>
    %c0_94 = arith.constant 0 : index
    %c0_95 = arith.constant 0 : index
    %151 = vector.load %arg5[%c0_94, %c0_95] : memref<2x128xf32, #tpu.memory_space<vmem>>, vector<2x128xf32>
    tpu.vector_store %arg5[%c0_94, %c0_95], %150 {strides = array<i32>} : memref<2x128xf32, #tpu.memory_space<vmem>>, vector<2x128xf32>,
    return
  }
}

</mosaic_0001>

<llo_original>
// kernel: custom_prediction_forward.1
$region0: #{custom_prediction_forward.1}
  #allocation0 [shape = 'u32[]', space=smem, size = 0x4, offset = 0x4, fixed_abs, tag = 'smem constant byte address 0x4 - core index']
  #allocation1 [shape = 'u32[144,128]{1,0:T(1,128)}', space=vmem, size = 0x12000, scoped, tag = 'internal scratch']
  #allocation2 [shape = 'f32[200,892]{1,0:T(8,128)}', space=vmem, size = 0xaf000, scoped, tag = 'scratch operand']
  #allocation3 [shape = 'f32[400,595]{1,0:T(8,128)}', space=vmem, size = 0xfa000, scoped, tag = 'scratch operand']
  %s0 = inlined_call_operand.vmem [shape: f32[8,1024], index: 0, kind: input, shape index: {}]
  %s1 = inlined_call_operand.hbm [shape: f32[16,200], index: 1, kind: input, shape index: {}]
  %s2 = inlined_call_operand.hbm [shape: f32[32,400], index: 2, kind: input, shape index: {}]
  %s3 = inlined_call_operand.hbm [shape: f32[568,512], index: 3, kind: input, shape index: {}]
  %s4 = inlined_call_operand.hbm [shape: f32[776,128], index: 4, kind: input, shape index: {}]
  %s5 = inlined_call_operand.hbm [shape: f32[2,128], index: 5, kind: output, shape index: {}]
  %s6 = sld [smem:[#allocation0]]
  $region46: #{custom_prediction_forward.1} parent=0
    _
  %s8 = ssub.s32 1, %s6
  %s9 = scalar_select 0, %s8, %s6
  $region1: #{custom_prediction_forward.1} parent=0
    #allocation4 [shape = 'u8[16384]{0}', space=vmem, size = 0x4000, scoped, tag = 'input window, operand 1, single buffered']
    #allocation5 [shape = 's32[1]{0}', space=sflag, size = 0x4, scoped, tag = 'scoped memory for custom_prediction_forward.1']
    #allocation6 [shape = 's32[1]{0}', space=sflag, size = 0x4, scoped, tag = 'scoped memory for custom_prediction_forward.1']
    #allocation7 [shape = 'u8[65536]{0}', space=vmem, size = 0x10000, scoped, tag = 'input window, operand 2, single buffered']
    #allocation8 [shape = 's32[1]{0}', space=sflag, size = 0x4, scoped, tag = 'scoped memory for custom_prediction_forward.1']
    #allocation9 [shape = 'u8[1163264]{0}', space=vmem, size = 0x11c000, scoped, tag = 'input window, operand 3, single buffered']
    #allocation10 [shape = 'u8[397312]{0}', space=vmem, size = 0x61000, scoped, tag = 'input window, operand 4, single buffered']
    #allocation11 [shape = 's32[1]{0}', space=sflag, size = 0x4, scoped, tag = 'scoped memory for custom_prediction_forward.1']
    #allocation12 [shape = 'u8[1024]{0}', space=vmem, size = 0x400, scoped, tag = 'output window, operand 0, single buffered']
    %10 = vsyncpa [#allocation5], 0
    %11 = vsyncpa [#allocation8], 0
    %12 = vsyncpa [#allocation11], 0
    %13 = vsyncpa [#allocation6], 0
    // Predicated region
    $region2: #{custom_prediction_forward.1} parent=1 // pred_check
      _
    $region3: #{custom_prediction_forward.1} parent=1 // pred_check_branch
      %15 = sbr.rel (0) target = $region5
    $region4: #{custom_prediction_forward.1} parent=1 // pred_region
      _
    $region5: #{custom_prediction_forward.1} parent=1 // pred_fallthru
      _
    // Predicated region
    $region6: #{custom_prediction_forward.1} parent=1 // pred_check
      _
    $region7: #{custom_prediction_forward.1} parent=1 // pred_check_branch
      %17 = sbr.rel (0) target = $region9
    $region8: #{custom_prediction_forward.1} parent=1 // pred_region
      %s19 = ssub.s32 512, 512
      %20 = vsyncadd [#allocation5], %s19
      %s21 = sshll.u32 [#allocation4], 4
      %s22 = int_to_ptr.vmem [resolvable:$true] %s21
      %27 = dma.hbm_to_vmem [thread:$0]  %s1, 512, %s22, [#allocation5], 256, 256, 16
    $region9: #{custom_prediction_forward.1} parent=1 // pred_fallthru
      _
    // Predicated region
    $region10: #{custom_prediction_forward.1} parent=1 // pred_check
      _
    $region11: #{custom_prediction_forward.1} parent=1 // pred_check_branch
      %29 = sbr.rel (0) target = $region13
    $region12: #{custom_prediction_forward.1} parent=1 // pred_region
      %s31 = ssub.s32 2048, 2048
      %32 = vsyncadd [#allocation8], %s31
      %s33 = sshll.u32 [#allocation7], 4
      %s34 = int_to_ptr.vmem [resolvable:$true] %s33
      %39 = dma.hbm_to_vmem [thread:$0]  %s2, 2048, %s34, [#allocation8], 512, 512, 32
    $region13: #{custom_prediction_forward.1} parent=1 // pred_fallthru
      _
    // Predicated region
    $region14: #{custom_prediction_forward.1} parent=1 // pred_check
      _
    $region15: #{custom_prediction_forward.1} parent=1 // pred_check_branch
      %41 = sbr.rel (0) target = $region17
    $region16: #{custom_prediction_forward.1} parent=1 // pred_region
      %s43 = ssub.s32 36352, 36352
      %44 = vsyncadd [#allocation8], %s43
      %s45 = sshll.u32 [#allocation9], 4
      %s46 = int_to_ptr.vmem [resolvable:$true] %s45
      %51 = dma.hbm_to_vmem [thread:$0]  %s3, 36352, %s46, [#allocation8], 512, 512, 32
    $region17: #{custom_prediction_forward.1} parent=1 // pred_fallthru
      _
    // Predicated region
    $region18: #{custom_prediction_forward.1} parent=1 // pred_check
      _
    $region19: #{custom_prediction_forward.1} parent=1 // pred_check_branch
      %53 = sbr.rel (0) target = $region21
    $region20: #{custom_prediction_forward.1} parent=1 // pred_region
      %s55 = ssub.s32 12416, 12416
      %56 = vsyncadd [#allocation11], %s55
      %s57 = sshll.u32 [#allocation10], 4
      %s58 = int_to_ptr.vmem [resolvable:$true] %s57
      %63 = dma.hbm_to_vmem [thread:$0]  %s4, 12416, %s58, [#allocation11], 128, 128, 8
    $region21: #{custom_prediction_forward.1} parent=1 // pred_fallthru
      _
    // Predicated region
    $region22: #{custom_prediction_forward.1} parent=1 // pred_check
      _
    $region23: #{custom_prediction_forward.1} parent=1 // pred_check_branch
      %65 = sbr.rel (0) target = $region25
    $region24: #{custom_prediction_forward.1} parent=1 // pred_region
      %66 = dma.done [#allocation5], 512
    $region25: #{custom_prediction_forward.1} parent=1 // pred_fallthru
      _
    // Predicated region
    $region26: #{custom_prediction_forward.1} parent=1 // pred_check
      _
    $region27: #{custom_prediction_forward.1} parent=1 // pred_check_branch
      %68 = sbr.rel (0) target = $region29
    $region28: #{custom_prediction_forward.1} parent=1 // pred_region
      %69 = dma.done [#allocation8], 2048
    $region29: #{custom_prediction_forward.1} parent=1 // pred_fallthru
      _
    // Predicated region
    $region30: #{custom_prediction_forward.1} parent=1 // pred_check
      _
    $region31: #{custom_prediction_forward.1} parent=1 // pred_check_branch
      %71 = sbr.rel (0) target = $region33
    $region32: #{custom_prediction_forward.1} parent=1 // pred_region
      %72 = dma.done [#allocation8], 36352
    $region33: #{custom_prediction_forward.1} parent=1 // pred_fallthru
      _
    // Predicated region
    $region34: #{custom_prediction_forward.1} parent=1 // pred_check
      _
    $region35: #{custom_prediction_forward.1} parent=1 // pred_check_branch
      %74 = sbr.rel (0) target = $region37
    $region36: #{custom_prediction_forward.1} parent=1 // pred_region
      %75 = dma.done [#allocation11], 12416
    $region37: #{custom_prediction_forward.1} parent=1 // pred_fallthru
      _
    %v76 = vld [vmem:[%s0] sm:$0xff]
    %v77 = vld [vmem:[%s0 + $0x8] sm:$0xff]
    %v78 = vld [vmem:[%s0 + $0x10] sm:$0xff]
    %v79 = vld [vmem:[%s0 + $0x18] sm:$0xff]
    %v80 = vld [vmem:[%s0 + $0x20] sm:$0xff]
    %v81 = vld [vmem:[%s0 + $0x28] sm:$0xff]
    %v82 = vld [vmem:[%s0 + $0x30] sm:$0xff]
    %v83 = vld [vmem:[%s0 + $0x38] sm:$0xff]
    %84 = vst [vmem:[#allocation2] sm:$0xff] %v76
    %85 = vst [vmem:[#allocation2 + $0x8] sm:$0xff] %v77
    %86 = vst [vmem:[#allocation2 + $0x10] sm:$0xff] %v78
    %87 = vst [vmem:[#allocation2 + $0x18] sm:$0xff] %v79
    %88 = vst [vmem:[#allocation2 + $0x20] sm:$0xff] %v80
    %89 = vst [vmem:[#allocation2 + $0x28] sm:$0xff] %v81
    %vm90 = vcmask 1014784
    %91 = vst.msk [vmem:[#allocation2 + $0x30] sm:$0xff] %vm90, %v82
    %99 = vrot.lane.b32.xlu0 %v76, 127
    %v100 = vpop.permute.xlu0 %99
    %101 = vrot.lane.b32.xlu0 %v77, 127
    %v102 = vpop.permute.xlu0 %101
    %103 = vrot.lane.b32.xlu0 %v78, 127
    %v104 = vpop.permute.xlu0 %103
    %105 = vrot.lane.b32.xlu0 %v79, 127
    %v106 = vpop.permute.xlu0 %105
    %107 = vrot.lane.b32.xlu0 %v80, 127
    %v108 = vpop.permute.xlu0 %107
    %109 = vrot.lane.b32.xlu0 %v81, 127
    %v110 = vpop.permute.xlu0 %109
    %111 = vrot.lane.b32.xlu0 %v82, 127
    %v112 = vpop.permute.xlu0 %111
    %vm113 = vcmask 1039360
    %v114 = vsel %vm113, %v100, %v102
    %v115 = vsel %vm113, %v102, %v104
    %v116 = vsel %vm113, %v104, %v106
    %v117 = vsel %vm113, %v106, %v108
    %v118 = vsel %vm113, %v108, %v110
    %v119 = vsel %vm113, %v110, %v112
    %127 = vst [vmem:[#allocation2 + $0x38] sm:$0xff] %v114
    %128 = vst [vmem:[#allocation2 + $0x40] sm:$0xff] %v115
    %129 = vst [vmem:[#allocation2 + $0x48] sm:$0xff] %v116
    %130 = vst [vmem:[#allocation2 + $0x50] sm:$0xff] %v117
    %131 = vst [vmem:[#allocation2 + $0x58] sm:$0xff] %v118
    %132 = vst [vmem:[#allocation2 + $0x60] sm:$0xff] %v119
    %133 = vst.msk [vmem:[#allocation2 + $0x68] sm:$0xff] %vm90, %v112
    %134 = vrot.lane.b32.xlu0 %v76, 126
    %v135 = vpop.permute.xlu0 %134
    %136 = vrot.lane.b32.xlu0 %v77, 126
    %v137 = vpop.permute.xlu0 %136
    %138 = vrot.lane.b32.xlu0 %v78, 126
    %v139 = vpop.permute.xlu0 %138
    %140 = vrot.lane.b32.xlu0 %v79, 126
    %v141 = vpop.permute.xlu0 %140
    %142 = vrot.lane.b32.xlu0 %v80, 126
    %v143 = vpop.permute.xlu0 %142
    %144 = vrot.lane.b32.xlu0 %v81, 126
    %v145 = vpop.permute.xlu0 %144
    %146 = vrot.lane.b32.xlu0 %v82, 126
    %v147 = vpop.permute.xlu0 %146
    %vm148 = vcmask 1031168
    %v149 = vsel %vm148, %v135, %v137
    %v150 = vsel %vm148, %v137, %v139
    %v151 = vsel %vm148, %v139, %v141
    %v152 = vsel %vm148, %v141, %v143
    %v153 = vsel %vm148, %v143, %v145
    %v154 = vsel %vm148, %v145, %v147
    %162 = vst [vmem:[#allocation2 + $0x70] sm:$0xff] %v149
    %163 = vst [vmem:[#allocation2 + $0x78] sm:$0xff] %v150
    %164 = vst [vmem:[#allocation2 + $0x80] sm:$0xff] %v151
    %165 = vst [vmem:[#allocation2 + $0x88] sm:$0xff] %v152
    %166 = vst [vmem:[#allocation2 + $0x90] sm:$0xff] %v153
    %167 = vst [vmem:[#allocation2 + $0x98] sm:$0xff] %v154
    %168 = vst.msk [vmem:[#allocation2 + $0xa0] sm:$0xff] %vm90, %v147
    %169 = vrot.lane.b32.xlu0 %v76, 125
    %v170 = vpop.permute.xlu0 %169
    %171 = vrot.lane.b32.xlu0 %v77, 125
    %v172 = vpop.permute.xlu0 %171
    %173 = vrot.lane.b32.xlu0 %v78, 125
    %v174 = vpop.permute.xlu0 %173
    %175 = vrot.lane.b32.xlu0 %v79, 125
    %v176 = vpop.permute.xlu0 %175
    %177 = vrot.lane.b32.xlu0 %v80, 125
    %v178 = vpop.permute.xlu0 %177
    %179 = vrot.lane.b32.xlu0 %v81, 125
    %v180 = vpop.permute.xlu0 %179
    %181 = vrot.lane.b32.xlu0 %v82, 125
    %v182 = vpop.permute.xlu0 %181
    %vm183 = vcmask 1022976
    %v184 = vsel %vm183, %v170, %v172
    %v185 = vsel %vm183, %v172, %v174
    %v186 = vsel %vm183, %v174, %v176
    %v187 = vsel %vm183, %v176, %v178
    %v188 = vsel %vm183, %v178, %v180
    %v189 = vsel %vm183, %v180, %v182
    %197 = vst [vmem:[#allocation2 + $0xa8] sm:$0xff] %v184
    %198 = vst [vmem:[#allocation2 + $0xb0] sm:$0xff] %v185
    %199 = vst [vmem:[#allocation2 + $0xb8] sm:$0xff] %v186
    %200 = vst [vmem:[#allocation2 + $0xc0] sm:$0xff] %v187
    %201 = vst [vmem:[#allocation2 + $0xc8] sm:$0xff] %v188
    %202 = vst [vmem:[#allocation2 + $0xd0] sm:$0xff] %v189
    %203 = vst.msk [vmem:[#allocation2 + $0xd8] sm:$0xff] %vm90, %v182
    %204 = vrot.lane.b32.xlu0 %v76, 124
    %v205 = vpop.permute.xlu0 %204
    %206 = vrot.lane.b32.xlu0 %v77, 124
    %v207 = vpop.permute.xlu0 %206
    %208 = vrot.lane.b32.xlu0 %v78, 124
    %v209 = vpop.permute.xlu0 %208
    %210 = vrot.lane.b32.xlu0 %v79, 124
    %v211 = vpop.permute.xlu0 %210
    %212 = vrot.lane.b32.xlu0 %v80, 124
    %v213 = vpop.permute.xlu0 %212
    %214 = vrot.lane.b32.xlu0 %v81, 124
    %v215 = vpop.permute.xlu0 %214
    %216 = vrot.lane.b32.xlu0 %v82, 124
    %v217 = vpop.permute.xlu0 %216
    %v218 = vsel %vm90, %v205, %v207
    %v219 = vsel %vm90, %v207, %v209
    %v220 = vsel %vm90, %v209, %v211
    %v221 = vsel %vm90, %v211, %v213
    %v222 = vsel %vm90, %v213, %v215
    %v223 = vsel %vm90, %v215, %v217
    %231 = vst [vmem:[#allocation2 + $0xe0] sm:$0xff] %v218
    %232 = vst [vmem:[#allocation2 + $0xe8] sm:$0xff] %v219
    %233 = vst [vmem:[#allocation2 + $0xf0] sm:$0xff] %v220
    %234 = vst [vmem:[#allocation2 + $0xf8] sm:$0xff] %v221
    %235 = vst [vmem:[#allocation2 + $0x100] sm:$0xff] %v222
    %236 = vst [vmem:[#allocation2 + $0x108] sm:$0xff] %v223
    %237 = vst.msk [vmem:[#allocation2 + $0x110] sm:$0xff] %vm90, %v217
    %239 = vrot.lane.b32.xlu0 %v76, 96
    %v240 = vpop.permute.xlu0 %239
    %241 = vrot.lane.b32.xlu0 %v77, 96
    %v242 = vpop.permute.xlu0 %241
    %243 = vrot.lane.b32.xlu0 %v78, 96
    %v244 = vpop.permute.xlu0 %243
    %245 = vrot.lane.b32.xlu0 %v79, 96
    %v246 = vpop.permute.xlu0 %245
    %247 = vrot.lane.b32.xlu0 %v80, 96
    %v248 = vpop.permute.xlu0 %247
    %249 = vrot.lane.b32.xlu0 %v81, 96
    %v250 = vpop.permute.xlu0 %249
    %251 = vrot.lane.b32.xlu0 %v82, 96
    %v252 = vpop.permute.xlu0 %251
    %253 = vrot.lane.b32.xlu0 %v83, 96
    %v254 = vpop.permute.xlu0 %253
    %vm255 = vcmask 785408
    %v256 = vsel %vm255, %v240, %v242
    %v257 = vsel %vm255, %v242, %v244
    %v258 = vsel %vm255, %v244, %v246
    %v259 = vsel %vm255, %v246, %v248
    %v260 = vsel %vm255, %v248, %v250
    %v261 = vsel %vm255, %v250, %v252
    %v262 = vsel %vm255, %v252, %v254
    %270 = vst [vmem:[#allocation2 + $0x118] sm:$0xff] %v256
    %271 = vst [vmem:[#allocation2 + $0x120] sm:$0xff] %v257
    %272 = vst [vmem:[#allocation2 + $0x128] sm:$0xff] %v258
    %273 = vst [vmem:[#allocation2 + $0x130] sm:$0xff] %v259
    %274 = vst [vmem:[#allocation2 + $0x138] sm:$0xff] %v260
    %275 = vst [vmem:[#allocation2 + $0x140] sm:$0xff] %v261
    %276 = vst.msk [vmem:[#allocation2 + $0x148] sm:$0xff] %vm90, %v262
    %277 = vrot.lane.b32.xlu0 %v76, 95
    %v278 = vpop.permute.xlu0 %277
    %279 = vrot.lane.b32.xlu0 %v77, 95
    %v280 = vpop.permute.xlu0 %279
    %281 = vrot.lane.b32.xlu0 %v78, 95
    %v282 = vpop.permute.xlu0 %281
    %283 = vrot.lane.b32.xlu0 %v79, 95
    %v284 = vpop.permute.xlu0 %283
    %285 = vrot.lane.b32.xlu0 %v80, 95
    %v286 = vpop.permute.xlu0 %285
    %287 = vrot.lane.b32.xlu0 %v81, 95
    %v288 = vpop.permute.xlu0 %287
    %289 = vrot.lane.b32.xlu0 %v82, 95
    %v290 = vpop.permute.xlu0 %289
    %291 = vrot.lane.b32.xlu0 %v83, 95
    %v292 = vpop.permute.xlu0 %291
    %vm293 = vcmask 777216
    %v294 = vsel %vm293, %v278, %v280
    %v295 = vsel %vm293, %v280, %v282
    %v296 = vsel %vm293, %v282, %v284
    %v297 = vsel %vm293, %v284, %v286
    %v298 = vsel %vm293, %v286, %v288
    %v299 = vsel %vm293, %v288, %v290
    %v300 = vsel %vm293, %v290, %v292
    %308 = vst [vmem:[#allocation2 + $0x150] sm:$0xff] %v294
    %309 = vst [vmem:[#allocation2 + $0x158] sm:$0xff] %v295
    %310 = vst [vmem:[#allocation2 + $0x160] sm:$0xff] %v296
    %311 = vst [vmem:[#allocation2 + $0x168] sm:$0xff] %v297
    %312 = vst [vmem:[#allocation2 + $0x170] sm:$0xff] %v298
    %313 = vst [vmem:[#allocation2 + $0x178] sm:$0xff] %v299
    %314 = vst.msk [vmem:[#allocation2 + $0x180] sm:$0xff] %vm90, %v300
    %315 = vrot.lane.b32.xlu0 %v76, 94
    %v316 = vpop.permute.xlu0 %315
    %317 = vrot.lane.b32.xlu0 %v77, 94
    %v318 = vpop.permute.xlu0 %317
    %319 = vrot.lane.b32.xlu0 %v78, 94
    %v320 = vpop.permute.xlu0 %319
    %321 = vrot.lane.b32.xlu0 %v79, 94
    %v322 = vpop.permute.xlu0 %321
    %323 = vrot.lane.b32.xlu0 %v80, 94
    %v324 = vpop.permute.xlu0 %323
    %325 = vrot.lane.b32.xlu0 %v81, 94
    %v326 = vpop.permute.xlu0 %325
    %327 = vrot.lane.b32.xlu0 %v82, 94
    %v328 = vpop.permute.xlu0 %327
    %329 = vrot.lane.b32.xlu0 %v83, 94
    %v330 = vpop.permute.xlu0 %329
    %vm331 = vcmask 769024
    %v332 = vsel %vm331, %v316, %v318
    %v333 = vsel %vm331, %v318, %v320
    %v334 = vsel %vm331, %v320, %v322
    %v335 = vsel %vm331, %v322, %v324
    %v336 = vsel %vm331, %v324, %v326
    %v337 = vsel %vm331, %v326, %v328
    %v338 = vsel %vm331, %v328, %v330
    %346 = vst [vmem:[#allocation2 + $0x188] sm:$0xff] %v332
    %347 = vst [vmem:[#allocation2 + $0x190] sm:$0xff] %v333
    %348 = vst [vmem:[#allocation2 + $0x198] sm:$0xff] %v334
    %349 = vst [vmem:[#allocation2 + $0x1a0] sm:$0xff] %v335
    %350 = vst [vmem:[#allocation2 + $0x1a8] sm:$0xff] %v336
    %351 = vst [vmem:[#allocation2 + $0x1b0] sm:$0xff] %v337
    %352 = vst.msk [vmem:[#allocation2 + $0x1b8] sm:$0xff] %vm90, %v338
    %353 = vrot.lane.b32.xlu0 %v76, 93
    %v354 = vpop.permute.xlu0 %353
    %355 = vrot.lane.b32.xlu0 %v77, 93
    %v356 = vpop.permute.xlu0 %355
    %357 = vrot.lane.b32.xlu0 %v78, 93
    %v358 = vpop.permute.xlu0 %357
    %359 = vrot.lane.b32.xlu0 %v79, 93
    %v360 = vpop.permute.xlu0 %359
    %361 = vrot.lane.b32.xlu0 %v80, 93
    %v362 = vpop.permute.xlu0 %361
    %363 = vrot.lane.b32.xlu0 %v81, 93
    %v364 = vpop.permute.xlu0 %363
    %365 = vrot.lane.b32.xlu0 %v82, 93
    %v366 = vpop.permute.xlu0 %365
    %367 = vrot.lane.b32.xlu0 %v83, 93
    %v368 = vpop.permute.xlu0 %367
    %vm369 = vcmask 760832
    %v370 = vsel %vm369, %v354, %v356
    %v371 = vsel %vm369, %v356, %v358
    %v372 = vsel %vm369, %v358, %v360
    %v373 = vsel %vm369, %v360, %v362
    %v374 = vsel %vm369, %v362, %v364
    %v375 = vsel %vm369, %v364, %v366
    %v376 = vsel %vm369, %v366, %v368
    %384 = vst [vmem:[#allocation2 + $0x1c0] sm:$0xff] %v370
    %385 = vst [vmem:[#allocation2 + $0x1c8] sm:$0xff] %v371
    %386 = vst [vmem:[#allocation2 + $0x1d0] sm:$0xff] %v372
    %387 = vst [vmem:[#allocation2 + $0x1d8] sm:$0xff] %v373
    %388 = vst [vmem:[#allocation2 + $0x1e0] sm:$0xff] %v374
    %389 = vst [vmem:[#allocation2 + $0x1e8] sm:$0xff] %v375
    %390 = vst.msk [vmem:[#allocation2 + $0x1f0] sm:$0xff] %vm90, %v376
    %391 = vrot.lane.b32.xlu0 %v76, 92
    %v392 = vpop.permute.xlu0 %391
    %393 = vrot.lane.b32.xlu0 %v77, 92
    %v394 = vpop.permute.xlu0 %393
    %395 = vrot.lane.b32.xlu0 %v78, 92
    %v396 = vpop.permute.xlu0 %395
    %397 = vrot.lane.b32.xlu0 %v79, 92
    %v398 = vpop.permute.xlu0 %397
    %399 = vrot.lane.b32.xlu0 %v80, 92
    %v400 = vpop.permute.xlu0 %399
    %401 = vrot.lane.b32.xlu0 %v81, 92
    %v402 = vpop.permute.xlu0 %401
    %403 = vrot.lane.b32.xlu0 %v82, 92
    %v404 = vpop.permute.xlu0 %403
    %405 = vrot.lane.b32.xlu0 %v83, 92
    %v406 = vpop.permute.xlu0 %405
    %vm407 = vcmask 752640
    %v408 = vsel %vm407, %v392, %v394
    %v409 = vsel %vm407, %v394, %v396
    %v410 = vsel %vm407, %v396, %v398
    %v411 = vsel %vm407, %v398, %v400
    %v412 = vsel %vm407, %v400, %v402
    %v413 = vsel %vm407, %v402, %v404
    %v414 = vsel %vm407, %v404, %v406
    %422 = vst [vmem:[#allocation2 + $0x1f8] sm:$0xff] %v408
    %423 = vst [vmem:[#allocation2 + $0x200] sm:$0xff] %v409
    %424 = vst [vmem:[#allocation2 + $0x208] sm:$0xff] %v410
    %425 = vst [vmem:[#allocation2 + $0x210] sm:$0xff] %v411
    %426 = vst [vmem:[#allocation2 + $0x218] sm:$0xff] %v412
    %427 = vst [vmem:[#allocation2 + $0x220] sm:$0xff] %v413
    %428 = vst.msk [vmem:[#allocation2 + $0x228] sm:$0xff] %vm90, %v414
    %429 = vrot.lane.b32.xlu0 %v76, 64
    %v430 = vpop.permute.xlu0 %429
    %431 = vrot.lane.b32.xlu0 %v77, 64
    %v432 = vpop.permute.xlu0 %431
    %433 = vrot.lane.b32.xlu0 %v78, 64
    %v434 = vpop.permute.xlu0 %433
    %435 = vrot.lane.b32.xlu0 %v79, 64
    %v436 = vpop.permute.xlu0 %435
    %437 = vrot.lane.b32.xlu0 %v80, 64
    %v438 = vpop.permute.xlu0 %437
    %439 = vrot.lane.b32.xlu0 %v81, 64
    %v440 = vpop.permute.xlu0 %439
    %441 = vrot.lane.b32.xlu0 %v82, 64
    %v442 = vpop.permute.xlu0 %441
    %443 = vrot.lane.b32.xlu0 %v83, 64
    %v444 = vpop.permute.xlu0 %443
    %vm445 = vcmask 523264
    %v446 = vsel %vm445, %v430, %v432
    %v447 = vsel %vm445, %v432, %v434
    %v448 = vsel %vm445, %v434, %v436
    %v449 = vsel %vm445, %v436, %v438
    %v450 = vsel %vm445, %v438, %v440
    %v451 = vsel %vm445, %v440, %v442
    %v452 = vsel %vm445, %v442, %v444
    %460 = vst [vmem:[#allocation2 + $0x230] sm:$0xff] %v446
    %461 = vst [vmem:[#allocation2 + $0x238] sm:$0xff] %v447
    %462 = vst [vmem:[#allocation2 + $0x240] sm:$0xff] %v448
    %463 = vst [vmem:[#allocation2 + $0x248] sm:$0xff] %v449
    %464 = vst [vmem:[#allocation2 + $0x250] sm:$0xff] %v450
    %465 = vst [vmem:[#allocation2 + $0x258] sm:$0xff] %v451
    %466 = vst.msk [vmem:[#allocation2 + $0x260] sm:$0xff] %vm90, %v452
    %467 = vrot.lane.b32.xlu0 %v76, 63
    %v468 = vpop.permute.xlu0 %467
    %469 = vrot.lane.b32.xlu0 %v77, 63
    %v470 = vpop.permute.xlu0 %469
    %471 = vrot.lane.b32.xlu0 %v78, 63
    %v472 = vpop.permute.xlu0 %471
    %473 = vrot.lane.b32.xlu0 %v79, 63
    %v474 = vpop.permute.xlu0 %473
    %475 = vrot.lane.b32.xlu0 %v80, 63
    %v476 = vpop.permute.xlu0 %475
    %477 = vrot.lane.b32.xlu0 %v81, 63
    %v478 = vpop.permute.xlu0 %477
    %479 = vrot.lane.b32.xlu0 %v82, 63
    %v480 = vpop.permute.xlu0 %479
    %481 = vrot.lane.b32.xlu0 %v83, 63
    %v482 = vpop.permute.xlu0 %481
    %vm483 = vcmask 515072
    %v484 = vsel %vm483, %v468, %v470
    %v485 = vsel %vm483, %v470, %v472
    %v486 = vsel %vm483, %v472, %v474
    %v487 = vsel %vm483, %v474, %v476
    %v488 = vsel %vm483, %v476, %v478
    %v489 = vsel %vm483, %v478, %v480
    %v490 = vsel %vm483, %v480, %v482
    %498 = vst [vmem:[#allocation2 + $0x268] sm:$0xff] %v484
    %499 = vst [vmem:[#allocation2 + $0x270] sm:$0xff] %v485
    %500 = vst [vmem:[#allocation2 + $0x278] sm:$0xff] %v486
    %501 = vst [vmem:[#allocation2 + $0x280] sm:$0xff] %v487
    %502 = vst [vmem:[#allocation2 + $0x288] sm:$0xff] %v488
    %503 = vst [vmem:[#allocation2 + $0x290] sm:$0xff] %v489
    %504 = vst.msk [vmem:[#allocation2 + $0x298] sm:$0xff] %vm90, %v490
    %505 = vrot.lane.b32.xlu0 %v76, 62
    %v506 = vpop.permute.xlu0 %505
    %507 = vrot.lane.b32.xlu0 %v77, 62
    %v508 = vpop.permute.xlu0 %507
    %509 = vrot.lane.b32.xlu0 %v78, 62
    %v510 = vpop.permute.xlu0 %509
    %511 = vrot.lane.b32.xlu0 %v79, 62
    %v512 = vpop.permute.xlu0 %511
    %513 = vrot.lane.b32.xlu0 %v80, 62
    %v514 = vpop.permute.xlu0 %513
    %515 = vrot.lane.b32.xlu0 %v81, 62
    %v516 = vpop.permute.xlu0 %515
    %517 = vrot.lane.b32.xlu0 %v82, 62
    %v518 = vpop.permute.xlu0 %517
    %519 = vrot.lane.b32.xlu0 %v83, 62
    %v520 = vpop.permute.xlu0 %519
    %vm521 = vcmask 506880
    %v522 = vsel %vm521, %v506, %v508
    %v523 = vsel %vm521, %v508, %v510
    %v524 = vsel %vm521, %v510, %v512
    %v525 = vsel %vm521, %v512, %v514
    %v526 = vsel %vm521, %v514, %v516
    %v527 = vsel %vm521, %v516, %v518
    %v528 = vsel %vm521, %v518, %v520
    %536 = vst [vmem:[#allocation2 + $0x2a0] sm:$0xff] %v522
    %537 = vst [vmem:[#allocation2 + $0x2a8] sm:$0xff] %v523
    %538 = vst [vmem:[#allocation2 + $0x2b0] sm:$0xff] %v524
    %539 = vst [vmem:[#allocation2 + $0x2b8] sm:$0xff] %v525
    %540 = vst [vmem:[#allocation2 + $0x2c0] sm:$0xff] %v526
    %541 = vst [vmem:[#allocation2 + $0x2c8] sm:$0xff] %v527
    %542 = vst.msk [vmem:[#allocation2 + $0x2d0] sm:$0xff] %vm90, %v528
    %543 = vrot.lane.b32.xlu0 %v76, 61
    %v544 = vpop.permute.xlu0 %543
    %545 = vrot.lane.b32.xlu0 %v77, 61
    %v546 = vpop.permute.xlu0 %545
    %547 = vrot.lane.b32.xlu0 %v78, 61
    %v548 = vpop.permute.xlu0 %547
    %549 = vrot.lane.b32.xlu0 %v79, 61
    %v550 = vpop.permute.xlu0 %549
    %551 = vrot.lane.b32.xlu0 %v80, 61
    %v552 = vpop.permute.xlu0 %551
    %553 = vrot.lane.b32.xlu0 %v81, 61
    %v554 = vpop.permute.xlu0 %553
    %555 = vrot.lane.b32.xlu0 %v82, 61
    %v556 = vpop.permute.xlu0 %555
    %557 = vrot.lane.b32.xlu0 %v83, 61
    %v558 = vpop.permute.xlu0 %557
    %vm559 = vcmask 498688
    %v560 = vsel %vm559, %v544, %v546
    %v561 = vsel %vm559, %v546, %v548
    %v562 = vsel %vm559, %v548, %v550
    %v563 = vsel %vm559, %v550, %v552
    %v564 = vsel %vm559, %v552, %v554
    %v565 = vsel %vm559, %v554, %v556
    %v566 = vsel %vm559, %v556, %v558
    %574 = vst [vmem:[#allocation2 + $0x2d8] sm:$0xff] %v560
    %575 = vst [vmem:[#allocation2 + $0x2e0] sm:$0xff] %v561
    %576 = vst [vmem:[#allocation2 + $0x2e8] sm:$0xff] %v562
    %577 = vst [vmem:[#allocation2 + $0x2f0] sm:$0xff] %v563
    %578 = vst [vmem:[#allocation2 + $0x2f8] sm:$0xff] %v564
    %579 = vst [vmem:[#allocation2 + $0x300] sm:$0xff] %v565
    %580 = vst.msk [vmem:[#allocation2 + $0x308] sm:$0xff] %vm90, %v566
    %581 = vrot.lane.b32.xlu0 %v76, 60
    %v582 = vpop.permute.xlu0 %581
    %583 = vrot.lane.b32.xlu0 %v77, 60
    %v584 = vpop.permute.xlu0 %583
    %585 = vrot.lane.b32.xlu0 %v78, 60
    %v586 = vpop.permute.xlu0 %585
    %587 = vrot.lane.b32.xlu0 %v79, 60
    %v588 = vpop.permute.xlu0 %587
    %589 = vrot.lane.b32.xlu0 %v80, 60
    %v590 = vpop.permute.xlu0 %589
    %591 = vrot.lane.b32.xlu0 %v81, 60
    %v592 = vpop.permute.xlu0 %591
    %593 = vrot.lane.b32.xlu0 %v82, 60
    %v594 = vpop.permute.xlu0 %593
    %595 = vrot.lane.b32.xlu0 %v83, 60
    %v596 = vpop.permute.xlu0 %595
    %vm597 = vcmask 490496
    %v598 = vsel %vm597, %v582, %v584
    %v599 = vsel %vm597, %v584, %v586
    %v600 = vsel %vm597, %v586, %v588
    %v601 = vsel %vm597, %v588, %v590
    %v602 = vsel %vm597, %v590, %v592
    %v603 = vsel %vm597, %v592, %v594
    %v604 = vsel %vm597, %v594, %v596
    %612 = vst [vmem:[#allocation2 + $0x310] sm:$0xff] %v598
    %613 = vst [vmem:[#allocation2 + $0x318] sm:$0xff] %v599
    %614 = vst [vmem:[#allocation2 + $0x320] sm:$0xff] %v600
    %615 = vst [vmem:[#allocation2 + $0x328] sm:$0xff] %v601
    %616 = vst [vmem:[#allocation2 + $0x330] sm:$0xff] %v602
    %617 = vst [vmem:[#allocation2 + $0x338] sm:$0xff] %v603
    %618 = vst.msk [vmem:[#allocation2 + $0x340] sm:$0xff] %vm90, %v604
    %619 = vrot.lane.b32.xlu0 %v76, 32
    %v620 = vpop.permute.xlu0 %619
    %621 = vrot.lane.b32.xlu0 %v77, 32
    %v622 = vpop.permute.xlu0 %621
    %623 = vrot.lane.b32.xlu0 %v78, 32
    %v624 = vpop.permute.xlu0 %623
    %625 = vrot.lane.b32.xlu0 %v79, 32
    %v626 = vpop.permute.xlu0 %625
    %627 = vrot.lane.b32.xlu0 %v80, 32
    %v628 = vpop.permute.xlu0 %627
    %629 = vrot.lane.b32.xlu0 %v81, 32
    %v630 = vpop.permute.xlu0 %629
    %631 = vrot.lane.b32.xlu0 %v82, 32
    %v632 = vpop.permute.xlu0 %631
    %633 = vrot.lane.b32.xlu0 %v83, 32
    %v634 = vpop.permute.xlu0 %633
    %vm635 = vcmask 261120
    %v636 = vsel %vm635, %v620, %v622
    %v637 = vsel %vm635, %v622, %v624
    %v638 = vsel %vm635, %v624, %v626
    %v639 = vsel %vm635, %v626, %v628
    %v640 = vsel %vm635, %v628, %v630
    %v641 = vsel %vm635, %v630, %v632
    %v642 = vsel %vm635, %v632, %v634
    %650 = vst [vmem:[#allocation2 + $0x348] sm:$0xff] %v636
    %651 = vst [vmem:[#allocation2 + $0x350] sm:$0xff] %v637
    %652 = vst [vmem:[#allocation2 + $0x358] sm:$0xff] %v638
    %653 = vst [vmem:[#allocation2 + $0x360] sm:$0xff] %v639
    %654 = vst [vmem:[#allocation2 + $0x368] sm:$0xff] %v640
    %655 = vst [vmem:[#allocation2 + $0x370] sm:$0xff] %v641
    %656 = vst.msk [vmem:[#allocation2 + $0x378] sm:$0xff] %vm90, %v642
    %657 = vrot.lane.b32.xlu0 %v76, 31
    %v658 = vpop.permute.xlu0 %657
    %659 = vrot.lane.b32.xlu0 %v77, 31
    %v660 = vpop.permute.xlu0 %659
    %661 = vrot.lane.b32.xlu0 %v78, 31
    %v662 = vpop.permute.xlu0 %661
    %663 = vrot.lane.b32.xlu0 %v79, 31
    %v664 = vpop.permute.xlu0 %663
    %665 = vrot.lane.b32.xlu0 %v80, 31
    %v666 = vpop.permute.xlu0 %665
    %667 = vrot.lane.b32.xlu0 %v81, 31
    %v668 = vpop.permute.xlu0 %667
    %669 = vrot.lane.b32.xlu0 %v82, 31
    %v670 = vpop.permute.xlu0 %669
    %671 = vrot.lane.b32.xlu0 %v83, 31
    %v672 = vpop.permute.xlu0 %671
    %vm673 = vcmask 252928
    %v674 = vsel %vm673, %v658, %v660
    %v675 = vsel %vm673, %v660, %v662
    %v676 = vsel %vm673, %v662, %v664
    %v677 = vsel %vm673, %v664, %v666
    %v678 = vsel %vm673, %v666, %v668
    %v679 = vsel %vm673, %v668, %v670
    %v680 = vsel %vm673, %v670, %v672
    %688 = vst [vmem:[#allocation2 + $0x380] sm:$0xff] %v674
    %689 = vst [vmem:[#allocation2 + $0x388] sm:$0xff] %v675
    %690 = vst [vmem:[#allocation2 + $0x390] sm:$0xff] %v676
    %691 = vst [vmem:[#allocation2 + $0x398] sm:$0xff] %v677
    %692 = vst [vmem:[#allocation2 + $0x3a0] sm:$0xff] %v678
    %693 = vst [vmem:[#allocation2 + $0x3a8] sm:$0xff] %v679
    %694 = vst.msk [vmem:[#allocation2 + $0x3b0] sm:$0xff] %vm90, %v680
    %695 = vrot.lane.b32.xlu0 %v76, 30
    %v696 = vpop.permute.xlu0 %695
    %697 = vrot.lane.b32.xlu0 %v77, 30
    %v698 = vpop.permute.xlu0 %697
    %699 = vrot.lane.b32.xlu0 %v78, 30
    %v700 = vpop.permute.xlu0 %699
    %701 = vrot.lane.b32.xlu0 %v79, 30
    %v702 = vpop.permute.xlu0 %701
    %703 = vrot.lane.b32.xlu0 %v80, 30
    %v704 = vpop.permute.xlu0 %703
    %705 = vrot.lane.b32.xlu0 %v81, 30
    %v706 = vpop.permute.xlu0 %705
    %707 = vrot.lane.b32.xlu0 %v82, 30
    %v708 = vpop.permute.xlu0 %707
    %709 = vrot.lane.b32.xlu0 %v83, 30
    %v710 = vpop.permute.xlu0 %709
    %vm711 = vcmask 244736
    %v712 = vsel %vm711, %v696, %v698
    %v713 = vsel %vm711, %v698, %v700
    %v714 = vsel %vm711, %v700, %v702
    %v715 = vsel %vm711, %v702, %v704
    %v716 = vsel %vm711, %v704, %v706
    %v717 = vsel %vm711, %v706, %v708
    %v718 = vsel %vm711, %v708, %v710
    %726 = vst [vmem:[#allocation2 + $0x3b8] sm:$0xff] %v712
    %727 = vst [vmem:[#allocation2 + $0x3c0] sm:$0xff] %v713
    %728 = vst [vmem:[#allocation2 + $0x3c8] sm:$0xff] %v714
    %729 = vst [vmem:[#allocation2 + $0x3d0] sm:$0xff] %v715
    %730 = vst [vmem:[#allocation2 + $0x3d8] sm:$0xff] %v716
    %731 = vst [vmem:[#allocation2 + $0x3e0] sm:$0xff] %v717
    %732 = vst.msk [vmem:[#allocation2 + $0x3e8] sm:$0xff] %vm90, %v718
    %733 = vrot.lane.b32.xlu0 %v76, 29
    %v734 = vpop.permute.xlu0 %733
    %735 = vrot.lane.b32.xlu0 %v77, 29
    %v736 = vpop.permute.xlu0 %735
    %737 = vrot.lane.b32.xlu0 %v78, 29
    %v738 = vpop.permute.xlu0 %737
    %739 = vrot.lane.b32.xlu0 %v79, 29
    %v740 = vpop.permute.xlu0 %739
    %741 = vrot.lane.b32.xlu0 %v80, 29
    %v742 = vpop.permute.xlu0 %741
    %743 = vrot.lane.b32.xlu0 %v81, 29
    %v744 = vpop.permute.xlu0 %743
    %745 = vrot.lane.b32.xlu0 %v82, 29
    %v746 = vpop.permute.xlu0 %745
    %747 = vrot.lane.b32.xlu0 %v83, 29
    %v748 = vpop.permute.xlu0 %747
    %vm749 = vcmask 236544
    %v750 = vsel %vm749, %v734, %v736
    %v751 = vsel %vm749, %v736, %v738
    %v752 = vsel %vm749, %v738, %v740
    %v753 = vsel %vm749, %v740, %v742
    %v754 = vsel %vm749, %v742, %v744
    %v755 = vsel %vm749, %v744, %v746
    %v756 = vsel %vm749, %v746, %v748
    %764 = vst [vmem:[#allocation2 + $0x3f0] sm:$0xff] %v750
    %765 = vst [vmem:[#allocation2 + $0x3f8] sm:$0xff] %v751
    %766 = vst [vmem:[#allocation2 + $0x400] sm:$0xff] %v752
    %767 = vst [vmem:[#allocation2 + $0x408] sm:$0xff] %v753
    %768 = vst [vmem:[#allocation2 + $0x410] sm:$0xff] %v754
    %769 = vst [vmem:[#allocation2 + $0x418] sm:$0xff] %v755
    %770 = vst.msk [vmem:[#allocation2 + $0x420] sm:$0xff] %vm90, %v756
    %771 = vrot.lane.b32.xlu0 %v76, 28
    %v772 = vpop.permute.xlu0 %771
    %773 = vrot.lane.b32.xlu0 %v77, 28
    %v774 = vpop.permute.xlu0 %773
    %775 = vrot.lane.b32.xlu0 %v78, 28
    %v776 = vpop.permute.xlu0 %775
    %777 = vrot.lane.b32.xlu0 %v79, 28
    %v778 = vpop.permute.xlu0 %777
    %779 = vrot.lane.b32.xlu0 %v80, 28
    %v780 = vpop.permute.xlu0 %779
    %781 = vrot.lane.b32.xlu0 %v81, 28
    %v782 = vpop.permute.xlu0 %781
    %783 = vrot.lane.b32.xlu0 %v82, 28
    %v784 = vpop.permute.xlu0 %783
    %785 = vrot.lane.b32.xlu0 %v83, 28
    %v786 = vpop.permute.xlu0 %785
    %vm787 = vcmask 228352
    %v788 = vsel %vm787, %v772, %v774
    %v789 = vsel %vm787, %v774, %v776
    %v790 = vsel %vm787, %v776, %v778
    %v791 = vsel %vm787, %v778, %v780
    %v792 = vsel %vm787, %v780, %v782
    %v793 = vsel %vm787, %v782, %v784
    %v794 = vsel %vm787, %v784, %v786
    %802 = vst [vmem:[#allocation2 + $0x428] sm:$0xff] %v788
    %803 = vst [vmem:[#allocation2 + $0x430] sm:$0xff] %v789
    %804 = vst [vmem:[#allocation2 + $0x438] sm:$0xff] %v790
    %805 = vst [vmem:[#allocation2 + $0x440] sm:$0xff] %v791
    %806 = vst [vmem:[#allocation2 + $0x448] sm:$0xff] %v792
    %807 = vst [vmem:[#allocation2 + $0x450] sm:$0xff] %v793
    %808 = vst.msk [vmem:[#allocation2 + $0x458] sm:$0xff] %vm90, %v794
    %809 = vst [vmem:[#allocation2 + $0x460] sm:$0xff] %v77
    %810 = vst [vmem:[#allocation2 + $0x468] sm:$0xff] %v78
    %811 = vst [vmem:[#allocation2 + $0x470] sm:$0xff] %v79
    %812 = vst [vmem:[#allocation2 + $0x478] sm:$0xff] %v80
    %813 = vst [vmem:[#allocation2 + $0x480] sm:$0xff] %v81
    %814 = vst [vmem:[#allocation2 + $0x488] sm:$0xff] %v82
    %815 = vst.msk [vmem:[#allocation2 + $0x490] sm:$0xff] %vm90, %v83
    %816 = vrot.lane.b32.xlu0 %v83, 127
    %v817 = vpop.permute.xlu0 %816
    %v818 = vsel %vm113, %v112, %v817
    %821 = vst [vmem:[#allocation2 + $0x498] sm:$0xff] %v115
    %822 = vst [vmem:[#allocation2 + $0x4a0] sm:$0xff] %v116
    %823 = vst [vmem:[#allocation2 + $0x4a8] sm:$0xff] %v117
    %824 = vst [vmem:[#allocation2 + $0x4b0] sm:$0xff] %v118
    %825 = vst [vmem:[#allocation2 + $0x4b8] sm:$0xff] %v119
    %826 = vst [vmem:[#allocation2 + $0x4c0] sm:$0xff] %v818
    %827 = vst.msk [vmem:[#allocation2 + $0x4c8] sm:$0xff] %vm90, %v817
    %828 = vrot.lane.b32.xlu0 %v83, 126
    %v829 = vpop.permute.xlu0 %828
    %v830 = vsel %vm148, %v147, %v829
    %833 = vst [vmem:[#allocation2 + $0x4d0] sm:$0xff] %v150
    %834 = vst [vmem:[#allocation2 + $0x4d8] sm:$0xff] %v151
    %835 = vst [vmem:[#allocation2 + $0x4e0] sm:$0xff] %v152
    %836 = vst [vmem:[#allocation2 + $0x4e8] sm:$0xff] %v153
    %837 = vst [vmem:[#allocation2 + $0x4f0] sm:$0xff] %v154
    %838 = vst [vmem:[#allocation2 + $0x4f8] sm:$0xff] %v830
    %839 = vst.msk [vmem:[#allocation2 + $0x500] sm:$0xff] %vm90, %v829
    %840 = vrot.lane.b32.xlu0 %v83, 125
    %v841 = vpop.permute.xlu0 %840
    %v842 = vsel %vm183, %v182, %v841
    %845 = vst [vmem:[#allocation2 + $0x508] sm:$0xff] %v185
    %846 = vst [vmem:[#allocation2 + $0x510] sm:$0xff] %v186
    %847 = vst [vmem:[#allocation2 + $0x518] sm:$0xff] %v187
    %848 = vst [vmem:[#allocation2 + $0x520] sm:$0xff] %v188
    %849 = vst [vmem:[#allocation2 + $0x528] sm:$0xff] %v189
    %850 = vst [vmem:[#allocation2 + $0x530] sm:$0xff] %v842
    %851 = vst.msk [vmem:[#allocation2 + $0x538] sm:$0xff] %vm90, %v841
    %852 = vrot.lane.b32.xlu0 %v83, 124
    %v853 = vpop.permute.xlu0 %852
    %v854 = vsel %vm90, %v217, %v853
    %857 = vst [vmem:[#allocation2 + $0x540] sm:$0xff] %v219
    %858 = vst [vmem:[#allocation2 + $0x548] sm:$0xff] %v220
    %859 = vst [vmem:[#allocation2 + $0x550] sm:$0xff] %v221
    %860 = vst [vmem:[#allocation2 + $0x558] sm:$0xff] %v222
    %861 = vst [vmem:[#allocation2 + $0x560] sm:$0xff] %v223
    %862 = vst [vmem:[#allocation2 + $0x568] sm:$0xff] %v854
    %863 = vst.msk [vmem:[#allocation2 + $0x570] sm:$0xff] %vm90, %v853
    %v864 = vld [vmem:[#allocation4] sm:$0xff]
    %v865 = vld [vmem:[#allocation4 + $0x8] sm:$0xff]
    %v866 = vld [vmem:[#allocation4 + $0x10] sm:$0xff]
    %v867 = vld [vmem:[#allocation4 + $0x18] sm:$0xff]
    %v868 = vld [vmem:[#allocation2] sm:$0xff]
    %v869 = vld [vmem:[#allocation2 + $0x8] sm:$0xff]
    %v870 = vld [vmem:[#allocation2 + $0x10] sm:$0xff]
    %v871 = vld [vmem:[#allocation2 + $0x18] sm:$0xff]
    %v872 = vld [vmem:[#allocation2 + $0x20] sm:$0xff]
    %v873 = vld [vmem:[#allocation2 + $0x28] sm:$0xff]
    %v874 = vld [vmem:[#allocation2 + $0x30] sm:$0xff]
    %v875 = vld [vmem:[#allocation2 + $0x38] sm:$0xff]
    %v876 = vld [vmem:[#allocation2 + $0x40] sm:$0xff]
    %v877 = vld [vmem:[#allocation2 + $0x48] sm:$0xff]
    %v878 = vld [vmem:[#allocation2 + $0x50] sm:$0xff]
    %v879 = vld [vmem:[#allocation2 + $0x58] sm:$0xff]
    %v880 = vld [vmem:[#allocation2 + $0x60] sm:$0xff]
    %v881 = vld [vmem:[#allocation2 + $0x68] sm:$0xff]
    %v882 = vld [vmem:[#allocation2 + $0x70] sm:$0xff]
    %v883 = vld [vmem:[#allocation2 + $0x78] sm:$0xff]
    %v884 = vld [vmem:[#allocation2 + $0x80] sm:$0xff]
    %v885 = vld [vmem:[#allocation2 + $0x88] sm:$0xff]
    %v886 = vld [vmem:[#allocation2 + $0x90] sm:$0xff]
    %v887 = vld [vmem:[#allocation2 + $0x98] sm:$0xff]
    %v888 = vld [vmem:[#allocation2 + $0xa0] sm:$0xff]
    %v889 = vld [vmem:[#allocation2 + $0xa8] sm:$0xff]
    %v890 = vld [vmem:[#allocation2 + $0xb0] sm:$0xff]
    %v891 = vld [vmem:[#allocation2 + $0xb8] sm:$0xff]
    %v892 = vld [vmem:[#allocation2 + $0xc0] sm:$0xff]
    %v893 = vld [vmem:[#allocation2 + $0xc8] sm:$0xff]
    %v894 = vld [vmem:[#allocation2 + $0xd0] sm:$0xff]
    %v895 = vld [vmem:[#allocation2 + $0xd8] sm:$0xff]
    %v896 = vld [vmem:[#allocation2 + $0xe0] sm:$0xff]
    %v897 = vld [vmem:[#allocation2 + $0xe8] sm:$0xff]
    %v898 = vld [vmem:[#allocation2 + $0xf0] sm:$0xff]
    %v899 = vld [vmem:[#allocation2 + $0xf8] sm:$0xff]
    %v900 = vld [vmem:[#allocation2 + $0x100] sm:$0xff]
    %v901 = vld [vmem:[#allocation2 + $0x108] sm:$0xff]
    %v902 = vld [vmem:[#allocation2 + $0x110] sm:$0xff]
    %v903 = vld [vmem:[#allocation2 + $0x118] sm:$0xff]
    %v904 = vld [vmem:[#allocation2 + $0x120] sm:$0xff]
    %v905 = vld [vmem:[#allocation2 + $0x128] sm:$0xff]
    %v906 = vld [vmem:[#allocation2 + $0x130] sm:$0xff]
    %v907 = vld [vmem:[#allocation2 + $0x138] sm:$0xff]
    %v908 = vld [vmem:[#allocation2 + $0x140] sm:$0xff]
    %v909 = vld [vmem:[#allocation2 + $0x148] sm:$0xff]
    %v910 = vld [vmem:[#allocation2 + $0x150] sm:$0xff]
    %v911 = vld [vmem:[#allocation2 + $0x158] sm:$0xff]
    %v912 = vld [vmem:[#allocation2 + $0x160] sm:$0xff]
    %v913 = vld [vmem:[#allocation2 + $0x168] sm:$0xff]
    %v914 = vld [vmem:[#allocation2 + $0x170] sm:$0xff]
    %v915 = vld [vmem:[#allocation2 + $0x178] sm:$0xff]
    %v916 = vld [vmem:[#allocation2 + $0x180] sm:$0xff]
    %v917 = vld [vmem:[#allocation2 + $0x188] sm:$0xff]
    %v918 = vld [vmem:[#allocation2 + $0x190] sm:$0xff]
    %v919 = vld [vmem:[#allocation2 + $0x198] sm:$0xff]
    %v920 = vld [vmem:[#allocation2 + $0x1a0] sm:$0xff]
    %v921 = vld [vmem:[#allocation2 + $0x1a8] sm:$0xff]
    %v922 = vld [vmem:[#allocation2 + $0x1b0] sm:$0xff]
    %v923 = vld [vmem:[#allocation2 + $0x1b8] sm:$0xff]
    %v924 = vld [vmem:[#allocation2 + $0x1c0] sm:$0xff]
    %v925 = vld [vmem:[#allocation2 + $0x1c8] sm:$0xff]
    %v926 = vld [vmem:[#allocation2 + $0x1d0] sm:$0xff]
    %v927 = vld [vmem:[#allocation2 + $0x1d8] sm:$0xff]
    %v928 = vld [vmem:[#allocation2 + $0x1e0] sm:$0xff]
    %v929 = vld [vmem:[#allocation2 + $0x1e8] sm:$0xff]
    %v930 = vld [vmem:[#allocation2 + $0x1f0] sm:$0xff]
    %v931 = vld [vmem:[#allocation2 + $0x1f8] sm:$0xff]
    %v932 = vld [vmem:[#allocation2 + $0x200] sm:$0xff]
    %v933 = vld [vmem:[#allocation2 + $0x208] sm:$0xff]
    %v934 = vld [vmem:[#allocation2 + $0x210] sm:$0xff]
    %v935 = vld [vmem:[#allocation2 + $0x218] sm:$0xff]
    %v936 = vld [vmem:[#allocation2 + $0x220] sm:$0xff]
    %v937 = vld [vmem:[#allocation2 + $0x228] sm:$0xff]
    %v938 = vld [vmem:[#allocation2 + $0x230] sm:$0xff]
    %v939 = vld [vmem:[#allocation2 + $0x238] sm:$0xff]
    %v940 = vld [vmem:[#allocation2 + $0x240] sm:$0xff]
    %v941 = vld [vmem:[#allocation2 + $0x248] sm:$0xff]
    %v942 = vld [vmem:[#allocation2 + $0x250] sm:$0xff]
    %v943 = vld [vmem:[#allocation2 + $0x258] sm:$0xff]
    %v944 = vld [vmem:[#allocation2 + $0x260] sm:$0xff]
    %v945 = vld [vmem:[#allocation2 + $0x268] sm:$0xff]
    %v946 = vld [vmem:[#allocation2 + $0x270] sm:$0xff]
    %v947 = vld [vmem:[#allocation2 + $0x278] sm:$0xff]
    %v948 = vld [vmem:[#allocation2 + $0x280] sm:$0xff]
    %v949 = vld [vmem:[#allocation2 + $0x288] sm:$0xff]
    %v950 = vld [vmem:[#allocation2 + $0x290] sm:$0xff]
    %v951 = vld [vmem:[#allocation2 + $0x298] sm:$0xff]
    %v952 = vld [vmem:[#allocation2 + $0x2a0] sm:$0xff]
    %v953 = vld [vmem:[#allocation2 + $0x2a8] sm:$0xff]
    %v954 = vld [vmem:[#allocation2 + $0x2b0] sm:$0xff]
    %v955 = vld [vmem:[#allocation2 + $0x2b8] sm:$0xff]
    %v956 = vld [vmem:[#allocation2 + $0x2c0] sm:$0xff]
    %v957 = vld [vmem:[#allocation2 + $0x2c8] sm:$0xff]
    %v958 = vld [vmem:[#allocation2 + $0x2d0] sm:$0xff]
    %v959 = vld [vmem:[#allocation2 + $0x2d8] sm:$0xff]
    %v960 = vld [vmem:[#allocation2 + $0x2e0] sm:$0xff]
    %v961 = vld [vmem:[#allocation2 + $0x2e8] sm:$0xff]
    %v962 = vld [vmem:[#allocation2 + $0x2f0] sm:$0xff]
    %v963 = vld [vmem:[#allocation2 + $0x2f8] sm:$0xff]
    %v964 = vld [vmem:[#allocation2 + $0x300] sm:$0xff]
    %v965 = vld [vmem:[#allocation2 + $0x308] sm:$0xff]
    %v966 = vld [vmem:[#allocation2 + $0x310] sm:$0xff]
    %v967 = vld [vmem:[#allocation2 + $0x318] sm:$0xff]
    %v968 = vld [vmem:[#allocation2 + $0x320] sm:$0xff]
    %v969 = vld [vmem:[#allocation2 + $0x328] sm:$0xff]
    %v970 = vld [vmem:[#allocation2 + $0x330] sm:$0xff]
    %v971 = vld [vmem:[#allocation2 + $0x338] sm:$0xff]
    %v972 = vld [vmem:[#allocation2 + $0x340] sm:$0xff]
    %v973 = vld [vmem:[#allocation2 + $0x348] sm:$0xff]
    %v974 = vld [vmem:[#allocation2 + $0x350] sm:$0xff]
    %v975 = vld [vmem:[#allocation2 + $0x358] sm:$0xff]
    %v976 = vld [vmem:[#allocation2 + $0x360] sm:$0xff]
    %v977 = vld [vmem:[#allocation2 + $0x368] sm:$0xff]
    %v978 = vld [vmem:[#allocation2 + $0x370] sm:$0xff]
    %v979 = vld [vmem:[#allocation2 + $0x378] sm:$0xff]
    %v980 = vld [vmem:[#allocation2 + $0x380] sm:$0xff]
    %v981 = vld [vmem:[#allocation2 + $0x388] sm:$0xff]
    %v982 = vld [vmem:[#allocation2 + $0x390] sm:$0xff]
    %v983 = vld [vmem:[#allocation2 + $0x398] sm:$0xff]
    %v984 = vld [vmem:[#allocation2 + $0x3a0] sm:$0xff]
    %v985 = vld [vmem:[#allocation2 + $0x3a8] sm:$0xff]
    %v986 = vld [vmem:[#allocation2 + $0x3b0] sm:$0xff]
    %v987 = vld [vmem:[#allocation2 + $0x3b8] sm:$0xff]
    %v988 = vld [vmem:[#allocation2 + $0x3c0] sm:$0xff]
    %v989 = vld [vmem:[#allocation2 + $0x3c8] sm:$0xff]
    %v990 = vld [vmem:[#allocation2 + $0x3d0] sm:$0xff]
    %v991 = vld [vmem:[#allocation2 + $0x3d8] sm:$0xff]
    %v992 = vld [vmem:[#allocation2 + $0x3e0] sm:$0xff]
    %v993 = vld [vmem:[#allocation2 + $0x3e8] sm:$0xff]
    %v994 = vld [vmem:[#allocation2 + $0x3f0] sm:$0xff]
    %v995 = vld [vmem:[#allocation2 + $0x3f8] sm:$0xff]
    %v996 = vld [vmem:[#allocation2 + $0x400] sm:$0xff]
    %v997 = vld [vmem:[#allocation2 + $0x408] sm:$0xff]
    %v998 = vld [vmem:[#allocation2 + $0x410] sm:$0xff]
    %v999 = vld [vmem:[#allocation2 + $0x418] sm:$0xff]
    %v1000 = vld [vmem:[#allocation2 + $0x420] sm:$0xff]
    %v1001 = vld [vmem:[#allocation2 + $0x428] sm:$0xff]
    %v1002 = vld [vmem:[#allocation2 + $0x430] sm:$0xff]
    %v1003 = vld [vmem:[#allocation2 + $0x438] sm:$0xff]
    %v1004 = vld [vmem:[#allocation2 + $0x440] sm:$0xff]
    %v1005 = vld [vmem:[#allocation2 + $0x448] sm:$0xff]
    %v1006 = vld [vmem:[#allocation2 + $0x450] sm:$0xff]
    %v1007 = vld [vmem:[#allocation2 + $0x458] sm:$0xff]
    %v1008 = vld [vmem:[#allocation2 + $0x460] sm:$0xff]
    %v1009 = vld [vmem:[#allocation2 + $0x468] sm:$0xff]
    %v1010 = vld [vmem:[#allocation2 + $0x470] sm:$0xff]
    %v1011 = vld [vmem:[#allocation2 + $0x478] sm:$0xff]
    %v1012 = vld [vmem:[#allocation2 + $0x480] sm:$0xff]
    %v1013 = vld [vmem:[#allocation2 + $0x488] sm:$0xff]
    %v1014 = vld [vmem:[#allocation2 + $0x490] sm:$0xff]
    %v1015 = vld [vmem:[#allocation2 + $0x498] sm:$0xff]
    %v1016 = vld [vmem:[#allocation2 + $0x4a0] sm:$0xff]
    %v1017 = vld [vmem:[#allocation2 + $0x4a8] sm:$0xff]
    %v1018 = vld [vmem:[#allocation2 + $0x4b0] sm:$0xff]
    %v1019 = vld [vmem:[#allocation2 + $0x4b8] sm:$0xff]
    %v1020 = vld [vmem:[#allocation2 + $0x4c0] sm:$0xff]
    %v1021 = vld [vmem:[#allocation2 + $0x4c8] sm:$0xff]
    %v1022 = vld [vmem:[#allocation2 + $0x4d0] sm:$0xff]
    %v1023 = vld [vmem:[#allocation2 + $0x4d8] sm:$0xff]
    %v1024 = vld [vmem:[#allocation2 + $0x4e0] sm:$0xff]
    %v1025 = vld [vmem:[#allocation2 + $0x4e8] sm:$0xff]
    %v1026 = vld [vmem:[#allocation2 + $0x4f0] sm:$0xff]
    %v1027 = vld [vmem:[#allocation2 + $0x4f8] sm:$0xff]
    %v1028 = vld [vmem:[#allocation2 + $0x500] sm:$0xff]
    %v1029 = vld [vmem:[#allocation2 + $0x508] sm:$0xff]
    %v1030 = vld [vmem:[#allocation2 + $0x510] sm:$0xff]
    %v1031 = vld [vmem:[#allocation2 + $0x518] sm:$0xff]
    %v1032 = vld [vmem:[#allocation2 + $0x520] sm:$0xff]
    %v1033 = vld [vmem:[#allocation2 + $0x528] sm:$0xff]
    %v1034 = vld [vmem:[#allocation2 + $0x530] sm:$0xff]
    %v1035 = vld [vmem:[#allocation2 + $0x538] sm:$0xff]
    %v1036 = vld [vmem:[#allocation2 + $0x540] sm:$0xff]
    %v1037 = vld [vmem:[#allocation2 + $0x548] sm:$0xff]
    %v1038 = vld [vmem:[#allocation2 + $0x550] sm:$0xff]
    %v1039 = vld [vmem:[#allocation2 + $0x558] sm:$0xff]
    %v1040 = vld [vmem:[#allocation2 + $0x560] sm:$0xff]
    %v1041 = vld [vmem:[#allocation2 + $0x568] sm:$0xff]
    %v1042 = vld [vmem:[#allocation2 + $0x570] sm:$0xff]
    %vm1043 = vcmask 588800
    %v1045 = vsel %vm1043, %v865, 0
    %v1048 = vsel %vm1043, %v867, 0
    %1050 = vmatprep.subr.mxu0 %v869
    %1051 = vmatpush1.msra.mxu0 %v868
    %1052 = vmatprep.subr.mxu0 %v876
    %1053 = vmatpush1.msra.mxu0 %v875
    %1054 = vmatprep.subr.mxu0 %v883
    %1055 = vmatpush1.msra.mxu0 %v882
    %1056 = vmatprep.subr.mxu0 %v890
    %1057 = vmatpush1.msra.mxu0 %v889
    %1058 = vmatprep.subr.mxu0 %v897
    %1059 = vmatpush1.msra.mxu0 %v896
    %1060 = vmatprep.subr.mxu0 %v904
    %1061 = vmatpush1.msra.mxu0 %v903
    %1062 = vmatprep.subr.mxu0 %v911
    %1063 = vmatpush1.msra.mxu0 %v910
    %1064 = vmatprep.subr.mxu0 %v918
    %1065 = vmatpush1.msra.mxu0 %v917
    %1066 = vmatprep.subr.mxu0 %v925
    %1067 = vmatpush1.msra.mxu0 %v924
    %1068 = vmatprep.subr.mxu0 %v932
    %1069 = vmatpush1.msra.mxu0 %v931
    %1070 = vmatprep.subr.mxu0 %v939
    %1071 = vmatpush1.msra.mxu0 %v938
    %1072 = vmatprep.subr.mxu0 %v946
    %1073 = vmatpush1.msra.mxu0 %v945
    %1074 = vmatprep.subr.mxu0 %v953
    %1075 = vmatpush1.msra.mxu0 %v952
    %1076 = vmatprep.subr.mxu0 %v960
    %1077 = vmatpush1.msra.mxu0 %v959
    %1078 = vmatprep.subr.mxu0 %v967
    %1079 = vmatpush1.msra.mxu0 %v966
    %1080 = vmatprep.subr.mxu0 %v974
    %1081 = vmatpush1.msra.mxu0 %v973
    %1082 = vmatprep.subr.mxu0 %v981
    %1083 = vmatpush1.msra.mxu0 %v980
    %1084 = vmatprep.subr.mxu0 %v988
    %1085 = vmatpush1.msra.mxu0 %v987
    %1086 = vmatprep.subr.mxu0 %v995
    %1087 = vmatpush1.msra.mxu0 %v994
    %1088 = vmatprep.subr.mxu0 %v1002
    %1089 = vmatpush1.msra.mxu0 %v1001
    %1090 = vmatprep.subr.mxu0 %v1009
    %1091 = vmatpush1.msra.mxu0 %v1008
    %1092 = vmatprep.subr.mxu0 %v1016
    %1093 = vmatpush1.msra.mxu0 %v1015
    %1094 = vmatprep.subr.mxu0 %v1023
    %1095 = vmatpush1.msra.mxu0 %v1022
    %1096 = vmatprep.subr.mxu0 %v1030
    %1097 = vmatpush1.msra.mxu0 %v1029
    %1098 = vmatprep.subr.mxu0 %v1037
    %1099 = vmatpush1.msra.mxu0 %v1036
    %1100 = vmatprep.subr.mxu0 0.0
    %1101 = vmatpush1.msra.mxu0 0.0
    %1102 = vmatprep.subr.mxu0 0.0
    %1103 = vmatpush1.msra.mxu0 0.0
    %1104 = vmatprep.subr.mxu0 0.0
    %1105 = vmatpush1.msra.mxu0 0.0
    %1106 = vmatprep.subr.mxu0 0.0
    %1107 = vmatpush1.msra.mxu0 0.0
    %1108 = vmatprep.subr.mxu0 0.0
    %1109 = vmatpush1.msra.mxu0 0.0
    %1110 = vmatprep.subr.mxu0 0.0
    %1111 = vmatpush1.msra.mxu0 0.0
    %1112 = vmatprep.subr.mxu0 0.0
    %1113 = vmatpush1.msra.mxu0 0.0
    %1114 = vmatprep.mubr.f32.mxu0 %v1045
    %1115 = vmatmul.mubr.f32.gmra.mrb[0].mxu0 %v864
    %v1116 = vpop.f32.mrb[0].mxu0
    %v1117 = vadd.f32 0.0, %v1116
    %v1118 = vpop.f32.mrb[0].mxu0
    %v1119 = vadd.f32 0.0, %v1118
    %1120 = vmatprep.mubr.f32.mxu0 %v1048
    %1121 = vmatmul.mubr.f32.gmra.mrb[0].mxu0 %v866
    %v1122 = vpop.f32.mrb[0].mxu0
    %v1123 = vadd.f32 0.0, %v1122
    %v1124 = vpop.f32.mrb[0].mxu0
    %v1125 = vadd.f32 0.0, %v1124
    %1126 = vdwg.mxu0
    %1127 = vmatprep.subr.mxu0 %v871
    %1128 = vmatpush1.msra.mxu0 %v870
    %1129 = vmatprep.subr.mxu0 %v878
    %1130 = vmatpush1.msra.mxu0 %v877
    %1131 = vmatprep.subr.mxu0 %v885
    %1132 = vmatpush1.msra.mxu0 %v884
    %1133 = vmatprep.subr.mxu0 %v892
    %1134 = vmatpush1.msra.mxu0 %v891
    %1135 = vmatprep.subr.mxu0 %v899
    %1136 = vmatpush1.msra.mxu0 %v898
    %1137 = vmatprep.subr.mxu0 %v906
    %1138 = vmatpush1.msra.mxu0 %v905
    %1139 = vmatprep.subr.mxu0 %v913
    %1140 = vmatpush1.msra.mxu0 %v912
    %1141 = vmatprep.subr.mxu0 %v920
    %1142 = vmatpush1.msra.mxu0 %v919
    %1143 = vmatprep.subr.mxu0 %v927
    %1144 = vmatpush1.msra.mxu0 %v926
    %1145 = vmatprep.subr.mxu0 %v934
    %1146 = vmatpush1.msra.mxu0 %v933
    %1147 = vmatprep.subr.mxu0 %v941
    %1148 = vmatpush1.msra.mxu0 %v940
    %1149 = vmatprep.subr.mxu0 %v948
    %1150 = vmatpush1.msra.mxu0 %v947
    %1151 = vmatprep.subr.mxu0 %v955
    %1152 = vmatpush1.msra.mxu0 %v954
    %1153 = vmatprep.subr.mxu0 %v962
    %1154 = vmatpush1.msra.mxu0 %v961
    %1155 = vmatprep.subr.mxu0 %v969
    %1156 = vmatpush1.msra.mxu0 %v968
    %1157 = vmatprep.subr.mxu0 %v976
    %1158 = vmatpush1.msra.mxu0 %v975
    %1159 = vmatprep.subr.mxu0 %v983
    %1160 = vmatpush1.msra.mxu0 %v982
    %1161 = vmatprep.subr.mxu0 %v990
    %1162 = vmatpush1.msra.mxu0 %v989
    %1163 = vmatprep.subr.mxu0 %v997
    %1164 = vmatpush1.msra.mxu0 %v996
    %1165 = vmatprep.subr.mxu0 %v1004
    %1166 = vmatpush1.msra.mxu0 %v1003
    %1167 = vmatprep.subr.mxu0 %v1011
    %1168 = vmatpush1.msra.mxu0 %v1010
    %1169 = vmatprep.subr.mxu0 %v1018
    %1170 = vmatpush1.msra.mxu0 %v1017
    %1171 = vmatprep.subr.mxu0 %v1025
    %1172 = vmatpush1.msra.mxu0 %v1024
    %1173 = vmatprep.subr.mxu0 %v1032
    %1174 = vmatpush1.msra.mxu0 %v1031
    %1175 = vmatprep.subr.mxu0 %v1039
    %1176 = vmatpush1.msra.mxu0 %v1038
    %1177 = vmatprep.subr.mxu0 0.0
    %1178 = vmatpush1.msra.mxu0 0.0
    %1179 = vmatprep.subr.mxu0 0.0
    %1180 = vmatpush1.msra.mxu0 0.0
    %1181 = vmatprep.subr.mxu0 0.0
    %1182 = vmatpush1.msra.mxu0 0.0
    %1183 = vmatprep.subr.mxu0 0.0
    %1184 = vmatpush1.msra.mxu0 0.0
    %1185 = vmatprep.subr.mxu0 0.0
    %1186 = vmatpush1.msra.mxu0 0.0
    %1187 = vmatprep.subr.mxu0 0.0
    %1188 = vmatpush1.msra.mxu0 0.0
    %1189 = vmatprep.subr.mxu0 0.0
    %1190 = vmatpush1.msra.mxu0 0.0
    %1191 = vmatprep.mubr.f32.mxu0 %v1045
    %1192 = vmatmul.mubr.f32.gmra.mrb[0].mxu0 %v864
    %v1193 = vpop.f32.mrb[0].mxu0
    %v1194 = vadd.f32 0.0, %v1193
    %v1195 = vpop.f32.mrb[0].mxu0
    %v1196 = vadd.f32 0.0, %v1195
    %1197 = vmatprep.mubr.f32.mxu0 %v1048
    %1198 = vmatmul.mubr.f32.gmra.mrb[0].mxu0 %v866
    %v1199 = vpop.f32.mrb[0].mxu0
    %v1200 = vadd.f32 0.0, %v1199
    %v1201 = vpop.f32.mrb[0].mxu0
    %v1202 = vadd.f32 0.0, %v1201
    %1203 = vdwg.mxu0
    %1204 = vmatprep.subr.mxu0 %v873
    %1205 = vmatpush1.msra.mxu0 %v872
    %1206 = vmatprep.subr.mxu0 %v880
    %1207 = vmatpush1.msra.mxu0 %v879
    %1208 = vmatprep.subr.mxu0 %v887
    %1209 = vmatpush1.msra.mxu0 %v886
    %1210 = vmatprep.subr.mxu0 %v894
    %1211 = vmatpush1.msra.mxu0 %v893
    %1212 = vmatprep.subr.mxu0 %v901
    %1213 = vmatpush1.msra.mxu0 %v900
    %1214 = vmatprep.subr.mxu0 %v908
    %1215 = vmatpush1.msra.mxu0 %v907
    %1216 = vmatprep.subr.mxu0 %v915
    %1217 = vmatpush1.msra.mxu0 %v914
    %1218 = vmatprep.subr.mxu0 %v922
    %1219 = vmatpush1.msra.mxu0 %v921
    %1220 = vmatprep.subr.mxu0 %v929
    %1221 = vmatpush1.msra.mxu0 %v928
    %1222 = vmatprep.subr.mxu0 %v936
    %1223 = vmatpush1.msra.mxu0 %v935
    %1224 = vmatprep.subr.mxu0 %v943
    %1225 = vmatpush1.msra.mxu0 %v942
    %1226 = vmatprep.subr.mxu0 %v950
    %1227 = vmatpush1.msra.mxu0 %v949
    %1228 = vmatprep.subr.mxu0 %v957
    %1229 = vmatpush1.msra.mxu0 %v956
    %1230 = vmatprep.subr.mxu0 %v964
    %1231 = vmatpush1.msra.mxu0 %v963
    %1232 = vmatprep.subr.mxu0 %v971
    %1233 = vmatpush1.msra.mxu0 %v970
    %1234 = vmatprep.subr.mxu0 %v978
    %1235 = vmatpush1.msra.mxu0 %v977
    %1236 = vmatprep.subr.mxu0 %v985
    %1237 = vmatpush1.msra.mxu0 %v984
    %1238 = vmatprep.subr.mxu0 %v992
    %1239 = vmatpush1.msra.mxu0 %v991
    %1240 = vmatprep.subr.mxu0 %v999
    %1241 = vmatpush1.msra.mxu0 %v998
    %1242 = vmatprep.subr.mxu0 %v1006
    %1243 = vmatpush1.msra.mxu0 %v1005
    %1244 = vmatprep.subr.mxu0 %v1013
    %1245 = vmatpush1.msra.mxu0 %v1012
    %1246 = vmatprep.subr.mxu0 %v1020
    %1247 = vmatpush1.msra.mxu0 %v1019
    %1248 = vmatprep.subr.mxu0 %v1027
    %1249 = vmatpush1.msra.mxu0 %v1026
    %1250 = vmatprep.subr.mxu0 %v1034
    %1251 = vmatpush1.msra.mxu0 %v1033
    %1252 = vmatprep.subr.mxu0 %v1041
    %1253 = vmatpush1.msra.mxu0 %v1040
    %1254 = vmatprep.subr.mxu0 0.0
    %1255 = vmatpush1.msra.mxu0 0.0
    %1256 = vmatprep.subr.mxu0 0.0
    %1257 = vmatpush1.msra.mxu0 0.0
    %1258 = vmatprep.subr.mxu0 0.0
    %1259 = vmatpush1.msra.mxu0 0.0
    %1260 = vmatprep.subr.mxu0 0.0
    %1261 = vmatpush1.msra.mxu0 0.0
    %1262 = vmatprep.subr.mxu0 0.0
    %1263 = vmatpush1.msra.mxu0 0.0
    %1264 = vmatprep.subr.mxu0 0.0
    %1265 = vmatpush1.msra.mxu0 0.0
    %1266 = vmatprep.subr.mxu0 0.0
    %1267 = vmatpush1.msra.mxu0 0.0
    %1268 = vmatprep.mubr.f32.mxu0 %v1045
    %1269 = vmatmul.mubr.f32.gmra.mrb[0].mxu0 %v864
    %v1270 = vpop.f32.mrb[0].mxu0
    %v1271 = vadd.f32 0.0, %v1270
    %v1272 = vpop.f32.mrb[0].mxu0
    %v1273 = vadd.f32 0.0, %v1272
    %1274 = vmatprep.mubr.f32.mxu0 %v1048
    %1275 = vmatmul.mubr.f32.gmra.mrb[0].mxu0 %v866
    %v1276 = vpop.f32.mrb[0].mxu0
    %v1277 = vadd.f32 0.0, %v1276
    %v1278 = vpop.f32.mrb[0].mxu0
    %v1279 = vadd.f32 0.0, %v1278
    %1280 = vdwg.mxu0
    %1281 = vmatprep.subr.mxu0 0.0
    %1282 = vmatpush1.msra.mxu0 %v874
    %1283 = vmatprep.subr.mxu0 0.0
    %1284 = vmatpush1.msra.mxu0 %v881
    %1285 = vmatprep.subr.mxu0 0.0
    %1286 = vmatpush1.msra.mxu0 %v888
    %1287 = vmatprep.subr.mxu0 0.0
    %1288 = vmatpush1.msra.mxu0 %v895
    %1289 = vmatprep.subr.mxu0 0.0
    %1290 = vmatpush1.msra.mxu0 %v902
    %1291 = vmatprep.subr.mxu0 0.0
    %1292 = vmatpush1.msra.mxu0 %v909
    %1293 = vmatprep.subr.mxu0 0.0
    %1294 = vmatpush1.msra.mxu0 %v916
    %1295 = vmatprep.subr.mxu0 0.0
    %1296 = vmatpush1.msra.mxu0 %v923
    %1297 = vmatprep.subr.mxu0 0.0
    %1298 = vmatpush1.msra.mxu0 %v930
    %1299 = vmatprep.subr.mxu0 0.0
    %1300 = vmatpush1.msra.mxu0 %v937
    %1301 = vmatprep.subr.mxu0 0.0
    %1302 = vmatpush1.msra.mxu0 %v944
    %1303 = vmatprep.subr.mxu0 0.0
    %1304 = vmatpush1.msra.mxu0 %v951
    %1305 = vmatprep.subr.mxu0 0.0
    %1306 = vmatpush1.msra.mxu0 %v958
    %1307 = vmatprep.subr.mxu0 0.0
    %1308 = vmatpush1.msra.mxu0 %v965
    %1309 = vmatprep.subr.mxu0 0.0
    %1310 = vmatpush1.msra.mxu0 %v972
    %1311 = vmatprep.subr.mxu0 0.0
    %1312 = vmatpush1.msra.mxu0 %v979
    %1313 = vmatprep.subr.mxu0 0.0
    %1314 = vmatpush1.msra.mxu0 %v986
    %1315 = vmatprep.subr.mxu0 0.0
    %1316 = vmatpush1.msra.mxu0 %v993
    %1317 = vmatprep.subr.mxu0 0.0
    %1318 = vmatpush1.msra.mxu0 %v1000
    %1319 = vmatprep.subr.mxu0 0.0
    %1320 = vmatpush1.msra.mxu0 %v1007
    %1321 = vmatprep.subr.mxu0 0.0
    %1322 = vmatpush1.msra.mxu0 %v1014
    %1323 = vmatprep.subr.mxu0 0.0
    %1324 = vmatpush1.msra.mxu0 %v1021
    %1325 = vmatprep.subr.mxu0 0.0
    %1326 = vmatpush1.msra.mxu0 %v1028
    %1327 = vmatprep.subr.mxu0 0.0
    %1328 = vmatpush1.msra.mxu0 %v1035
    %1329 = vmatprep.subr.mxu0 0.0
    %1330 = vmatpush1.msra.mxu0 %v1042
    %1331 = vmatprep.subr.mxu0 0.0
    %1332 = vmatpush1.msra.mxu0 0.0
    %1333 = vmatprep.subr.mxu0 0.0
    %1334 = vmatpush1.msra.mxu0 0.0
    %1335 = vmatprep.subr.mxu0 0.0
    %1336 = vmatpush1.msra.mxu0 0.0
    %1337 = vmatprep.subr.mxu0 0.0
    %1338 = vmatpush1.msra.mxu0 0.0
    %1339 = vmatprep.subr.mxu0 0.0
    %1340 = vmatpush1.msra.mxu0 0.0
    %1341 = vmatprep.subr.mxu0 0.0
    %1342 = vmatpush1.msra.mxu0 0.0
    %1343 = vmatprep.subr.mxu0 0.0
    %1344 = vmatpush1.msra.mxu0 0.0
    %1345 = vmatprep.mubr.f32.mxu0 %v1045
    %1346 = vmatmul.mubr.f32.gmra.mrb[0].mxu0 %v864
    %v1347 = vpop.f32.mrb[0].mxu0
    %v1348 = vadd.f32 0.0, %v1347
    %v1349 = vpop.f32.mrb[0].mxu0
    %1350 = vmatprep.mubr.f32.mxu0 %v1048
    %1351 = vmatmul.mubr.f32.gmra.mrb[0].mxu0 %v866
    %v1352 = vpop.f32.mrb[0].mxu0
    %v1353 = vadd.f32 0.0, %v1352
    %v1354 = vpop.f32.mrb[0].mxu0
    %1355 = vdwg.mxu0
    %v1356 = vmax.f32 %v1117, 0.0
    %v1357 = vmax.f32 %v1119, 0.0
    %v1358 = vmax.f32 %v1194, 0.0
    %v1359 = vmax.f32 %v1196, 0.0
    %v1360 = vmax.f32 %v1271, 0.0
    %v1361 = vmax.f32 %v1273, 0.0
    %v1362 = vmax.f32 %v1348, 0.0
    %v1363 = vmax.f32 %v1123, 0.0
    %v1364 = vmax.f32 %v1125, 0.0
    %v1365 = vmax.f32 %v1200, 0.0
    %v1366 = vmax.f32 %v1202, 0.0
    %v1367 = vmax.f32 %v1277, 0.0
    %v1368 = vmax.f32 %v1279, 0.0
    %v1369 = vmax.f32 %v1353, 0.0
    %1384 = vrot.lane.b32.xlu0 %v1356, 127
    %v1385 = vpop.permute.xlu0 %1384
    %1386 = vrot.lane.b32.xlu0 %v1357, 127
    %v1387 = vpop.permute.xlu0 %1386
    %1388 = vrot.lane.b32.xlu0 %v1358, 127
    %v1389 = vpop.permute.xlu0 %1388
    %1390 = vrot.lane.b32.xlu0 %v1359, 127
    %v1391 = vpop.permute.xlu0 %1390
    %1392 = vrot.lane.b32.xlu0 %v1360, 127
    %v1393 = vpop.permute.xlu0 %1392
    %1394 = vrot.lane.b32.xlu0 %v1361, 127
    %v1395 = vpop.permute.xlu0 %1394
    %1396 = vrot.lane.b32.xlu0 %v1362, 127
    %v1397 = vpop.permute.xlu0 %1396
    %1398 = vrot.lane.b32.xlu0 %v1363, 127
    %v1399 = vpop.permute.xlu0 %1398
    %1400 = vrot.lane.b32.xlu0 %v1364, 127
    %v1401 = vpop.permute.xlu0 %1400
    %1402 = vrot.lane.b32.xlu0 %v1365, 127
    %v1403 = vpop.permute.xlu0 %1402
    %1404 = vrot.lane.b32.xlu0 %v1366, 127
    %v1405 = vpop.permute.xlu0 %1404
    %1406 = vrot.lane.b32.xlu0 %v1367, 127
    %v1407 = vpop.permute.xlu0 %1406
    %1408 = vrot.lane.b32.xlu0 %v1368, 127
    %v1409 = vpop.permute.xlu0 %1408
    %1410 = vrot.lane.b32.xlu0 %v1369, 127
    %v1411 = vpop.permute.xlu0 %1410
    %v1412 = vsel %vm113, %v1385, %v1387
    %v1413 = vsel %vm113, %v1387, %v1389
    %v1414 = vsel %vm113, %v1389, %v1391
    %v1415 = vsel %vm113, %v1391, %v1393
    %v1416 = vsel %vm113, %v1393, %v1395
    %v1417 = vsel %vm113, %v1395, %v1397
    %v1418 = vsel %vm113, %v1399, %v1401
    %v1419 = vsel %vm113, %v1401, %v1403
    %v1420 = vsel %vm113, %v1403, %v1405
    %v1421 = vsel %vm113, %v1405, %v1407
    %v1422 = vsel %vm113, %v1407, %v1409
    %v1423 = vsel %vm113, %v1409, %v1411
    %v1438 = vmax.f32 %v1356, %v1412
    %v1439 = vmax.f32 %v1357, %v1413
    %v1440 = vmax.f32 %v1358, %v1414
    %v1441 = vmax.f32 %v1359, %v1415
    %v1442 = vmax.f32 %v1360, %v1416
    %v1443 = vmax.f32 %v1361, %v1417
    %v1444 = vmax.f32 %v1362, %v1397
    %v1445 = vmax.f32 %v1363, %v1418
    %v1446 = vmax.f32 %v1364, %v1419
    %v1447 = vmax.f32 %v1365, %v1420
    %v1448 = vmax.f32 %v1366, %v1421
    %v1449 = vmax.f32 %v1367, %v1422
    %v1450 = vmax.f32 %v1368, %v1423
    %v1451 = vmax.f32 %v1369, %v1411
    %1466 = vrot.lane.b32.xlu0 %v1438, 96
    %v1467 = vpop.permute.xlu0 %1466
    %1468 = vrot.lane.b32.xlu0 %v1439, 96
    %v1469 = vpop.permute.xlu0 %1468
    %1470 = vrot.lane.b32.xlu0 %v1440, 96
    %v1471 = vpop.permute.xlu0 %1470
    %1472 = vrot.lane.b32.xlu0 %v1441, 96
    %v1473 = vpop.permute.xlu0 %1472
    %1474 = vrot.lane.b32.xlu0 %v1442, 96
    %v1475 = vpop.permute.xlu0 %1474
    %1476 = vrot.lane.b32.xlu0 %v1443, 96
    %v1477 = vpop.permute.xlu0 %1476
    %1478 = vrot.lane.b32.xlu0 %v1444, 96
    %v1479 = vpop.permute.xlu0 %1478
    %1480 = vrot.lane.b32.xlu0 %v1445, 96
    %v1481 = vpop.permute.xlu0 %1480
    %1482 = vrot.lane.b32.xlu0 %v1446, 96
    %v1483 = vpop.permute.xlu0 %1482
    %1484 = vrot.lane.b32.xlu0 %v1447, 96
    %v1485 = vpop.permute.xlu0 %1484
    %1486 = vrot.lane.b32.xlu0 %v1448, 96
    %v1487 = vpop.permute.xlu0 %1486
    %1488 = vrot.lane.b32.xlu0 %v1449, 96
    %v1489 = vpop.permute.xlu0 %1488
    %1490 = vrot.lane.b32.xlu0 %v1450, 96
    %v1491 = vpop.permute.xlu0 %1490
    %1492 = vrot.lane.b32.xlu0 %v1451, 96
    %v1493 = vpop.permute.xlu0 %1492
    %v1494 = vsel %vm255, %v1467, %v1469
    %v1495 = vsel %vm255, %v1469, %v1471
    %v1496 = vsel %vm255, %v1471, %v1473
    %v1497 = vsel %vm255, %v1473, %v1475
    %v1498 = vsel %vm255, %v1475, %v1477
    %v1499 = vsel %vm255, %v1477, %v1479
    %v1500 = vsel %vm255, %v1481, %v1483
    %v1501 = vsel %vm255, %v1483, %v1485
    %v1502 = vsel %vm255, %v1485, %v1487
    %v1503 = vsel %vm255, %v1487, %v1489
    %v1504 = vsel %vm255, %v1489, %v1491
    %v1505 = vsel %vm255, %v1491, %v1493
    %v1520 = vmax.f32 %v1438, %v1494
    %v1521 = vmax.f32 %v1439, %v1495
    %v1522 = vmax.f32 %v1440, %v1496
    %v1523 = vmax.f32 %v1441, %v1497
    %v1524 = vmax.f32 %v1442, %v1498
    %v1525 = vmax.f32 %v1443, %v1499
    %v1526 = vmax.f32 %v1444, %v1479
    %v1527 = vmax.f32 %v1445, %v1500
    %v1528 = vmax.f32 %v1446, %v1501
    %v1529 = vmax.f32 %v1447, %v1502
    %v1530 = vmax.f32 %v1448, %v1503
    %v1531 = vmax.f32 %v1449, %v1504
    %v1532 = vmax.f32 %v1450, %v1505
    %v1533 = vmax.f32 %v1451, %v1493
    %1534 = vst [vmem:[#allocation3] sm:$0xff] %v1520
    %1535 = vst [vmem:[#allocation3 + $0x8] sm:$0xff] %v1521
    %1536 = vst [vmem:[#allocation3 + $0x10] sm:$0xff] %v1522
    %1537 = vst [vmem:[#allocation3 + $0x18] sm:$0xff] %v1523
    %vm1538 = vcmask 678912
    %1539 = vst.msk [vmem:[#allocation3 + $0x20] sm:$0xff] %vm1538, %v1524
    %1540 = vst [vmem:[#allocation3 + $0x28] sm:$0xff] %v1527
    %1541 = vst [vmem:[#allocation3 + $0x30] sm:$0xff] %v1528
    %1542 = vst [vmem:[#allocation3 + $0x38] sm:$0xff] %v1529
    %1543 = vst [vmem:[#allocation3 + $0x40] sm:$0xff] %v1530
    %1544 = vst.msk [vmem:[#allocation3 + $0x48] sm:$0xff] %vm1538, %v1531
    %1555 = vrot.lane.b32.xlu0 %v1520, 126
    %v1556 = vpop.permute.xlu0 %1555
    %1557 = vrot.lane.b32.xlu0 %v1521, 126
    %v1558 = vpop.permute.xlu0 %1557
    %1559 = vrot.lane.b32.xlu0 %v1522, 126
    %v1560 = vpop.permute.xlu0 %1559
    %1561 = vrot.lane.b32.xlu0 %v1523, 126
    %v1562 = vpop.permute.xlu0 %1561
    %1563 = vrot.lane.b32.xlu0 %v1524, 126
    %v1564 = vpop.permute.xlu0 %1563
    %1565 = vrot.lane.b32.xlu0 %v1527, 126
    %v1566 = vpop.permute.xlu0 %1565
    %1567 = vrot.lane.b32.xlu0 %v1528, 126
    %v1568 = vpop.permute.xlu0 %1567
    %1569 = vrot.lane.b32.xlu0 %v1529, 126
    %v1570 = vpop.permute.xlu0 %1569
    %1571 = vrot.lane.b32.xlu0 %v1530, 126
    %v1572 = vpop.permute.xlu0 %1571
    %1573 = vrot.lane.b32.xlu0 %v1531, 126
    %v1574 = vpop.permute.xlu0 %1573
    %v1575 = vsel %vm148, %v1556, %v1558
    %v1576 = vsel %vm148, %v1558, %v1560
    %v1577 = vsel %vm148, %v1560, %v1562
    %v1578 = vsel %vm148, %v1562, %v1564
    %v1579 = vsel %vm148, %v1566, %v1568
    %v1580 = vsel %vm148, %v1568, %v1570
    %v1581 = vsel %vm148, %v1570, %v1572
    %v1582 = vsel %vm148, %v1572, %v1574
    %1593 = vst [vmem:[#allocation3 + $0x50] sm:$0xff] %v1575
    %1594 = vst [vmem:[#allocation3 + $0x58] sm:$0xff] %v1576
    %1595 = vst [vmem:[#allocation3 + $0x60] sm:$0xff] %v1577
    %1596 = vst [vmem:[#allocation3 + $0x68] sm:$0xff] %v1578
    %1597 = vst.msk [vmem:[#allocation3 + $0x70] sm:$0xff] %vm1538, %v1564
    %1598 = vst [vmem:[#allocation3 + $0x78] sm:$0xff] %v1579
    %1599 = vst [vmem:[#allocation3 + $0x80] sm:$0xff] %v1580
    %1600 = vst [vmem:[#allocation3 + $0x88] sm:$0xff] %v1581
    %1601 = vst [vmem:[#allocation3 + $0x90] sm:$0xff] %v1582
    %1602 = vst.msk [vmem:[#allocation3 + $0x98] sm:$0xff] %vm1538, %v1574
    %1603 = vrot.lane.b32.xlu0 %v1520, 124
    %v1604 = vpop.permute.xlu0 %1603
    %1605 = vrot.lane.b32.xlu0 %v1521, 124
    %v1606 = vpop.permute.xlu0 %1605
    %1607 = vrot.lane.b32.xlu0 %v1522, 124
    %v1608 = vpop.permute.xlu0 %1607
    %1609 = vrot.lane.b32.xlu0 %v1523, 124
    %v1610 = vpop.permute.xlu0 %1609
    %1611 = vrot.lane.b32.xlu0 %v1524, 124
    %v1612 = vpop.permute.xlu0 %1611
    %1613 = vrot.lane.b32.xlu0 %v1527, 124
    %v1614 = vpop.permute.xlu0 %1613
    %1615 = vrot.lane.b32.xlu0 %v1528, 124
    %v1616 = vpop.permute.xlu0 %1615
    %1617 = vrot.lane.b32.xlu0 %v1529, 124
    %v1618 = vpop.permute.xlu0 %1617
    %1619 = vrot.lane.b32.xlu0 %v1530, 124
    %v1620 = vpop.permute.xlu0 %1619
    %1621 = vrot.lane.b32.xlu0 %v1531, 124
    %v1622 = vpop.permute.xlu0 %1621
    %v1623 = vsel %vm90, %v1604, %v1606
    %v1624 = vsel %vm90, %v1606, %v1608
    %v1625 = vsel %vm90, %v1608, %v1610
    %v1626 = vsel %vm90, %v1610, %v1612
    %v1627 = vsel %vm90, %v1614, %v1616
    %v1628 = vsel %vm90, %v1616, %v1618
    %v1629 = vsel %vm90, %v1618, %v1620
    %v1630 = vsel %vm90, %v1620, %v1622
    %1641 = vst [vmem:[#allocation3 + $0xa0] sm:$0xff] %v1623
    %1642 = vst [vmem:[#allocation3 + $0xa8] sm:$0xff] %v1624
    %1643 = vst [vmem:[#allocation3 + $0xb0] sm:$0xff] %v1625
    %1644 = vst [vmem:[#allocation3 + $0xb8] sm:$0xff] %v1626
    %1645 = vst.msk [vmem:[#allocation3 + $0xc0] sm:$0xff] %vm1538, %v1612
    %1646 = vst [vmem:[#allocation3 + $0xc8] sm:$0xff] %v1627
    %1647 = vst [vmem:[#allocation3 + $0xd0] sm:$0xff] %v1628
    %1648 = vst [vmem:[#allocation3 + $0xd8] sm:$0xff] %v1629
    %1649 = vst [vmem:[#allocation3 + $0xe0] sm:$0xff] %v1630
    %1650 = vst.msk [vmem:[#allocation3 + $0xe8] sm:$0xff] %vm1538, %v1622
    %1651 = vrot.lane.b32.xlu0 %v1520, 122
    %v1652 = vpop.permute.xlu0 %1651
    %1653 = vrot.lane.b32.xlu0 %v1521, 122
    %v1654 = vpop.permute.xlu0 %1653
    %1655 = vrot.lane.b32.xlu0 %v1522, 122
    %v1656 = vpop.permute.xlu0 %1655
    %1657 = vrot.lane.b32.xlu0 %v1523, 122
    %v1658 = vpop.permute.xlu0 %1657
    %1659 = vrot.lane.b32.xlu0 %v1524, 122
    %v1660 = vpop.permute.xlu0 %1659
    %1661 = vrot.lane.b32.xlu0 %v1527, 122
    %v1662 = vpop.permute.xlu0 %1661
    %1663 = vrot.lane.b32.xlu0 %v1528, 122
    %v1664 = vpop.permute.xlu0 %1663
    %1665 = vrot.lane.b32.xlu0 %v1529, 122
    %v1666 = vpop.permute.xlu0 %1665
    %1667 = vrot.lane.b32.xlu0 %v1530, 122
    %v1668 = vpop.permute.xlu0 %1667
    %1669 = vrot.lane.b32.xlu0 %v1531, 122
    %v1670 = vpop.permute.xlu0 %1669
    %vm1671 = vcmask 998400
    %v1672 = vsel %vm1671, %v1652, %v1654
    %v1673 = vsel %vm1671, %v1654, %v1656
    %v1674 = vsel %vm1671, %v1656, %v1658
    %v1675 = vsel %vm1671, %v1658, %v1660
    %v1676 = vsel %vm1671, %v1662, %v1664
    %v1677 = vsel %vm1671, %v1664, %v1666
    %v1678 = vsel %vm1671, %v1666, %v1668
    %v1679 = vsel %vm1671, %v1668, %v1670
    %1690 = vst [vmem:[#allocation3 + $0xf0] sm:$0xff] %v1672
    %1691 = vst [vmem:[#allocation3 + $0xf8] sm:$0xff] %v1673
    %1692 = vst [vmem:[#allocation3 + $0x100] sm:$0xff] %v1674
    %1693 = vst [vmem:[#allocation3 + $0x108] sm:$0xff] %v1675
    %1694 = vst.msk [vmem:[#allocation3 + $0x110] sm:$0xff] %vm1538, %v1660
    %1695 = vst [vmem:[#allocation3 + $0x118] sm:$0xff] %v1676
    %1696 = vst [vmem:[#allocation3 + $0x120] sm:$0xff] %v1677
    %1697 = vst [vmem:[#allocation3 + $0x128] sm:$0xff] %v1678
    %1698 = vst [vmem:[#allocation3 + $0x130] sm:$0xff] %v1679
    %1699 = vst.msk [vmem:[#allocation3 + $0x138] sm:$0xff] %vm1538, %v1670
    %1700 = vrot.lane.b32.xlu0 %v1520, 120
    %v1701 = vpop.permute.xlu0 %1700
    %1702 = vrot.lane.b32.xlu0 %v1521, 120
    %v1703 = vpop.permute.xlu0 %1702
    %1704 = vrot.lane.b32.xlu0 %v1522, 120
    %v1705 = vpop.permute.xlu0 %1704
    %1706 = vrot.lane.b32.xlu0 %v1523, 120
    %v1707 = vpop.permute.xlu0 %1706
    %1708 = vrot.lane.b32.xlu0 %v1524, 120
    %v1709 = vpop.permute.xlu0 %1708
    %1710 = vrot.lane.b32.xlu0 %v1527, 120
    %v1711 = vpop.permute.xlu0 %1710
    %1712 = vrot.lane.b32.xlu0 %v1528, 120
    %v1713 = vpop.permute.xlu0 %1712
    %1714 = vrot.lane.b32.xlu0 %v1529, 120
    %v1715 = vpop.permute.xlu0 %1714
    %1716 = vrot.lane.b32.xlu0 %v1530, 120
    %v1717 = vpop.permute.xlu0 %1716
    %1718 = vrot.lane.b32.xlu0 %v1531, 120
    %v1719 = vpop.permute.xlu0 %1718
    %vm1720 = vcmask 982016
    %v1721 = vsel %vm1720, %v1701, %v1703
    %v1722 = vsel %vm1720, %v1703, %v1705
    %v1723 = vsel %vm1720, %v1705, %v1707
    %v1724 = vsel %vm1720, %v1707, %v1709
    %v1725 = vsel %vm1720, %v1711, %v1713
    %v1726 = vsel %vm1720, %v1713, %v1715
    %v1727 = vsel %vm1720, %v1715, %v1717
    %v1728 = vsel %vm1720, %v1717, %v1719
    %1739 = vst [vmem:[#allocation3 + $0x140] sm:$0xff] %v1721
    %1740 = vst [vmem:[#allocation3 + $0x148] sm:$0xff] %v1722
    %1741 = vst [vmem:[#allocation3 + $0x150] sm:$0xff] %v1723
    %1742 = vst [vmem:[#allocation3 + $0x158] sm:$0xff] %v1724
    %1743 = vst.msk [vmem:[#allocation3 + $0x160] sm:$0xff] %vm1538, %v1709
    %1744 = vst [vmem:[#allocation3 + $0x168] sm:$0xff] %v1725
    %1745 = vst [vmem:[#allocation3 + $0x170] sm:$0xff] %v1726
    %1746 = vst [vmem:[#allocation3 + $0x178] sm:$0xff] %v1727
    %1747 = vst [vmem:[#allocation3 + $0x180] sm:$0xff] %v1728
    %1748 = vst.msk [vmem:[#allocation3 + $0x188] sm:$0xff] %vm1538, %v1719
    %1751 = vrot.lane.b32.xlu0 %v1520, 64
    %v1752 = vpop.permute.xlu0 %1751
    %1753 = vrot.lane.b32.xlu0 %v1521, 64
    %v1754 = vpop.permute.xlu0 %1753
    %1755 = vrot.lane.b32.xlu0 %v1522, 64
    %v1756 = vpop.permute.xlu0 %1755
    %1757 = vrot.lane.b32.xlu0 %v1523, 64
    %v1758 = vpop.permute.xlu0 %1757
    %1759 = vrot.lane.b32.xlu0 %v1524, 64
    %v1760 = vpop.permute.xlu0 %1759
    %1761 = vrot.lane.b32.xlu0 %v1525, 64
    %v1762 = vpop.permute.xlu0 %1761
    %1763 = vrot.lane.b32.xlu0 %v1527, 64
    %v1764 = vpop.permute.xlu0 %1763
    %1765 = vrot.lane.b32.xlu0 %v1528, 64
    %v1766 = vpop.permute.xlu0 %1765
    %1767 = vrot.lane.b32.xlu0 %v1529, 64
    %v1768 = vpop.permute.xlu0 %1767
    %1769 = vrot.lane.b32.xlu0 %v1530, 64
    %v1770 = vpop.permute.xlu0 %1769
    %1771 = vrot.lane.b32.xlu0 %v1531, 64
    %v1772 = vpop.permute.xlu0 %1771
    %1773 = vrot.lane.b32.xlu0 %v1532, 64
    %v1774 = vpop.permute.xlu0 %1773
    %v1775 = vsel %vm445, %v1752, %v1754
    %v1776 = vsel %vm445, %v1754, %v1756
    %v1777 = vsel %vm445, %v1756, %v1758
    %v1778 = vsel %vm445, %v1758, %v1760
    %v1779 = vsel %vm445, %v1760, %v1762
    %v1780 = vsel %vm445, %v1764, %v1766
    %v1781 = vsel %vm445, %v1766, %v1768
    %v1782 = vsel %vm445, %v1768, %v1770
    %v1783 = vsel %vm445, %v1770, %v1772
    %v1784 = vsel %vm445, %v1772, %v1774
    %1795 = vst [vmem:[#allocation3 + $0x190] sm:$0xff] %v1775
    %1796 = vst [vmem:[#allocation3 + $0x198] sm:$0xff] %v1776
    %1797 = vst [vmem:[#allocation3 + $0x1a0] sm:$0xff] %v1777
    %1798 = vst [vmem:[#allocation3 + $0x1a8] sm:$0xff] %v1778
    %1799 = vst.msk [vmem:[#allocation3 + $0x1b0] sm:$0xff] %vm1538, %v1779
    %1800 = vst [vmem:[#allocation3 + $0x1b8] sm:$0xff] %v1780
    %1801 = vst [vmem:[#allocation3 + $0x1c0] sm:$0xff] %v1781
    %1802 = vst [vmem:[#allocation3 + $0x1c8] sm:$0xff] %v1782
    %1803 = vst [vmem:[#allocation3 + $0x1d0] sm:$0xff] %v1783
    %1804 = vst.msk [vmem:[#allocation3 + $0x1d8] sm:$0xff] %vm1538, %v1784
    %1805 = vrot.lane.b32.xlu0 %v1520, 62
    %v1806 = vpop.permute.xlu0 %1805
    %1807 = vrot.lane.b32.xlu0 %v1521, 62
    %v1808 = vpop.permute.xlu0 %1807
    %1809 = vrot.lane.b32.xlu0 %v1522, 62
    %v1810 = vpop.permute.xlu0 %1809
    %1811 = vrot.lane.b32.xlu0 %v1523, 62
    %v1812 = vpop.permute.xlu0 %1811
    %1813 = vrot.lane.b32.xlu0 %v1524, 62
    %v1814 = vpop.permute.xlu0 %1813
    %1815 = vrot.lane.b32.xlu0 %v1525, 62
    %v1816 = vpop.permute.xlu0 %1815
    %1817 = vrot.lane.b32.xlu0 %v1527, 62
    %v1818 = vpop.permute.xlu0 %1817
    %1819 = vrot.lane.b32.xlu0 %v1528, 62
    %v1820 = vpop.permute.xlu0 %1819
    %1821 = vrot.lane.b32.xlu0 %v1529, 62
    %v1822 = vpop.permute.xlu0 %1821
    %1823 = vrot.lane.b32.xlu0 %v1530, 62
    %v1824 = vpop.permute.xlu0 %1823
    %1825 = vrot.lane.b32.xlu0 %v1531, 62
    %v1826 = vpop.permute.xlu0 %1825
    %1827 = vrot.lane.b32.xlu0 %v1532, 62
    %v1828 = vpop.permute.xlu0 %1827
    %v1829 = vsel %vm521, %v1806, %v1808
    %v1830 = vsel %vm521, %v1808, %v1810
    %v1831 = vsel %vm521, %v1810, %v1812
    %v1832 = vsel %vm521, %v1812, %v1814
    %v1833 = vsel %vm521, %v1814, %v1816
    %v1834 = vsel %vm521, %v1818, %v1820
    %v1835 = vsel %vm521, %v1820, %v1822
    %v1836 = vsel %vm521, %v1822, %v1824
    %v1837 = vsel %vm521, %v1824, %v1826
    %v1838 = vsel %vm521, %v1826, %v1828
    %1849 = vst [vmem:[#allocation3 + $0x1e0] sm:$0xff] %v1829
    %1850 = vst [vmem:[#allocation3 + $0x1e8] sm:$0xff] %v1830
    %1851 = vst [vmem:[#allocation3 + $0x1f0] sm:$0xff] %v1831
    %1852 = vst [vmem:[#allocation3 + $0x1f8] sm:$0xff] %v1832
    %1853 = vst.msk [vmem:[#allocation3 + $0x200] sm:$0xff] %vm1538, %v1833
    %1854 = vst [vmem:[#allocation3 + $0x208] sm:$0xff] %v1834
    %1855 = vst [vmem:[#allocation3 + $0x210] sm:$0xff] %v1835
    %1856 = vst [vmem:[#allocation3 + $0x218] sm:$0xff] %v1836
    %1857 = vst [vmem:[#allocation3 + $0x220] sm:$0xff] %v1837
    %1858 = vst.msk [vmem:[#allocation3 + $0x228] sm:$0xff] %vm1538, %v1838
    %1859 = vrot.lane.b32.xlu0 %v1520, 60
    %v1860 = vpop.permute.xlu0 %1859
    %1861 = vrot.lane.b32.xlu0 %v1521, 60
    %v1862 = vpop.permute.xlu0 %1861
    %1863 = vrot.lane.b32.xlu0 %v1522, 60
    %v1864 = vpop.permute.xlu0 %1863
    %1865 = vrot.lane.b32.xlu0 %v1523, 60
    %v1866 = vpop.permute.xlu0 %1865
    %1867 = vrot.lane.b32.xlu0 %v1524, 60
    %v1868 = vpop.permute.xlu0 %1867
    %1869 = vrot.lane.b32.xlu0 %v1525, 60
    %v1870 = vpop.permute.xlu0 %1869
    %1871 = vrot.lane.b32.xlu0 %v1527, 60
    %v1872 = vpop.permute.xlu0 %1871
    %1873 = vrot.lane.b32.xlu0 %v1528, 60
    %v1874 = vpop.permute.xlu0 %1873
    %1875 = vrot.lane.b32.xlu0 %v1529, 60
    %v1876 = vpop.permute.xlu0 %1875
    %1877 = vrot.lane.b32.xlu0 %v1530, 60
    %v1878 = vpop.permute.xlu0 %1877
    %1879 = vrot.lane.b32.xlu0 %v1531, 60
    %v1880 = vpop.permute.xlu0 %1879
    %1881 = vrot.lane.b32.xlu0 %v1532, 60
    %v1882 = vpop.permute.xlu0 %1881
    %v1883 = vsel %vm597, %v1860, %v1862
    %v1884 = vsel %vm597, %v1862, %v1864
    %v1885 = vsel %vm597, %v1864, %v1866
    %v1886 = vsel %vm597, %v1866, %v1868
    %v1887 = vsel %vm597, %v1868, %v1870
    %v1888 = vsel %vm597, %v1872, %v1874
    %v1889 = vsel %vm597, %v1874, %v1876
    %v1890 = vsel %vm597, %v1876, %v1878
    %v1891 = vsel %vm597, %v1878, %v1880
    %v1892 = vsel %vm597, %v1880, %v1882
    %1903 = vst [vmem:[#allocation3 + $0x230] sm:$0xff] %v1883
    %1904 = vst [vmem:[#allocation3 + $0x238] sm:$0xff] %v1884
    %1905 = vst [vmem:[#allocation3 + $0x240] sm:$0xff] %v1885
    %1906 = vst [vmem:[#allocation3 + $0x248] sm:$0xff] %v1886
    %1907 = vst.msk [vmem:[#allocation3 + $0x250] sm:$0xff] %vm1538, %v1887
    %1908 = vst [vmem:[#allocation3 + $0x258] sm:$0xff] %v1888
    %1909 = vst [vmem:[#allocation3 + $0x260] sm:$0xff] %v1889
    %1910 = vst [vmem:[#allocation3 + $0x268] sm:$0xff] %v1890
    %1911 = vst [vmem:[#allocation3 + $0x270] sm:$0xff] %v1891
    %1912 = vst.msk [vmem:[#allocation3 + $0x278] sm:$0xff] %vm1538, %v1892
    %1913 = vrot.lane.b32.xlu0 %v1520, 58
    %v1914 = vpop.permute.xlu0 %1913
    %1915 = vrot.lane.b32.xlu0 %v1521, 58
    %v1916 = vpop.permute.xlu0 %1915
    %1917 = vrot.lane.b32.xlu0 %v1522, 58
    %v1918 = vpop.permute.xlu0 %1917
    %1919 = vrot.lane.b32.xlu0 %v1523, 58
    %v1920 = vpop.permute.xlu0 %1919
    %1921 = vrot.lane.b32.xlu0 %v1524, 58
    %v1922 = vpop.permute.xlu0 %1921
    %1923 = vrot.lane.b32.xlu0 %v1525, 58
    %v1924 = vpop.permute.xlu0 %1923
    %1925 = vrot.lane.b32.xlu0 %v1527, 58
    %v1926 = vpop.permute.xlu0 %1925
    %1927 = vrot.lane.b32.xlu0 %v1528, 58
    %v1928 = vpop.permute.xlu0 %1927
    %1929 = vrot.lane.b32.xlu0 %v1529, 58
    %v1930 = vpop.permute.xlu0 %1929
    %1931 = vrot.lane.b32.xlu0 %v1530, 58
    %v1932 = vpop.permute.xlu0 %1931
    %1933 = vrot.lane.b32.xlu0 %v1531, 58
    %v1934 = vpop.permute.xlu0 %1933
    %1935 = vrot.lane.b32.xlu0 %v1532, 58
    %v1936 = vpop.permute.xlu0 %1935
    %vm1937 = vcmask 474112
    %v1938 = vsel %vm1937, %v1914, %v1916
    %v1939 = vsel %vm1937, %v1916, %v1918
    %v1940 = vsel %vm1937, %v1918, %v1920
    %v1941 = vsel %vm1937, %v1920, %v1922
    %v1942 = vsel %vm1937, %v1922, %v1924
    %v1943 = vsel %vm1937, %v1926, %v1928
    %v1944 = vsel %vm1937, %v1928, %v1930
    %v1945 = vsel %vm1937, %v1930, %v1932
    %v1946 = vsel %vm1937, %v1932, %v1934
    %v1947 = vsel %vm1937, %v1934, %v1936
    %1958 = vst [vmem:[#allocation3 + $0x280] sm:$0xff] %v1938
    %1959 = vst [vmem:[#allocation3 + $0x288] sm:$0xff] %v1939
    %1960 = vst [vmem:[#allocation3 + $0x290] sm:$0xff] %v1940
    %1961 = vst [vmem:[#allocation3 + $0x298] sm:$0xff] %v1941
    %1962 = vst.msk [vmem:[#allocation3 + $0x2a0] sm:$0xff] %vm1538, %v1942
    %1963 = vst [vmem:[#allocation3 + $0x2a8] sm:$0xff] %v1943
    %1964 = vst [vmem:[#allocation3 + $0x2b0] sm:$0xff] %v1944
    %1965 = vst [vmem:[#allocation3 + $0x2b8] sm:$0xff] %v1945
    %1966 = vst [vmem:[#allocation3 + $0x2c0] sm:$0xff] %v1946
    %1967 = vst.msk [vmem:[#allocation3 + $0x2c8] sm:$0xff] %vm1538, %v1947
    %1968 = vrot.lane.b32.xlu0 %v1520, 56
    %v1969 = vpop.permute.xlu0 %1968
    %1970 = vrot.lane.b32.xlu0 %v1521, 56
    %v1971 = vpop.permute.xlu0 %1970
    %1972 = vrot.lane.b32.xlu0 %v1522, 56
    %v1973 = vpop.permute.xlu0 %1972
    %1974 = vrot.lane.b32.xlu0 %v1523, 56
    %v1975 = vpop.permute.xlu0 %1974
    %1976 = vrot.lane.b32.xlu0 %v1524, 56
    %v1977 = vpop.permute.xlu0 %1976
    %1978 = vrot.lane.b32.xlu0 %v1525, 56
    %v1979 = vpop.permute.xlu0 %1978
    %1980 = vrot.lane.b32.xlu0 %v1527, 56
    %v1981 = vpop.permute.xlu0 %1980
    %1982 = vrot.lane.b32.xlu0 %v1528, 56
    %v1983 = vpop.permute.xlu0 %1982
    %1984 = vrot.lane.b32.xlu0 %v1529, 56
    %v1985 = vpop.permute.xlu0 %1984
    %1986 = vrot.lane.b32.xlu0 %v1530, 56
    %v1987 = vpop.permute.xlu0 %1986
    %1988 = vrot.lane.b32.xlu0 %v1531, 56
    %v1989 = vpop.permute.xlu0 %1988
    %1990 = vrot.lane.b32.xlu0 %v1532, 56
    %v1991 = vpop.permute.xlu0 %1990
    %vm1992 = vcmask 457728
    %v1993 = vsel %vm1992, %v1969, %v1971
    %v1994 = vsel %vm1992, %v1971, %v1973
    %v1995 = vsel %vm1992, %v1973, %v1975
    %v1996 = vsel %vm1992, %v1975, %v1977
    %v1997 = vsel %vm1992, %v1977, %v1979
    %v1998 = vsel %vm1992, %v1981, %v1983
    %v1999 = vsel %vm1992, %v1983, %v1985
    %v2000 = vsel %vm1992, %v1985, %v1987
    %v2001 = vsel %vm1992, %v1987, %v1989
    %v2002 = vsel %vm1992, %v1989, %v1991
    %2013 = vst [vmem:[#allocation3 + $0x2d0] sm:$0xff] %v1993
    %2014 = vst [vmem:[#allocation3 + $0x2d8] sm:$0xff] %v1994
    %2015 = vst [vmem:[#allocation3 + $0x2e0] sm:$0xff] %v1995
    %2016 = vst [vmem:[#allocation3 + $0x2e8] sm:$0xff] %v1996
    %2017 = vst.msk [vmem:[#allocation3 + $0x2f0] sm:$0xff] %vm1538, %v1997
    %2018 = vst [vmem:[#allocation3 + $0x2f8] sm:$0xff] %v1998
    %2019 = vst [vmem:[#allocation3 + $0x300] sm:$0xff] %v1999
    %2020 = vst [vmem:[#allocation3 + $0x308] sm:$0xff] %v2000
    %2021 = vst [vmem:[#allocation3 + $0x310] sm:$0xff] %v2001
    %2022 = vst.msk [vmem:[#allocation3 + $0x318] sm:$0xff] %vm1538, %v2002
    %2023 = vst [vmem:[#allocation3 + $0x320] sm:$0xff] %v1521
    %2024 = vst [vmem:[#allocation3 + $0x328] sm:$0xff] %v1522
    %2025 = vst [vmem:[#allocation3 + $0x330] sm:$0xff] %v1523
    %2026 = vst [vmem:[#allocation3 + $0x338] sm:$0xff] %v1524
    %2027 = vst.msk [vmem:[#allocation3 + $0x340] sm:$0xff] %vm1538, %v1525
    %2028 = vst [vmem:[#allocation3 + $0x348] sm:$0xff] %v1528
    %2029 = vst [vmem:[#allocation3 + $0x350] sm:$0xff] %v1529
    %2030 = vst [vmem:[#allocation3 + $0x358] sm:$0xff] %v1530
    %2031 = vst [vmem:[#allocation3 + $0x360] sm:$0xff] %v1531
    %2032 = vst.msk [vmem:[#allocation3 + $0x368] sm:$0xff] %vm1538, %v1532
    %2033 = vrot.lane.b32.xlu0 %v1525, 126
    %v2034 = vpop.permute.xlu0 %2033
    %2035 = vrot.lane.b32.xlu0 %v1532, 126
    %v2036 = vpop.permute.xlu0 %2035
    %v2037 = vsel %vm148, %v1564, %v2034
    %v2038 = vsel %vm148, %v1574, %v2036
    %2043 = vst [vmem:[#allocation3 + $0x370] sm:$0xff] %v1576
    %2044 = vst [vmem:[#allocation3 + $0x378] sm:$0xff] %v1577
    %2045 = vst [vmem:[#allocation3 + $0x380] sm:$0xff] %v1578
    %2046 = vst [vmem:[#allocation3 + $0x388] sm:$0xff] %v2037
    %2047 = vst.msk [vmem:[#allocation3 + $0x390] sm:$0xff] %vm1538, %v2034
    %2048 = vst [vmem:[#allocation3 + $0x398] sm:$0xff] %v1580
    %2049 = vst [vmem:[#allocation3 + $0x3a0] sm:$0xff] %v1581
    %2050 = vst [vmem:[#allocation3 + $0x3a8] sm:$0xff] %v1582
    %2051 = vst [vmem:[#allocation3 + $0x3b0] sm:$0xff] %v2038
    %2052 = vst.msk [vmem:[#allocation3 + $0x3b8] sm:$0xff] %vm1538, %v2036
    %2053 = vrot.lane.b32.xlu0 %v1525, 124
    %v2054 = vpop.permute.xlu0 %2053
    %2055 = vrot.lane.b32.xlu0 %v1532, 124
    %v2056 = vpop.permute.xlu0 %2055
    %v2057 = vsel %vm90, %v1612, %v2054
    %v2058 = vsel %vm90, %v1622, %v2056
    %2063 = vst [vmem:[#allocation3 + $0x3c0] sm:$0xff] %v1624
    %2064 = vst [vmem:[#allocation3 + $0x3c8] sm:$0xff] %v1625
    %2065 = vst [vmem:[#allocation3 + $0x3d0] sm:$0xff] %v1626
    %2066 = vst [vmem:[#allocation3 + $0x3d8] sm:$0xff] %v2057
    %2067 = vst.msk [vmem:[#allocation3 + $0x3e0] sm:$0xff] %vm1538, %v2054
    %2068 = vst [vmem:[#allocation3 + $0x3e8] sm:$0xff] %v1628
    %2069 = vst [vmem:[#allocation3 + $0x3f0] sm:$0xff] %v1629
    %2070 = vst [vmem:[#allocation3 + $0x3f8] sm:$0xff] %v1630
    %2071 = vst [vmem:[#allocation3 + $0x400] sm:$0xff] %v2058
    %2072 = vst.msk [vmem:[#allocation3 + $0x408] sm:$0xff] %vm1538, %v2056
    %2073 = vrot.lane.b32.xlu0 %v1525, 122
    %v2074 = vpop.permute.xlu0 %2073
    %2075 = vrot.lane.b32.xlu0 %v1532, 122
    %v2076 = vpop.permute.xlu0 %2075
    %v2077 = vsel %vm1671, %v1660, %v2074
    %v2078 = vsel %vm1671, %v1670, %v2076
    %2083 = vst [vmem:[#allocation3 + $0x410] sm:$0xff] %v1673
    %2084 = vst [vmem:[#allocation3 + $0x418] sm:$0xff] %v1674
    %2085 = vst [vmem:[#allocation3 + $0x420] sm:$0xff] %v1675
    %2086 = vst [vmem:[#allocation3 + $0x428] sm:$0xff] %v2077
    %2087 = vst.msk [vmem:[#allocation3 + $0x430] sm:$0xff] %vm1538, %v2074
    %2088 = vst [vmem:[#allocation3 + $0x438] sm:$0xff] %v1677
    %2089 = vst [vmem:[#allocation3 + $0x440] sm:$0xff] %v1678
    %2090 = vst [vmem:[#allocation3 + $0x448] sm:$0xff] %v1679
    %2091 = vst [vmem:[#allocation3 + $0x450] sm:$0xff] %v2078
    %2092 = vst.msk [vmem:[#allocation3 + $0x458] sm:$0xff] %vm1538, %v2076
    %2093 = vrot.lane.b32.xlu0 %v1525, 120
    %v2094 = vpop.permute.xlu0 %2093
    %2095 = vrot.lane.b32.xlu0 %v1532, 120
    %v2096 = vpop.permute.xlu0 %2095
    %v2097 = vsel %vm1720, %v1709, %v2094
    %v2098 = vsel %vm1720, %v1719, %v2096
    %2103 = vst [vmem:[#allocation3 + $0x460] sm:$0xff] %v1722
    %2104 = vst [vmem:[#allocation3 + $0x468] sm:$0xff] %v1723
    %2105 = vst [vmem:[#allocation3 + $0x470] sm:$0xff] %v1724
    %2106 = vst [vmem:[#allocation3 + $0x478] sm:$0xff] %v2097
    %2107 = vst.msk [vmem:[#allocation3 + $0x480] sm:$0xff] %vm1538, %v2094
    %2108 = vst [vmem:[#allocation3 + $0x488] sm:$0xff] %v1726
    %2109 = vst [vmem:[#allocation3 + $0x490] sm:$0xff] %v1727
    %2110 = vst [vmem:[#allocation3 + $0x498] sm:$0xff] %v1728
    %2111 = vst [vmem:[#allocation3 + $0x4a0] sm:$0xff] %v2098
    %2112 = vst.msk [vmem:[#allocation3 + $0x4a8] sm:$0xff] %vm1538, %v2096
    %2115 = vrot.lane.b32.xlu0 %v1526, 64
    %v2116 = vpop.permute.xlu0 %2115
    %2117 = vrot.lane.b32.xlu0 %v1533, 64
    %v2118 = vpop.permute.xlu0 %2117
    %v2119 = vsel %vm445, %v1762, %v2116
    %v2120 = vsel %vm445, %v1774, %v2118
    %2123 = vst [vmem:[#allocation3 + $0x4b0] sm:$0xff] %v1776
    %2124 = vst [vmem:[#allocation3 + $0x4b8] sm:$0xff] %v1777
    %2125 = vst [vmem:[#allocation3 + $0x4c0] sm:$0xff] %v1778
    %2126 = vst [vmem:[#allocation3 + $0x4c8] sm:$0xff] %v1779
    %2127 = vst.msk [vmem:[#allocation3 + $0x4d0] sm:$0xff] %vm1538, %v2119
    %2128 = vst [vmem:[#allocation3 + $0x4d8] sm:$0xff] %v1781
    %2129 = vst [vmem:[#allocation3 + $0x4e0] sm:$0xff] %v1782
    %2130 = vst [vmem:[#allocation3 + $0x4e8] sm:$0xff] %v1783
    %2131 = vst [vmem:[#allocation3 + $0x4f0] sm:$0xff] %v1784
    %2132 = vst.msk [vmem:[#allocation3 + $0x4f8] sm:$0xff] %vm1538, %v2120
    %2133 = vrot.lane.b32.xlu0 %v1526, 62
    %v2134 = vpop.permute.xlu0 %2133
    %2135 = vrot.lane.b32.xlu0 %v1533, 62
    %v2136 = vpop.permute.xlu0 %2135
    %v2137 = vsel %vm521, %v1816, %v2134
    %v2138 = vsel %vm521, %v1828, %v2136
    %2141 = vst [vmem:[#allocation3 + $0x500] sm:$0xff] %v1830
    %2142 = vst [vmem:[#allocation3 + $0x508] sm:$0xff] %v1831
    %2143 = vst [vmem:[#allocation3 + $0x510] sm:$0xff] %v1832
    %2144 = vst [vmem:[#allocation3 + $0x518] sm:$0xff] %v1833
    %2145 = vst.msk [vmem:[#allocation3 + $0x520] sm:$0xff] %vm1538, %v2137
    %2146 = vst [vmem:[#allocation3 + $0x528] sm:$0xff] %v1835
    %2147 = vst [vmem:[#allocation3 + $0x530] sm:$0xff] %v1836
    %2148 = vst [vmem:[#allocation3 + $0x538] sm:$0xff] %v1837
    %2149 = vst [vmem:[#allocation3 + $0x540] sm:$0xff] %v1838
    %2150 = vst.msk [vmem:[#allocation3 + $0x548] sm:$0xff] %vm1538, %v2138
    %2151 = vrot.lane.b32.xlu0 %v1526, 60
    %v2152 = vpop.permute.xlu0 %2151
    %2153 = vrot.lane.b32.xlu0 %v1533, 60
    %v2154 = vpop.permute.xlu0 %2153
    %v2155 = vsel %vm597, %v1870, %v2152
    %v2156 = vsel %vm597, %v1882, %v2154
    %2159 = vst [vmem:[#allocation3 + $0x550] sm:$0xff] %v1884
    %2160 = vst [vmem:[#allocation3 + $0x558] sm:$0xff] %v1885
    %2161 = vst [vmem:[#allocation3 + $0x560] sm:$0xff] %v1886
    %2162 = vst [vmem:[#allocation3 + $0x568] sm:$0xff] %v1887
    %2163 = vst.msk [vmem:[#allocation3 + $0x570] sm:$0xff] %vm1538, %v2155
    %2164 = vst [vmem:[#allocation3 + $0x578] sm:$0xff] %v1889
    %2165 = vst [vmem:[#allocation3 + $0x580] sm:$0xff] %v1890
    %2166 = vst [vmem:[#allocation3 + $0x588] sm:$0xff] %v1891
    %2167 = vst [vmem:[#allocation3 + $0x590] sm:$0xff] %v1892
    %2168 = vst.msk [vmem:[#allocation3 + $0x598] sm:$0xff] %vm1538, %v2156
    %2169 = vrot.lane.b32.xlu0 %v1526, 58
    %v2170 = vpop.permute.xlu0 %2169
    %2171 = vrot.lane.b32.xlu0 %v1533, 58
    %v2172 = vpop.permute.xlu0 %2171
    %v2173 = vsel %vm1937, %v1924, %v2170
    %v2174 = vsel %vm1937, %v1936, %v2172
    %2177 = vst [vmem:[#allocation3 + $0x5a0] sm:$0xff] %v1939
    %2178 = vst [vmem:[#allocation3 + $0x5a8] sm:$0xff] %v1940
    %2179 = vst [vmem:[#allocation3 + $0x5b0] sm:$0xff] %v1941
    %2180 = vst [vmem:[#allocation3 + $0x5b8] sm:$0xff] %v1942
    %2181 = vst.msk [vmem:[#allocation3 + $0x5c0] sm:$0xff] %vm1538, %v2173
    %2182 = vst [vmem:[#allocation3 + $0x5c8] sm:$0xff] %v1944
    %2183 = vst [vmem:[#allocation3 + $0x5d0] sm:$0xff] %v1945
    %2184 = vst [vmem:[#allocation3 + $0x5d8] sm:$0xff] %v1946
    %2185 = vst [vmem:[#allocation3 + $0x5e0] sm:$0xff] %v1947
    %2186 = vst.msk [vmem:[#allocation3 + $0x5e8] sm:$0xff] %vm1538, %v2174
    %2187 = vrot.lane.b32.xlu0 %v1526, 56
    %v2188 = vpop.permute.xlu0 %2187
    %2189 = vrot.lane.b32.xlu0 %v1533, 56
    %v2190 = vpop.permute.xlu0 %2189
    %v2191 = vsel %vm1992, %v1979, %v2188
    %v2192 = vsel %vm1992, %v1991, %v2190
    %2195 = vst [vmem:[#allocation3 + $0x5f0] sm:$0xff] %v1994
    %2196 = vst [vmem:[#allocation3 + $0x5f8] sm:$0xff] %v1995
    %2197 = vst [vmem:[#allocation3 + $0x600] sm:$0xff] %v1996
    %2198 = vst [vmem:[#allocation3 + $0x608] sm:$0xff] %v1997
    %2199 = vst.msk [vmem:[#allocation3 + $0x610] sm:$0xff] %vm1538, %v2191
    %2200 = vst [vmem:[#allocation3 + $0x618] sm:$0xff] %v1999
    %2201 = vst [vmem:[#allocation3 + $0x620] sm:$0xff] %v2000
    %2202 = vst [vmem:[#allocation3 + $0x628] sm:$0xff] %v2001
    %2203 = vst [vmem:[#allocation3 + $0x630] sm:$0xff] %v2002
    %2204 = vst.msk [vmem:[#allocation3 + $0x638] sm:$0xff] %vm1538, %v2192
    %2205 = vst [vmem:[#allocation3 + $0x640] sm:$0xff] %v1522
    %2206 = vst [vmem:[#allocation3 + $0x648] sm:$0xff] %v1523
    %2207 = vst [vmem:[#allocation3 + $0x650] sm:$0xff] %v1524
    %2208 = vst [vmem:[#allocation3 + $0x658] sm:$0xff] %v1525
    %2209 = vst.msk [vmem:[#allocation3 + $0x660] sm:$0xff] %vm1538, %v1526
    %2210 = vst [vmem:[#allocation3 + $0x668] sm:$0xff] %v1529
    %2211 = vst [vmem:[#allocation3 + $0x670] sm:$0xff] %v1530
    %2212 = vst [vmem:[#allocation3 + $0x678] sm:$0xff] %v1531
    %2213 = vst [vmem:[#allocation3 + $0x680] sm:$0xff] %v1532
    %2214 = vst.msk [vmem:[#allocation3 + $0x688] sm:$0xff] %vm1538, %v1533
    %2215 = vrot.lane.b32.xlu0 %v1526, 126
    %v2216 = vpop.permute.xlu0 %2215
    %2217 = vrot.lane.b32.xlu0 %v1533, 126
    %v2218 = vpop.permute.xlu0 %2217
    %v2219 = vsel %vm148, %v2034, %v2216
    %v2220 = vsel %vm148, %v2036, %v2218
    %2225 = vst [vmem:[#allocation3 + $0x690] sm:$0xff] %v1577
    %2226 = vst [vmem:[#allocation3 + $0x698] sm:$0xff] %v1578
    %2227 = vst [vmem:[#allocation3 + $0x6a0] sm:$0xff] %v2037
    %2228 = vst [vmem:[#allocation3 + $0x6a8] sm:$0xff] %v2219
    %2229 = vst.msk [vmem:[#allocation3 + $0x6b0] sm:$0xff] %vm1538, %v2216
    %2230 = vst [vmem:[#allocation3 + $0x6b8] sm:$0xff] %v1581
    %2231 = vst [vmem:[#allocation3 + $0x6c0] sm:$0xff] %v1582
    %2232 = vst [vmem:[#allocation3 + $0x6c8] sm:$0xff] %v2038
    %2233 = vst [vmem:[#allocation3 + $0x6d0] sm:$0xff] %v2220
    %2234 = vst.msk [vmem:[#allocation3 + $0x6d8] sm:$0xff] %vm1538, %v2218
    %2235 = vrot.lane.b32.xlu0 %v1526, 124
    %v2236 = vpop.permute.xlu0 %2235
    %2237 = vrot.lane.b32.xlu0 %v1533, 124
    %v2238 = vpop.permute.xlu0 %2237
    %v2239 = vsel %vm90, %v2054, %v2236
    %v2240 = vsel %vm90, %v2056, %v2238
    %2245 = vst [vmem:[#allocation3 + $0x6e0] sm:$0xff] %v1625
    %2246 = vst [vmem:[#allocation3 + $0x6e8] sm:$0xff] %v1626
    %2247 = vst [vmem:[#allocation3 + $0x6f0] sm:$0xff] %v2057
    %2248 = vst [vmem:[#allocation3 + $0x6f8] sm:$0xff] %v2239
    %2249 = vst.msk [vmem:[#allocation3 + $0x700] sm:$0xff] %vm1538, %v2236
    %2250 = vst [vmem:[#allocation3 + $0x708] sm:$0xff] %v1629
    %2251 = vst [vmem:[#allocation3 + $0x710] sm:$0xff] %v1630
    %2252 = vst [vmem:[#allocation3 + $0x718] sm:$0xff] %v2058
    %2253 = vst [vmem:[#allocation3 + $0x720] sm:$0xff] %v2240
    %2254 = vst.msk [vmem:[#allocation3 + $0x728] sm:$0xff] %vm1538, %v2238
    %2255 = vrot.lane.b32.xlu0 %v1526, 122
    %v2256 = vpop.permute.xlu0 %2255
    %2257 = vrot.lane.b32.xlu0 %v1533, 122
    %v2258 = vpop.permute.xlu0 %2257
    %v2259 = vsel %vm1671, %v2074, %v2256
    %v2260 = vsel %vm1671, %v2076, %v2258
    %2265 = vst [vmem:[#allocation3 + $0x730] sm:$0xff] %v1674
    %2266 = vst [vmem:[#allocation3 + $0x738] sm:$0xff] %v1675
    %2267 = vst [vmem:[#allocation3 + $0x740] sm:$0xff] %v2077
    %2268 = vst [vmem:[#allocation3 + $0x748] sm:$0xff] %v2259
    %2269 = vst.msk [vmem:[#allocation3 + $0x750] sm:$0xff] %vm1538, %v2256
    %2270 = vst [vmem:[#allocation3 + $0x758] sm:$0xff] %v1678
    %2271 = vst [vmem:[#allocation3 + $0x760] sm:$0xff] %v1679
    %2272 = vst [vmem:[#allocation3 + $0x768] sm:$0xff] %v2078
    %2273 = vst [vmem:[#allocation3 + $0x770] sm:$0xff] %v2260
    %2274 = vst.msk [vmem:[#allocation3 + $0x778] sm:$0xff] %vm1538, %v2258
    %2275 = vrot.lane.b32.xlu0 %v1526, 120
    %v2276 = vpop.permute.xlu0 %2275
    %2277 = vrot.lane.b32.xlu0 %v1533, 120
    %v2278 = vpop.permute.xlu0 %2277
    %v2279 = vsel %vm1720, %v2094, %v2276
    %v2280 = vsel %vm1720, %v2096, %v2278
    %2285 = vst [vmem:[#allocation3 + $0x780] sm:$0xff] %v1723
    %2286 = vst [vmem:[#allocation3 + $0x788] sm:$0xff] %v1724
    %2287 = vst [vmem:[#allocation3 + $0x790] sm:$0xff] %v2097
    %2288 = vst [vmem:[#allocation3 + $0x798] sm:$0xff] %v2279
    %2289 = vst.msk [vmem:[#allocation3 + $0x7a0] sm:$0xff] %vm1538, %v2276
    %2290 = vst [vmem:[#allocation3 + $0x7a8] sm:$0xff] %v1727
    %2291 = vst [vmem:[#allocation3 + $0x7b0] sm:$0xff] %v1728
    %2292 = vst [vmem:[#allocation3 + $0x7b8] sm:$0xff] %v2098
    %2293 = vst [vmem:[#allocation3 + $0x7c0] sm:$0xff] %v2280
    %2294 = vst.msk [vmem:[#allocation3 + $0x7c8] sm:$0xff] %vm1538, %v2278
    %v2295 = vld [vmem:[#allocation7] sm:$0xff]
    %v2296 = vld [vmem:[#allocation7 + $0x8] sm:$0xff]
    %v2297 = vld [vmem:[#allocation7 + $0x10] sm:$0xff]
    %v2298 = vld [vmem:[#allocation7 + $0x18] sm:$0xff]
    %v2299 = vld [vmem:[#allocation7 + $0x20] sm:$0xff]
    %v2300 = vld [vmem:[#allocation7 + $0x28] sm:$0xff]
    %v2301 = vld [vmem:[#allocation7 + $0x30] sm:$0xff]
    %v2302 = vld [vmem:[#allocation7 + $0x38] sm:$0xff]
    %v2303 = vld [vmem:[#allocation7 + $0x40] sm:$0xff]
    %v2304 = vld [vmem:[#allocation7 + $0x48] sm:$0xff]
    %v2305 = vld [vmem:[#allocation7 + $0x50] sm:$0xff]
    %v2306 = vld [vmem:[#allocation7 + $0x58] sm:$0xff]
    %v2307 = vld [vmem:[#allocation7 + $0x60] sm:$0xff]
    %v2308 = vld [vmem:[#allocation7 + $0x68] sm:$0xff]
    %v2309 = vld [vmem:[#allocation7 + $0x70] sm:$0xff]
    %v2310 = vld [vmem:[#allocation7 + $0x78] sm:$0xff]
    %v2311 = vld [vmem:[#allocation3] sm:$0xff]
    %v2312 = vld [vmem:[#allocation3 + $0x8] sm:$0xff]
    %v2313 = vld [vmem:[#allocation3 + $0x10] sm:$0xff]
    %v2314 = vld [vmem:[#allocation3 + $0x18] sm:$0xff]
    %v2315 = vld [vmem:[#allocation3 + $0x20] sm:$0xff]
    %v2316 = vld [vmem:[#allocation3 + $0x28] sm:$0xff]
    %v2317 = vld [vmem:[#allocation3 + $0x30] sm:$0xff]
    %v2318 = vld [vmem:[#allocation3 + $0x38] sm:$0xff]
    %v2319 = vld [vmem:[#allocation3 + $0x40] sm:$0xff]
    %v2320 = vld [vmem:[#allocation3 + $0x48] sm:$0xff]
    %v2321 = vld [vmem:[#allocation3 + $0x50] sm:$0xff]
    %v2322 = vld [vmem:[#allocation3 + $0x58] sm:$0xff]
    %v2323 = vld [vmem:[#allocation3 + $0x60] sm:$0xff]
    %v2324 = vld [vmem:[#allocation3 + $0x68] sm:$0xff]
    %v2325 = vld [vmem:[#allocation3 + $0x70] sm:$0xff]
    %v2326 = vld [vmem:[#allocation3 + $0x78] sm:$0xff]
    %v2327 = vld [vmem:[#allocation3 + $0x80] sm:$0xff]
    %v2328 = vld [vmem:[#allocation3 + $0x88] sm:$0xff]
    %v2329 = vld [vmem:[#allocation3 + $0x90] sm:$0xff]
    %v2330 = vld [vmem:[#allocation3 + $0x98] sm:$0xff]
    %v2331 = vld [vmem:[#allocation3 + $0xa0] sm:$0xff]
    %v2332 = vld [vmem:[#allocation3 + $0xa8] sm:$0xff]
    %v2333 = vld [vmem:[#allocation3 + $0xb0] sm:$0xff]
    %v2334 = vld [vmem:[#allocation3 + $0xb8] sm:$0xff]
    %v2335 = vld [vmem:[#allocation3 + $0xc0] sm:$0xff]
    %v2336 = vld [vmem:[#allocation3 + $0xc8] sm:$0xff]
    %v2337 = vld [vmem:[#allocation3 + $0xd0] sm:$0xff]
    %v2338 = vld [vmem:[#allocation3 + $0xd8] sm:$0xff]
    %v2339 = vld [vmem:[#allocation3 + $0xe0] sm:$0xff]
    %v2340 = vld [vmem:[#allocation3 + $0xe8] sm:$0xff]
    %v2341 = vld [vmem:[#allocation3 + $0xf0] sm:$0xff]
    %v2342 = vld [vmem:[#allocation3 + $0xf8] sm:$0xff]
    %v2343 = vld [vmem:[#allocation3 + $0x100] sm:$0xff]
    %v2344 = vld [vmem:[#allocation3 + $0x108] sm:$0xff]
    %v2345 = vld [vmem:[#allocation3 + $0x110] sm:$0xff]
    %v2346 = vld [vmem:[#allocation3 + $0x118] sm:$0xff]
    %v2347 = vld [vmem:[#allocation3 + $0x120] sm:$0xff]
    %v2348 = vld [vmem:[#allocation3 + $0x128] sm:$0xff]
    %v2349 = vld [vmem:[#allocation3 + $0x130] sm:$0xff]
    %v2350 = vld [vmem:[#allocation3 + $0x138] sm:$0xff]
    %v2351 = vld [vmem:[#allocation3 + $0x140] sm:$0xff]
    %v2352 = vld [vmem:[#allocation3 + $0x148] sm:$0xff]
    %v2353 = vld [vmem:[#allocation3 + $0x150] sm:$0xff]
    %v2354 = vld [vmem:[#allocation3 + $0x158] sm:$0xff]
    %v2355 = vld [vmem:[#allocation3 + $0x160] sm:$0xff]
    %v2356 = vld [vmem:[#allocation3 + $0x168] sm:$0xff]
    %v2357 = vld [vmem:[#allocation3 + $0x170] sm:$0xff]
    %v2358 = vld [vmem:[#allocation3 + $0x178] sm:$0xff]
    %v2359 = vld [vmem:[#allocation3 + $0x180] sm:$0xff]
    %v2360 = vld [vmem:[#allocation3 + $0x188] sm:$0xff]
    %v2361 = vld [vmem:[#allocation3 + $0x190] sm:$0xff]
    %v2362 = vld [vmem:[#allocation3 + $0x198] sm:$0xff]
    %v2363 = vld [vmem:[#allocation3 + $0x1a0] sm:$0xff]
    %v2364 = vld [vmem:[#allocation3 + $0x1a8] sm:$0xff]
    %v2365 = vld [vmem:[#allocation3 + $0x1b0] sm:$0xff]
    %v2366 = vld [vmem:[#allocation3 + $0x1b8] sm:$0xff]
    %v2367 = vld [vmem:[#allocation3 + $0x1c0] sm:$0xff]
    %v2368 = vld [vmem:[#allocation3 + $0x1c8] sm:$0xff]
    %v2369 = vld [vmem:[#allocation3 + $0x1d0] sm:$0xff]
    %v2370 = vld [vmem:[#allocation3 + $0x1d8] sm:$0xff]
    %v2371 = vld [vmem:[#allocation3 + $0x1e0] sm:$0xff]
    %v2372 = vld [vmem:[#allocation3 + $0x1e8] sm:$0xff]
    %v2373 = vld [vmem:[#allocation3 + $0x1f0] sm:$0xff]
    %v2374 = vld [vmem:[#allocation3 + $0x1f8] sm:$0xff]
    %v2375 = vld [vmem:[#allocation3 + $0x200] sm:$0xff]
    %v2376 = vld [vmem:[#allocation3 + $0x208] sm:$0xff]
    %v2377 = vld [vmem:[#allocation3 + $0x210] sm:$0xff]
    %v2378 = vld [vmem:[#allocation3 + $0x218] sm:$0xff]
    %v2379 = vld [vmem:[#allocation3 + $0x220] sm:$0xff]
    %v2380 = vld [vmem:[#allocation3 + $0x228] sm:$0xff]
    %v2381 = vld [vmem:[#allocation3 + $0x230] sm:$0xff]
    %v2382 = vld [vmem:[#allocation3 + $0x238] sm:$0xff]
    %v2383 = vld [vmem:[#allocation3 + $0x240] sm:$0xff]
    %v2384 = vld [vmem:[#allocation3 + $0x248] sm:$0xff]
    %v2385 = vld [vmem:[#allocation3 + $0x250] sm:$0xff]
    %v2386 = vld [vmem:[#allocation3 + $0x258] sm:$0xff]
    %v2387 = vld [vmem:[#allocation3 + $0x260] sm:$0xff]
    %v2388 = vld [vmem:[#allocation3 + $0x268] sm:$0xff]
    %v2389 = vld [vmem:[#allocation3 + $0x270] sm:$0xff]
    %v2390 = vld [vmem:[#allocation3 + $0x278] sm:$0xff]
    %v2391 = vld [vmem:[#allocation3 + $0x280] sm:$0xff]
    %v2392 = vld [vmem:[#allocation3 + $0x288] sm:$0xff]
    %v2393 = vld [vmem:[#allocation3 + $0x290] sm:$0xff]
    %v2394 = vld [vmem:[#allocation3 + $0x298] sm:$0xff]
    %v2395 = vld [vmem:[#allocation3 + $0x2a0] sm:$0xff]
    %v2396 = vld [vmem:[#allocation3 + $0x2a8] sm:$0xff]
    %v2397 = vld [vmem:[#allocation3 + $0x2b0] sm:$0xff]
    %v2398 = vld [vmem:[#allocation3 + $0x2b8] sm:$0xff]
    %v2399 = vld [vmem:[#allocation3 + $0x2c0] sm:$0xff]
    %v2400 = vld [vmem:[#allocation3 + $0x2c8] sm:$0xff]
    %v2401 = vld [vmem:[#allocation3 + $0x2d0] sm:$0xff]
    %v2402 = vld [vmem:[#allocation3 + $0x2d8] sm:$0xff]
    %v2403 = vld [vmem:[#allocation3 + $0x2e0] sm:$0xff]
    %v2404 = vld [vmem:[#allocation3 + $0x2e8] sm:$0xff]
    %v2405 = vld [vmem:[#allocation3 + $0x2f0] sm:$0xff]
    %v2406 = vld [vmem:[#allocation3 + $0x2f8] sm:$0xff]
    %v2407 = vld [vmem:[#allocation3 + $0x300] sm:$0xff]
    %v2408 = vld [vmem:[#allocation3 + $0x308] sm:$0xff]
    %v2409 = vld [vmem:[#allocation3 + $0x310] sm:$0xff]
    %v2410 = vld [vmem:[#allocation3 + $0x318] sm:$0xff]
    %v2411 = vld [vmem:[#allocation3 + $0x320] sm:$0xff]
    %v2412 = vld [vmem:[#allocation3 + $0x328] sm:$0xff]
    %v2413 = vld [vmem:[#allocation3 + $0x330] sm:$0xff]
    %v2414 = vld [vmem:[#allocation3 + $0x338] sm:$0xff]
    %v2415 = vld [vmem:[#allocation3 + $0x340] sm:$0xff]
    %v2416 = vld [vmem:[#allocation3 + $0x348] sm:$0xff]
    %v2417 = vld [vmem:[#allocation3 + $0x350] sm:$0xff]
    %v2418 = vld [vmem:[#allocation3 + $0x358] sm:$0xff]
    %v2419 = vld [vmem:[#allocation3 + $0x360] sm:$0xff]
    %v2420 = vld [vmem:[#allocation3 + $0x368] sm:$0xff]
    %v2421 = vld [vmem:[#allocation3 + $0x370] sm:$0xff]
    %v2422 = vld [vmem:[#allocation3 + $0x378] sm:$0xff]
    %v2423 = vld [vmem:[#allocation3 + $0x380] sm:$0xff]
    %v2424 = vld [vmem:[#allocation3 + $0x388] sm:$0xff]
    %v2425 = vld [vmem:[#allocation3 + $0x390] sm:$0xff]
    %v2426 = vld [vmem:[#allocation3 + $0x398] sm:$0xff]
    %v2427 = vld [vmem:[#allocation3 + $0x3a0] sm:$0xff]
    %v2428 = vld [vmem:[#allocation3 + $0x3a8] sm:$0xff]
    %v2429 = vld [vmem:[#allocation3 + $0x3b0] sm:$0xff]
    %v2430 = vld [vmem:[#allocation3 + $0x3b8] sm:$0xff]
    %v2431 = vld [vmem:[#allocation3 + $0x3c0] sm:$0xff]
    %v2432 = vld [vmem:[#allocation3 + $0x3c8] sm:$0xff]
    %v2433 = vld [vmem:[#allocation3 + $0x3d0] sm:$0xff]
    %v2434 = vld [vmem:[#allocation3 + $0x3d8] sm:$0xff]
    %v2435 = vld [vmem:[#allocation3 + $0x3e0] sm:$0xff]
    %v2436 = vld [vmem:[#allocation3 + $0x3e8] sm:$0xff]
    %v2437 = vld [vmem:[#allocation3 + $0x3f0] sm:$0xff]
    %v2438 = vld [vmem:[#allocation3 + $0x3f8] sm:$0xff]
    %v2439 = vld [vmem:[#allocation3 + $0x400] sm:$0xff]
    %v2440 = vld [vmem:[#allocation3 + $0x408] sm:$0xff]
    %v2441 = vld [vmem:[#allocation3 + $0x410] sm:$0xff]
    %v2442 = vld [vmem:[#allocation3 + $0x418] sm:$0xff]
    %v2443 = vld [vmem:[#allocation3 + $0x420] sm:$0xff]
    %v2444 = vld [vmem:[#allocation3 + $0x428] sm:$0xff]
    %v2445 = vld [vmem:[#allocation3 + $0x430] sm:$0xff]
    %v2446 = vld [vmem:[#allocation3 + $0x438] sm:$0xff]
    %v2447 = vld [vmem:[#allocation3 + $0x440] sm:$0xff]
    %v2448 = vld [vmem:[#allocation3 + $0x448] sm:$0xff]
    %v2449 = vld [vmem:[#allocation3 + $0x450] sm:$0xff]
    %v2450 = vld [vmem:[#allocation3 + $0x458] sm:$0xff]
    %v2451 = vld [vmem:[#allocation3 + $0x460] sm:$0xff]
    %v2452 = vld [vmem:[#allocation3 + $0x468] sm:$0xff]
    %v2453 = vld [vmem:[#allocation3 + $0x470] sm:$0xff]
    %v2454 = vld [vmem:[#allocation3 + $0x478] sm:$0xff]
    %v2455 = vld [vmem:[#allocation3 + $0x480] sm:$0xff]
    %v2456 = vld [vmem:[#allocation3 + $0x488] sm:$0xff]
    %v2457 = vld [vmem:[#allocation3 + $0x490] sm:$0xff]
    %v2458 = vld [vmem:[#allocation3 + $0x498] sm:$0xff]
    %v2459 = vld [vmem:[#allocation3 + $0x4a0] sm:$0xff]
    %v2460 = vld [vmem:[#allocation3 + $0x4a8] sm:$0xff]
    %v2461 = vld [vmem:[#allocation3 + $0x4b0] sm:$0xff]
    %v2462 = vld [vmem:[#allocation3 + $0x4b8] sm:$0xff]
    %v2463 = vld [vmem:[#allocation3 + $0x4c0] sm:$0xff]
    %v2464 = vld [vmem:[#allocation3 + $0x4c8] sm:$0xff]
    %v2465 = vld [vmem:[#allocation3 + $0x4d0] sm:$0xff]
    %v2466 = vld [vmem:[#allocation3 + $0x4d8] sm:$0xff]
    %v2467 = vld [vmem:[#allocation3 + $0x4e0] sm:$0xff]
    %v2468 = vld [vmem:[#allocation3 + $0x4e8] sm:$0xff]
    %v2469 = vld [vmem:[#allocation3 + $0x4f0] sm:$0xff]
    %v2470 = vld [vmem:[#allocation3 + $0x4f8] sm:$0xff]
    %v2471 = vld [vmem:[#allocation3 + $0x500] sm:$0xff]
    %v2472 = vld [vmem:[#allocation3 + $0x508] sm:$0xff]
    %v2473 = vld [vmem:[#allocation3 + $0x510] sm:$0xff]
    %v2474 = vld [vmem:[#allocation3 + $0x518] sm:$0xff]
    %v2475 = vld [vmem:[#allocation3 + $0x520] sm:$0xff]
    %v2476 = vld [vmem:[#allocation3 + $0x528] sm:$0xff]
    %v2477 = vld [vmem:[#allocation3 + $0x530] sm:$0xff]
    %v2478 = vld [vmem:[#allocation3 + $0x538] sm:$0xff]
    %v2479 = vld [vmem:[#allocation3 + $0x540] sm:$0xff]
    %v2480 = vld [vmem:[#allocation3 + $0x548] sm:$0xff]
    %v2481 = vld [vmem:[#allocation3 + $0x550] sm:$0xff]
    %v2482 = vld [vmem:[#allocation3 + $0x558] sm:$0xff]
    %v2483 = vld [vmem:[#allocation3 + $0x560] sm:$0xff]
    %v2484 = vld [vmem:[#allocation3 + $0x568] sm:$0xff]
    %v2485 = vld [vmem:[#allocation3 + $0x570] sm:$0xff]
    %v2486 = vld [vmem:[#allocation3 + $0x578] sm:$0xff]
    %v2487 = vld [vmem:[#allocation3 + $0x580] sm:$0xff]
    %v2488 = vld [vmem:[#allocation3 + $0x588] sm:$0xff]
    %v2489 = vld [vmem:[#allocation3 + $0x590] sm:$0xff]
    %v2490 = vld [vmem:[#allocation3 + $0x598] sm:$0xff]
    %v2491 = vld [vmem:[#allocation3 + $0x5a0] sm:$0xff]
    %v2492 = vld [vmem:[#allocation3 + $0x5a8] sm:$0xff]
    %v2493 = vld [vmem:[#allocation3 + $0x5b0] sm:$0xff]
    %v2494 = vld [vmem:[#allocation3 + $0x5b8] sm:$0xff]
    %v2495 = vld [vmem:[#allocation3 + $0x5c0] sm:$0xff]
    %v2496 = vld [vmem:[#allocation3 + $0x5c8] sm:$0xff]
    %v2497 = vld [vmem:[#allocation3 + $0x5d0] sm:$0xff]
    %v2498 = vld [vmem:[#allocation3 + $0x5d8] sm:$0xff]
    %v2499 = vld [vmem:[#allocation3 + $0x5e0] sm:$0xff]
    %v2500 = vld [vmem:[#allocation3 + $0x5e8] sm:$0xff]
    %v2501 = vld [vmem:[#allocation3 + $0x5f0] sm:$0xff]
    %v2502 = vld [vmem:[#allocation3 + $0x5f8] sm:$0xff]
    %v2503 = vld [vmem:[#allocation3 + $0x600] sm:$0xff]
    %v2504 = vld [vmem:[#allocation3 + $0x608] sm:$0xff]
    %v2505 = vld [vmem:[#allocation3 + $0x610] sm:$0xff]
    %v2506 = vld [vmem:[#allocation3 + $0x618] sm:$0xff]
    %v2507 = vld [vmem:[#allocation3 + $0x620] sm:$0xff]
    %v2508 = vld [vmem:[#allocation3 + $0x628] sm:$0xff]
    %v2509 = vld [vmem:[#allocation3 + $0x630] sm:$0xff]
    %v2510 = vld [vmem:[#allocation3 + $0x638] sm:$0xff]
    %v2511 = vld [vmem:[#allocation3 + $0x640] sm:$0xff]
    %v2512 = vld [vmem:[#allocation3 + $0x648] sm:$0xff]
    %v2513 = vld [vmem:[#allocation3 + $0x650] sm:$0xff]
    %v2514 = vld [vmem:[#allocation3 + $0x658] sm:$0xff]
    %v2515 = vld [vmem:[#allocation3 + $0x660] sm:$0xff]
    %v2516 = vld [vmem:[#allocation3 + $0x668] sm:$0xff]
    %v2517 = vld [vmem:[#allocation3 + $0x670] sm:$0xff]
    %v2518 = vld [vmem:[#allocation3 + $0x678] sm:$0xff]
    %v2519 = vld [vmem:[#allocation3 + $0x680] sm:$0xff]
    %v2520 = vld [vmem:[#allocation3 + $0x688] sm:$0xff]
    %v2521 = vld [vmem:[#allocation3 + $0x690] sm:$0xff]
    %v2522 = vld [vmem:[#allocation3 + $0x698] sm:$0xff]
    %v2523 = vld [vmem:[#allocation3 + $0x6a0] sm:$0xff]
    %v2524 = vld [vmem:[#allocation3 + $0x6a8] sm:$0xff]
    %v2525 = vld [vmem:[#allocation3 + $0x6b0] sm:$0xff]
    %v2526 = vld [vmem:[#allocation3 + $0x6b8] sm:$0xff]
    %v2527 = vld [vmem:[#allocation3 + $0x6c0] sm:$0xff]
    %v2528 = vld [vmem:[#allocation3 + $0x6c8] sm:$0xff]
    %v2529 = vld [vmem:[#allocation3 + $0x6d0] sm:$0xff]
    %v2530 = vld [vmem:[#allocation3 + $0x6d8] sm:$0xff]
    %v2531 = vld [vmem:[#allocation3 + $0x6e0] sm:$0xff]
    %v2532 = vld [vmem:[#allocation3 + $0x6e8] sm:$0xff]
    %v2533 = vld [vmem:[#allocation3 + $0x6f0] sm:$0xff]
    %v2534 = vld [vmem:[#allocation3 + $0x6f8] sm:$0xff]
    %v2535 = vld [vmem:[#allocation3 + $0x700] sm:$0xff]
    %v2536 = vld [vmem:[#allocation3 + $0x708] sm:$0xff]
    %v2537 = vld [vmem:[#allocation3 + $0x710] sm:$0xff]
    %v2538 = vld [vmem:[#allocation3 + $0x718] sm:$0xff]
    %v2539 = vld [vmem:[#allocation3 + $0x720] sm:$0xff]
    %v2540 = vld [vmem:[#allocation3 + $0x728] sm:$0xff]
    %v2541 = vld [vmem:[#allocation3 + $0x730] sm:$0xff]
    %v2542 = vld [vmem:[#allocation3 + $0x738] sm:$0xff]
    %v2543 = vld [vmem:[#allocation3 + $0x740] sm:$0xff]
    %v2544 = vld [vmem:[#allocation3 + $0x748] sm:$0xff]
    %v2545 = vld [vmem:[#allocation3 + $0x750] sm:$0xff]
    %v2546 = vld [vmem:[#allocation3 + $0x758] sm:$0xff]
    %v2547 = vld [vmem:[#allocation3 + $0x760] sm:$0xff]
    %v2548 = vld [vmem:[#allocation3 + $0x768] sm:$0xff]
    %v2549 = vld [vmem:[#allocation3 + $0x770] sm:$0xff]
    %v2550 = vld [vmem:[#allocation3 + $0x778] sm:$0xff]
    %v2551 = vld [vmem:[#allocation3 + $0x780] sm:$0xff]
    %v2552 = vld [vmem:[#allocation3 + $0x788] sm:$0xff]
    %v2553 = vld [vmem:[#allocation3 + $0x790] sm:$0xff]
    %v2554 = vld [vmem:[#allocation3 + $0x798] sm:$0xff]
    %v2555 = vld [vmem:[#allocation3 + $0x7a0] sm:$0xff]
    %v2556 = vld [vmem:[#allocation3 + $0x7a8] sm:$0xff]
    %v2557 = vld [vmem:[#allocation3 + $0x7b0] sm:$0xff]
    %v2558 = vld [vmem:[#allocation3 + $0x7b8] sm:$0xff]
    %v2559 = vld [vmem:[#allocation3 + $0x7c0] sm:$0xff]
    %v2560 = vld [vmem:[#allocation3 + $0x7c8] sm:$0xff]
    %vm2561 = vcmask 130048
    %v2563 = vsel %vm2561, %v2298, 0
    %v2566 = vsel %vm2561, %v2302, 0
    %v2569 = vsel %vm2561, %v2306, 0
    %v2572 = vsel %vm2561, %v2310, 0
    %2574 = vmatprep.subr.mxu0 %v2312
    %2575 = vmatpush1.msra.mxu0 %v2311
    %2576 = vmatprep.subr.mxu0 %v2317
    %2577 = vmatpush1.msra.mxu0 %v2316
    %2578 = vmatprep.subr.mxu0 %v2322
    %2579 = vmatpush1.msra.mxu0 %v2321
    %2580 = vmatprep.subr.mxu0 %v2327
    %2581 = vmatpush1.msra.mxu0 %v2326
    %2582 = vmatprep.subr.mxu0 %v2332
    %2583 = vmatpush1.msra.mxu0 %v2331
    %2584 = vmatprep.subr.mxu0 %v2337
    %2585 = vmatpush1.msra.mxu0 %v2336
    %2586 = vmatprep.subr.mxu0 %v2342
    %2587 = vmatpush1.msra.mxu0 %v2341
    %2588 = vmatprep.subr.mxu0 %v2347
    %2589 = vmatpush1.msra.mxu0 %v2346
    %2590 = vmatprep.subr.mxu0 %v2352
    %2591 = vmatpush1.msra.mxu0 %v2351
    %2592 = vmatprep.subr.mxu0 %v2357
    %2593 = vmatpush1.msra.mxu0 %v2356
    %2594 = vmatprep.subr.mxu0 %v2362
    %2595 = vmatpush1.msra.mxu0 %v2361
    %2596 = vmatprep.subr.mxu0 %v2367
    %2597 = vmatpush1.msra.mxu0 %v2366
    %2598 = vmatprep.subr.mxu0 %v2372
    %2599 = vmatpush1.msra.mxu0 %v2371
    %2600 = vmatprep.subr.mxu0 %v2377
    %2601 = vmatpush1.msra.mxu0 %v2376
    %2602 = vmatprep.subr.mxu0 %v2382
    %2603 = vmatpush1.msra.mxu0 %v2381
    %2604 = vmatprep.subr.mxu0 %v2387
    %2605 = vmatpush1.msra.mxu0 %v2386
    %2606 = vmatprep.subr.mxu0 %v2392
    %2607 = vmatpush1.msra.mxu0 %v2391
    %2608 = vmatprep.subr.mxu0 %v2397
    %2609 = vmatpush1.msra.mxu0 %v2396
    %2610 = vmatprep.subr.mxu0 %v2402
    %2611 = vmatpush1.msra.mxu0 %v2401
    %2612 = vmatprep.subr.mxu0 %v2407
    %2613 = vmatpush1.msra.mxu0 %v2406
    %2614 = vmatprep.subr.mxu0 %v2412
    %2615 = vmatpush1.msra.mxu0 %v2411
    %2616 = vmatprep.subr.mxu0 %v2417
    %2617 = vmatpush1.msra.mxu0 %v2416
    %2618 = vmatprep.subr.mxu0 %v2422
    %2619 = vmatpush1.msra.mxu0 %v2421
    %2620 = vmatprep.subr.mxu0 %v2427
    %2621 = vmatpush1.msra.mxu0 %v2426
    %2622 = vmatprep.subr.mxu0 %v2432
    %2623 = vmatpush1.msra.mxu0 %v2431
    %2624 = vmatprep.subr.mxu0 %v2437
    %2625 = vmatpush1.msra.mxu0 %v2436
    %2626 = vmatprep.subr.mxu0 %v2442
    %2627 = vmatpush1.msra.mxu0 %v2441
    %2628 = vmatprep.subr.mxu0 %v2447
    %2629 = vmatpush1.msra.mxu0 %v2446
    %2630 = vmatprep.subr.mxu0 %v2452
    %2631 = vmatpush1.msra.mxu0 %v2451
    %2632 = vmatprep.subr.mxu0 %v2457
    %2633 = vmatpush1.msra.mxu0 %v2456
    %2634 = vmatprep.subr.mxu0 %v2462
    %2635 = vmatpush1.msra.mxu0 %v2461
    %2636 = vmatprep.subr.mxu0 %v2467
    %2637 = vmatpush1.msra.mxu0 %v2466
    %2638 = vmatprep.mubr.f32.mxu0 %v2296
    %2639 = vmatmul.mubr.f32.gmra.mrb[0].mxu0 %v2295
    %v2640 = vpop.f32.mrb[0].mxu0
    %v2641 = vadd.f32 0.0, %v2640
    %v2642 = vpop.f32.mrb[0].mxu0
    %v2643 = vadd.f32 0.0, %v2642
    %2644 = vmatprep.mubr.f32.mxu0 %v2300
    %2645 = vmatmul.mubr.f32.gmra.mrb[0].mxu0 %v2299
    %v2646 = vpop.f32.mrb[0].mxu0
    %v2647 = vadd.f32 0.0, %v2646
    %v2648 = vpop.f32.mrb[0].mxu0
    %v2649 = vadd.f32 0.0, %v2648
    %2650 = vmatprep.mubr.f32.mxu0 %v2304
    %2651 = vmatmul.mubr.f32.gmra.mrb[0].mxu0 %v2303
    %v2652 = vpop.f32.mrb[0].mxu0
    %v2653 = vadd.f32 0.0, %v2652
    %v2654 = vpop.f32.mrb[0].mxu0
    %v2655 = vadd.f32 0.0, %v2654
    %2656 = vmatprep.mubr.f32.mxu0 %v2308
    %2657 = vmatmul.mubr.f32.gmra.mrb[0].mxu0 %v2307
    %v2658 = vpop.f32.mrb[0].mxu0
    %v2659 = vadd.f32 0.0, %v2658
    %v2660 = vpop.f32.mrb[0].mxu0
    %v2661 = vadd.f32 0.0, %v2660
    %2662 = vdwg.mxu0
    %2663 = vmatprep.subr.mxu0 %v2472
    %2664 = vmatpush1.msra.mxu0 %v2471
    %2665 = vmatprep.subr.mxu0 %v2477
    %2666 = vmatpush1.msra.mxu0 %v2476
    %2667 = vmatprep.subr.mxu0 %v2482
    %2668 = vmatpush1.msra.mxu0 %v2481
    %2669 = vmatprep.subr.mxu0 %v2487
    %2670 = vmatpush1.msra.mxu0 %v2486
    %2671 = vmatprep.subr.mxu0 %v2492
    %2672 = vmatpush1.msra.mxu0 %v2491
    %2673 = vmatprep.subr.mxu0 %v2497
    %2674 = vmatpush1.msra.mxu0 %v2496
    %2675 = vmatprep.subr.mxu0 %v2502
    %2676 = vmatpush1.msra.mxu0 %v2501
    %2677 = vmatprep.subr.mxu0 %v2507
    %2678 = vmatpush1.msra.mxu0 %v2506
    %2679 = vmatprep.subr.mxu0 %v2512
    %2680 = vmatpush1.msra.mxu0 %v2511
    %2681 = vmatprep.subr.mxu0 %v2517
    %2682 = vmatpush1.msra.mxu0 %v2516
    %2683 = vmatprep.subr.mxu0 %v2522
    %2684 = vmatpush1.msra.mxu0 %v2521
    %2685 = vmatprep.subr.mxu0 %v2527
    %2686 = vmatpush1.msra.mxu0 %v2526
    %2687 = vmatprep.subr.mxu0 %v2532
    %2688 = vmatpush1.msra.mxu0 %v2531
    %2689 = vmatprep.subr.mxu0 %v2537
    %2690 = vmatpush1.msra.mxu0 %v2536
    %2691 = vmatprep.subr.mxu0 %v2542
    %2692 = vmatpush1.msra.mxu0 %v2541
    %2693 = vmatprep.subr.mxu0 %v2547
    %2694 = vmatpush1.msra.mxu0 %v2546
    %2695 = vmatprep.subr.mxu0 %v2552
    %2696 = vmatpush1.msra.mxu0 %v2551
    %2697 = vmatprep.subr.mxu0 %v2557
    %2698 = vmatpush1.msra.mxu0 %v2556
    %2699 = vmatprep.subr.mxu0 0.0
    %2700 = vmatpush1.msra.mxu0 0.0
    %2701 = vmatprep.subr.mxu0 0.0
    %2702 = vmatpush1.msra.mxu0 0.0
    %2703 = vmatprep.subr.mxu0 0.0
    %2704 = vmatpush1.msra.mxu0 0.0
    %2705 = vmatprep.subr.mxu0 0.0
    %2706 = vmatpush1.msra.mxu0 0.0
    %2707 = vmatprep.subr.mxu0 0.0
    %2708 = vmatpush1.msra.mxu0 0.0
    %2709 = vmatprep.subr.mxu0 0.0
    %2710 = vmatpush1.msra.mxu0 0.0
    %2711 = vmatprep.subr.mxu0 0.0
    %2712 = vmatpush1.msra.mxu0 0.0
    %2713 = vmatprep.subr.mxu0 0.0
    %2714 = vmatpush1.msra.mxu0 0.0
    %2715 = vmatprep.subr.mxu0 0.0
    %2716 = vmatpush1.msra.mxu0 0.0
    %2717 = vmatprep.subr.mxu0 0.0
    %2718 = vmatpush1.msra.mxu0 0.0
    %2719 = vmatprep.subr.mxu0 0.0
    %2720 = vmatpush1.msra.mxu0 0.0
    %2721 = vmatprep.subr.mxu0 0.0
    %2722 = vmatpush1.msra.mxu0 0.0
    %2723 = vmatprep.subr.mxu0 0.0
    %2724 = vmatpush1.msra.mxu0 0.0
    %2725 = vmatprep.subr.mxu0 0.0
    %2726 = vmatpush1.msra.mxu0 0.0
    %2727 = vmatprep.mubr.f32.mxu0 %v2563
    %2728 = vmatmul.mubr.f32.gmra.mrb[0].mxu0 %v2297
    %v2729 = vpop.f32.mrb[0].mxu0
    %v2730 = vadd.f32 %v2641, %v2729
    %v2731 = vpop.f32.mrb[0].mxu0
    %v2732 = vadd.f32 %v2643, %v2731
    %2733 = vmatprep.mubr.f32.mxu0 %v2566
    %2734 = vmatmul.mubr.f32.gmra.mrb[0].mxu0 %v2301
    %v2735 = vpop.f32.mrb[0].mxu0
    %v2736 = vadd.f32 %v2647, %v2735
    %v2737 = vpop.f32.mrb[0].mxu0
    %v2738 = vadd.f32 %v2649, %v2737
    %2739 = vmatprep.mubr.f32.mxu0 %v2569
    %2740 = vmatmul.mubr.f32.gmra.mrb[0].mxu0 %v2305
    %v2741 = vpop.f32.mrb[0].mxu0
    %v2742 = vadd.f32 %v2653, %v2741
    %v2743 = vpop.f32.mrb[0].mxu0
    %v2744 = vadd.f32 %v2655, %v2743
    %2745 = vmatprep.mubr.f32.mxu0 %v2572
    %2746 = vmatmul.mubr.f32.gmra.mrb[0].mxu0 %v2309
    %v2747 = vpop.f32.mrb[0].mxu0
    %v2748 = vadd.f32 %v2659, %v2747
    %v2749 = vpop.f32.mrb[0].mxu0
    %v2750 = vadd.f32 %v2661, %v2749
    %2751 = vdwg.mxu0
    %2752 = vmatprep.subr.mxu0 %v2314
    %2753 = vmatpush1.msra.mxu0 %v2313
    %2754 = vmatprep.subr.mxu0 %v2319
    %2755 = vmatpush1.msra.mxu0 %v2318
    %2756 = vmatprep.subr.mxu0 %v2324
    %2757 = vmatpush1.msra.mxu0 %v2323
    %2758 = vmatprep.subr.mxu0 %v2329
    %2759 = vmatpush1.msra.mxu0 %v2328
    %2760 = vmatprep.subr.mxu0 %v2334
    %2761 = vmatpush1.msra.mxu0 %v2333
    %2762 = vmatprep.subr.mxu0 %v2339
    %2763 = vmatpush1.msra.mxu0 %v2338
    %2764 = vmatprep.subr.mxu0 %v2344
    %2765 = vmatpush1.msra.mxu0 %v2343
    %2766 = vmatprep.subr.mxu0 %v2349
    %2767 = vmatpush1.msra.mxu0 %v2348
    %2768 = vmatprep.subr.mxu0 %v2354
    %2769 = vmatpush1.msra.mxu0 %v2353
    %2770 = vmatprep.subr.mxu0 %v2359
    %2771 = vmatpush1.msra.mxu0 %v2358
    %2772 = vmatprep.subr.mxu0 %v2364
    %2773 = vmatpush1.msra.mxu0 %v2363
    %2774 = vmatprep.subr.mxu0 %v2369
    %2775 = vmatpush1.msra.mxu0 %v2368
    %2776 = vmatprep.subr.mxu0 %v2374
    %2777 = vmatpush1.msra.mxu0 %v2373
    %2778 = vmatprep.subr.mxu0 %v2379
    %2779 = vmatpush1.msra.mxu0 %v2378
    %2780 = vmatprep.subr.mxu0 %v2384
    %2781 = vmatpush1.msra.mxu0 %v2383
    %2782 = vmatprep.subr.mxu0 %v2389
    %2783 = vmatpush1.msra.mxu0 %v2388
    %2784 = vmatprep.subr.mxu0 %v2394
    %2785 = vmatpush1.msra.mxu0 %v2393
    %2786 = vmatprep.subr.mxu0 %v2399
    %2787 = vmatpush1.msra.mxu0 %v2398
    %2788 = vmatprep.subr.mxu0 %v2404
    %2789 = vmatpush1.msra.mxu0 %v2403
    %2790 = vmatprep.subr.mxu0 %v2409
    %2791 = vmatpush1.msra.mxu0 %v2408
    %2792 = vmatprep.subr.mxu0 %v2414
    %2793 = vmatpush1.msra.mxu0 %v2413
    %2794 = vmatprep.subr.mxu0 %v2419
    %2795 = vmatpush1.msra.mxu0 %v2418
    %2796 = vmatprep.subr.mxu0 %v2424
    %2797 = vmatpush1.msra.mxu0 %v2423
    %2798 = vmatprep.subr.mxu0 %v2429
    %2799 = vmatpush1.msra.mxu0 %v2428
    %2800 = vmatprep.subr.mxu0 %v2434
    %2801 = vmatpush1.msra.mxu0 %v2433
    %2802 = vmatprep.subr.mxu0 %v2439
    %2803 = vmatpush1.msra.mxu0 %v2438
    %2804 = vmatprep.subr.mxu0 %v2444
    %2805 = vmatpush1.msra.mxu0 %v2443
    %2806 = vmatprep.subr.mxu0 %v2449
    %2807 = vmatpush1.msra.mxu0 %v2448
    %2808 = vmatprep.subr.mxu0 %v2454
    %2809 = vmatpush1.msra.mxu0 %v2453
    %2810 = vmatprep.subr.mxu0 %v2459
    %2811 = vmatpush1.msra.mxu0 %v2458
    %2812 = vmatprep.subr.mxu0 %v2464
    %2813 = vmatpush1.msra.mxu0 %v2463
    %2814 = vmatprep.subr.mxu0 %v2469
    %2815 = vmatpush1.msra.mxu0 %v2468
    %2816 = vmatprep.mubr.f32.mxu0 %v2296
    %2817 = vmatmul.mubr.f32.gmra.mrb[0].mxu0 %v2295
    %v2818 = vpop.f32.mrb[0].mxu0
    %v2819 = vadd.f32 0.0, %v2818
    %v2820 = vpop.f32.mrb[0].mxu0
    %v2821 = vadd.f32 0.0, %v2820
    %2822 = vmatprep.mubr.f32.mxu0 %v2300
    %2823 = vmatmul.mubr.f32.gmra.mrb[0].mxu0 %v2299
    %v2824 = vpop.f32.mrb[0].mxu0
    %v2825 = vadd.f32 0.0, %v2824
    %v2826 = vpop.f32.mrb[0].mxu0
    %v2827 = vadd.f32 0.0, %v2826
    %2828 = vmatprep.mubr.f32.mxu0 %v2304
    %2829 = vmatmul.mubr.f32.gmra.mrb[0].mxu0 %v2303
    %v2830 = vpop.f32.mrb[0].mxu0
    %v2831 = vadd.f32 0.0, %v2830
    %v2832 = vpop.f32.mrb[0].mxu0
    %v2833 = vadd.f32 0.0, %v2832
    %2834 = vmatprep.mubr.f32.mxu0 %v2308
    %2835 = vmatmul.mubr.f32.gmra.mrb[0].mxu0 %v2307
    %v2836 = vpop.f32.mrb[0].mxu0
    %v2837 = vadd.f32 0.0, %v2836
    %v2838 = vpop.f32.mrb[0].mxu0
    %v2839 = vadd.f32 0.0, %v2838
    %2840 = vdwg.mxu0
    %2841 = vmatprep.subr.mxu0 %v2474
    %2842 = vmatpush1.msra.mxu0 %v2473
    %2843 = vmatprep.subr.mxu0 %v2479
    %2844 = vmatpush1.msra.mxu0 %v2478
    %2845 = vmatprep.subr.mxu0 %v2484
    %2846 = vmatpush1.msra.mxu0 %v2483
    %2847 = vmatprep.subr.mxu0 %v2489
    %2848 = vmatpush1.msra.mxu0 %v2488
    %2849 = vmatprep.subr.mxu0 %v2494
    %2850 = vmatpush1.msra.mxu0 %v2493
    %2851 = vmatprep.subr.mxu0 %v2499
    %2852 = vmatpush1.msra.mxu0 %v2498
    %2853 = vmatprep.subr.mxu0 %v2504
    %2854 = vmatpush1.msra.mxu0 %v2503
    %2855 = vmatprep.subr.mxu0 %v2509
    %2856 = vmatpush1.msra.mxu0 %v2508
    %2857 = vmatprep.subr.mxu0 %v2514
    %2858 = vmatpush1.msra.mxu0 %v2513
    %2859 = vmatprep.subr.mxu0 %v2519
    %2860 = vmatpush1.msra.mxu0 %v2518
    %2861 = vmatprep.subr.mxu0 %v2524
    %2862 = vmatpush1.msra.mxu0 %v2523
    %2863 = vmatprep.subr.mxu0 %v2529
    %2864 = vmatpush1.msra.mxu0 %v2528
    %2865 = vmatprep.subr.mxu0 %v2534
    %2866 = vmatpush1.msra.mxu0 %v2533
    %2867 = vmatprep.subr.mxu0 %v2539
    %2868 = vmatpush1.msra.mxu0 %v2538
    %2869 = vmatprep.subr.mxu0 %v2544
    %2870 = vmatpush1.msra.mxu0 %v2543
    %2871 = vmatprep.subr.mxu0 %v2549
    %2872 = vmatpush1.msra.mxu0 %v2548
    %2873 = vmatprep.subr.mxu0 %v2554
    %2874 = vmatpush1.msra.mxu0 %v2553
    %2875 = vmatprep.subr.mxu0 %v2559
    %2876 = vmatpush1.msra.mxu0 %v2558
    %2877 = vmatprep.subr.mxu0 0.0
    %2878 = vmatpush1.msra.mxu0 0.0
    %2879 = vmatprep.subr.mxu0 0.0
    %2880 = vmatpush1.msra.mxu0 0.0
    %2881 = vmatprep.subr.mxu0 0.0
    %2882 = vmatpush1.msra.mxu0 0.0
    %2883 = vmatprep.subr.mxu0 0.0
    %2884 = vmatpush1.msra.mxu0 0.0
    %2885 = vmatprep.subr.mxu0 0.0
    %2886 = vmatpush1.msra.mxu0 0.0
    %2887 = vmatprep.subr.mxu0 0.0
    %2888 = vmatpush1.msra.mxu0 0.0
    %2889 = vmatprep.subr.mxu0 0.0
    %2890 = vmatpush1.msra.mxu0 0.0
    %2891 = vmatprep.subr.mxu0 0.0
    %2892 = vmatpush1.msra.mxu0 0.0
    %2893 = vmatprep.subr.mxu0 0.0
    %2894 = vmatpush1.msra.mxu0 0.0
    %2895 = vmatprep.subr.mxu0 0.0
    %2896 = vmatpush1.msra.mxu0 0.0
    %2897 = vmatprep.subr.mxu0 0.0
    %2898 = vmatpush1.msra.mxu0 0.0
    %2899 = vmatprep.subr.mxu0 0.0
    %2900 = vmatpush1.msra.mxu0 0.0
    %2901 = vmatprep.subr.mxu0 0.0
    %2902 = vmatpush1.msra.mxu0 0.0
    %2903 = vmatprep.subr.mxu0 0.0
    %2904 = vmatpush1.msra.mxu0 0.0
    %2905 = vmatprep.mubr.f32.mxu0 %v2563
    %2906 = vmatmul.mubr.f32.gmra.mrb[0].mxu0 %v2297
    %v2907 = vpop.f32.mrb[0].mxu0
    %v2908 = vadd.f32 %v2819, %v2907
    %v2909 = vpop.f32.mrb[0].mxu0
    %v2910 = vadd.f32 %v2821, %v2909
    %2911 = vmatprep.mubr.f32.mxu0 %v2566
    %2912 = vmatmul.mubr.f32.gmra.mrb[0].mxu0 %v2301
    %v2913 = vpop.f32.mrb[0].mxu0
    %v2914 = vadd.f32 %v2825, %v2913
    %v2915 = vpop.f32.mrb[0].mxu0
    %v2916 = vadd.f32 %v2827, %v2915
    %2917 = vmatprep.mubr.f32.mxu0 %v2569
    %2918 = vmatmul.mubr.f32.gmra.mrb[0].mxu0 %v2305
    %v2919 = vpop.f32.mrb[0].mxu0
    %v2920 = vadd.f32 %v2831, %v2919
    %v2921 = vpop.f32.mrb[0].mxu0
    %v2922 = vadd.f32 %v2833, %v2921
    %2923 = vmatprep.mubr.f32.mxu0 %v2572
    %2924 = vmatmul.mubr.f32.gmra.mrb[0].mxu0 %v2309
    %v2925 = vpop.f32.mrb[0].mxu0
    %v2926 = vadd.f32 %v2837, %v2925
    %v2927 = vpop.f32.mrb[0].mxu0
    %v2928 = vadd.f32 %v2839, %v2927
    %2929 = vdwg.mxu0
    %2930 = vmatprep.subr.mxu0 0.0
    %2931 = vmatpush1.msra.mxu0 %v2315
    %2932 = vmatprep.subr.mxu0 0.0
    %2933 = vmatpush1.msra.mxu0 %v2320
    %2934 = vmatprep.subr.mxu0 0.0
    %2935 = vmatpush1.msra.mxu0 %v2325
    %2936 = vmatprep.subr.mxu0 0.0
    %2937 = vmatpush1.msra.mxu0 %v2330
    %2938 = vmatprep.subr.mxu0 0.0
    %2939 = vmatpush1.msra.mxu0 %v2335
    %2940 = vmatprep.subr.mxu0 0.0
    %2941 = vmatpush1.msra.mxu0 %v2340
    %2942 = vmatprep.subr.mxu0 0.0
    %2943 = vmatpush1.msra.mxu0 %v2345
    %2944 = vmatprep.subr.mxu0 0.0
    %2945 = vmatpush1.msra.mxu0 %v2350
    %2946 = vmatprep.subr.mxu0 0.0
    %2947 = vmatpush1.msra.mxu0 %v2355
    %2948 = vmatprep.subr.mxu0 0.0
    %2949 = vmatpush1.msra.mxu0 %v2360
    %2950 = vmatprep.subr.mxu0 0.0
    %2951 = vmatpush1.msra.mxu0 %v2365
    %2952 = vmatprep.subr.mxu0 0.0
    %2953 = vmatpush1.msra.mxu0 %v2370
    %2954 = vmatprep.subr.mxu0 0.0
    %2955 = vmatpush1.msra.mxu0 %v2375
    %2956 = vmatprep.subr.mxu0 0.0
    %2957 = vmatpush1.msra.mxu0 %v2380
    %2958 = vmatprep.subr.mxu0 0.0
    %2959 = vmatpush1.msra.mxu0 %v2385
    %2960 = vmatprep.subr.mxu0 0.0
    %2961 = vmatpush1.msra.mxu0 %v2390
    %2962 = vmatprep.subr.mxu0 0.0
    %2963 = vmatpush1.msra.mxu0 %v2395
    %2964 = vmatprep.subr.mxu0 0.0
    %2965 = vmatpush1.msra.mxu0 %v2400
    %2966 = vmatprep.subr.mxu0 0.0
    %2967 = vmatpush1.msra.mxu0 %v2405
    %2968 = vmatprep.subr.mxu0 0.0
    %2969 = vmatpush1.msra.mxu0 %v2410
    %2970 = vmatprep.subr.mxu0 0.0
    %2971 = vmatpush1.msra.mxu0 %v2415
    %2972 = vmatprep.subr.mxu0 0.0
    %2973 = vmatpush1.msra.mxu0 %v2420
    %2974 = vmatprep.subr.mxu0 0.0
    %2975 = vmatpush1.msra.mxu0 %v2425
    %2976 = vmatprep.subr.mxu0 0.0
    %2977 = vmatpush1.msra.mxu0 %v2430
    %2978 = vmatprep.subr.mxu0 0.0
    %2979 = vmatpush1.msra.mxu0 %v2435
    %2980 = vmatprep.subr.mxu0 0.0
    %2981 = vmatpush1.msra.mxu0 %v2440
    %2982 = vmatprep.subr.mxu0 0.0
    %2983 = vmatpush1.msra.mxu0 %v2445
    %2984 = vmatprep.subr.mxu0 0.0
    %2985 = vmatpush1.msra.mxu0 %v2450
    %2986 = vmatprep.subr.mxu0 0.0
    %2987 = vmatpush1.msra.mxu0 %v2455
    %2988 = vmatprep.subr.mxu0 0.0
    %2989 = vmatpush1.msra.mxu0 %v2460
    %2990 = vmatprep.subr.mxu0 0.0
    %2991 = vmatpush1.msra.mxu0 %v2465
    %2992 = vmatprep.subr.mxu0 0.0
    %2993 = vmatpush1.msra.mxu0 %v2470
    %2994 = vmatprep.mubr.f32.mxu0 %v2296
    %2995 = vmatmul.mubr.f32.gmra.mrb[0].mxu0 %v2295
    %v2996 = vpop.f32.mrb[0].mxu0
    %v2997 = vadd.f32 0.0, %v2996
    %v2998 = vpop.f32.mrb[0].mxu0
    %2999 = vmatprep.mubr.f32.mxu0 %v2300
    %3000 = vmatmul.mubr.f32.gmra.mrb[0].mxu0 %v2299
    %v3001 = vpop.f32.mrb[0].mxu0
    %v3002 = vadd.f32 0.0, %v3001
    %v3003 = vpop.f32.mrb[0].mxu0
    %3004 = vmatprep.mubr.f32.mxu0 %v2304
    %3005 = vmatmul.mubr.f32.gmra.mrb[0].mxu0 %v2303
    %v3006 = vpop.f32.mrb[0].mxu0
    %v3007 = vadd.f32 0.0, %v3006
    %v3008 = vpop.f32.mrb[0].mxu0
    %3009 = vmatprep.mubr.f32.mxu0 %v2308
    %3010 = vmatmul.mubr.f32.gmra.mrb[0].mxu0 %v2307
    %v3011 = vpop.f32.mrb[0].mxu0
    %v3012 = vadd.f32 0.0, %v3011
    %v3013 = vpop.f32.mrb[0].mxu0
    %3014 = vdwg.mxu0
    %3015 = vmatprep.subr.mxu0 0.0
    %3016 = vmatpush1.msra.mxu0 %v2475
    %3017 = vmatprep.subr.mxu0 0.0
    %3018 = vmatpush1.msra.mxu0 %v2480
    %3019 = vmatprep.subr.mxu0 0.0
    %3020 = vmatpush1.msra.mxu0 %v2485
    %3021 = vmatprep.subr.mxu0 0.0
    %3022 = vmatpush1.msra.mxu0 %v2490
    %3023 = vmatprep.subr.mxu0 0.0
    %3024 = vmatpush1.msra.mxu0 %v2495
    %3025 = vmatprep.subr.mxu0 0.0
    %3026 = vmatpush1.msra.mxu0 %v2500
    %3027 = vmatprep.subr.mxu0 0.0
    %3028 = vmatpush1.msra.mxu0 %v2505
    %3029 = vmatprep.subr.mxu0 0.0
    %3030 = vmatpush1.msra.mxu0 %v2510
    %3031 = vmatprep.subr.mxu0 0.0
    %3032 = vmatpush1.msra.mxu0 %v2515
    %3033 = vmatprep.subr.mxu0 0.0
    %3034 = vmatpush1.msra.mxu0 %v2520
    %3035 = vmatprep.subr.mxu0 0.0
    %3036 = vmatpush1.msra.mxu0 %v2525
    %3037 = vmatprep.subr.mxu0 0.0
    %3038 = vmatpush1.msra.mxu0 %v2530
    %3039 = vmatprep.subr.mxu0 0.0
    %3040 = vmatpush1.msra.mxu0 %v2535
    %3041 = vmatprep.subr.mxu0 0.0
    %3042 = vmatpush1.msra.mxu0 %v2540
    %3043 = vmatprep.subr.mxu0 0.0
    %3044 = vmatpush1.msra.mxu0 %v2545
    %3045 = vmatprep.subr.mxu0 0.0
    %3046 = vmatpush1.msra.mxu0 %v2550
    %3047 = vmatprep.subr.mxu0 0.0
    %3048 = vmatpush1.msra.mxu0 %v2555
    %3049 = vmatprep.subr.mxu0 0.0
    %3050 = vmatpush1.msra.mxu0 %v2560
    %3051 = vmatprep.subr.mxu0 0.0
    %3052 = vmatpush1.msra.mxu0 0.0
    %3053 = vmatprep.subr.mxu0 0.0
    %3054 = vmatpush1.msra.mxu0 0.0
    %3055 = vmatprep.subr.mxu0 0.0
    %3056 = vmatpush1.msra.mxu0 0.0
    %3057 = vmatprep.subr.mxu0 0.0
    %3058 = vmatpush1.msra.mxu0 0.0
    %3059 = vmatprep.subr.mxu0 0.0
    %3060 = vmatpush1.msra.mxu0 0.0
    %3061 = vmatprep.subr.mxu0 0.0
    %3062 = vmatpush1.msra.mxu0 0.0
    %3063 = vmatprep.subr.mxu0 0.0
    %3064 = vmatpush1.msra.mxu0 0.0
    %3065 = vmatprep.subr.mxu0 0.0
    %3066 = vmatpush1.msra.mxu0 0.0
    %3067 = vmatprep.subr.mxu0 0.0
    %3068 = vmatpush1.msra.mxu0 0.0
    %3069 = vmatprep.subr.mxu0 0.0
    %3070 = vmatpush1.msra.mxu0 0.0
    %3071 = vmatprep.subr.mxu0 0.0
    %3072 = vmatpush1.msra.mxu0 0.0
    %3073 = vmatprep.subr.mxu0 0.0
    %3074 = vmatpush1.msra.mxu0 0.0
    %3075 = vmatprep.subr.mxu0 0.0
    %3076 = vmatpush1.msra.mxu0 0.0
    %3077 = vmatprep.subr.mxu0 0.0
    %3078 = vmatpush1.msra.mxu0 0.0
    %3079 = vmatprep.mubr.f32.mxu0 %v2563
    %3080 = vmatmul.mubr.f32.gmra.mrb[0].mxu0 %v2297
    %v3081 = vpop.f32.mrb[0].mxu0
    %v3082 = vadd.f32 %v2997, %v3081
    %v3083 = vpop.f32.mrb[0].mxu0
    %3084 = vmatprep.mubr.f32.mxu0 %v2566
    %3085 = vmatmul.mubr.f32.gmra.mrb[0].mxu0 %v2301
    %v3086 = vpop.f32.mrb[0].mxu0
    %v3087 = vadd.f32 %v3002, %v3086
    %v3088 = vpop.f32.mrb[0].mxu0
    %3089 = vmatprep.mubr.f32.mxu0 %v2569
    %3090 = vmatmul.mubr.f32.gmra.mrb[0].mxu0 %v2305
    %v3091 = vpop.f32.mrb[0].mxu0
    %v3092 = vadd.f32 %v3007, %v3091
    %v3093 = vpop.f32.mrb[0].mxu0
    %3094 = vmatprep.mubr.f32.mxu0 %v2572
    %3095 = vmatmul.mubr.f32.gmra.mrb[0].mxu0 %v2309
    %v3096 = vpop.f32.mrb[0].mxu0
    %v3097 = vadd.f32 %v3012, %v3096
    %v3098 = vpop.f32.mrb[0].mxu0
    %3099 = vdwg.mxu0
    %v3100 = vmax.f32 %v2730, 0.0
    %v3101 = vmax.f32 %v2732, 0.0
    %v3102 = vmax.f32 %v2908, 0.0
    %v3103 = vmax.f32 %v2910, 0.0
    %v3104 = vmax.f32 %v3082, 0.0
    %v3105 = vmax.f32 %v2736, 0.0
    %v3106 = vmax.f32 %v2738, 0.0
    %v3107 = vmax.f32 %v2914, 0.0
    %v3108 = vmax.f32 %v2916, 0.0
    %v3109 = vmax.f32 %v3087, 0.0
    %v3110 = vmax.f32 %v2742, 0.0
    %v3111 = vmax.f32 %v2744, 0.0
    %v3112 = vmax.f32 %v2920, 0.0
    %v3113 = vmax.f32 %v2922, 0.0
    %v3114 = vmax.f32 %v3092, 0.0
    %v3115 = vmax.f32 %v2748, 0.0
    %v3116 = vmax.f32 %v2750, 0.0
    %v3117 = vmax.f32 %v2926, 0.0
    %v3118 = vmax.f32 %v2928, 0.0
    %v3119 = vmax.f32 %v3097, 0.0
    %3140 = vrot.lane.b32.xlu0 %v3100, 126
    %v3141 = vpop.permute.xlu0 %3140
    %3142 = vrot.lane.b32.xlu0 %v3101, 126
    %v3143 = vpop.permute.xlu0 %3142
    %3144 = vrot.lane.b32.xlu0 %v3102, 126
    %v3145 = vpop.permute.xlu0 %3144
    %3146 = vrot.lane.b32.xlu0 %v3103, 126
    %v3147 = vpop.permute.xlu0 %3146
    %3148 = vrot.lane.b32.xlu0 %v3104, 126
    %v3149 = vpop.permute.xlu0 %3148
    %3150 = vrot.lane.b32.xlu0 %v3105, 126
    %v3151 = vpop.permute.xlu0 %3150
    %3152 = vrot.lane.b32.xlu0 %v3106, 126
    %v3153 = vpop.permute.xlu0 %3152
    %3154 = vrot.lane.b32.xlu0 %v3107, 126
    %v3155 = vpop.permute.xlu0 %3154
    %3156 = vrot.lane.b32.xlu0 %v3108, 126
    %v3157 = vpop.permute.xlu0 %3156
    %3158 = vrot.lane.b32.xlu0 %v3109, 126
    %v3159 = vpop.permute.xlu0 %3158
    %3160 = vrot.lane.b32.xlu0 %v3110, 126
    %v3161 = vpop.permute.xlu0 %3160
    %3162 = vrot.lane.b32.xlu0 %v3111, 126
    %v3163 = vpop.permute.xlu0 %3162
    %3164 = vrot.lane.b32.xlu0 %v3112, 126
    %v3165 = vpop.permute.xlu0 %3164
    %3166 = vrot.lane.b32.xlu0 %v3113, 126
    %v3167 = vpop.permute.xlu0 %3166
    %3168 = vrot.lane.b32.xlu0 %v3114, 126
    %v3169 = vpop.permute.xlu0 %3168
    %3170 = vrot.lane.b32.xlu0 %v3115, 126
    %v3171 = vpop.permute.xlu0 %3170
    %3172 = vrot.lane.b32.xlu0 %v3116, 126
    %v3173 = vpop.permute.xlu0 %3172
    %3174 = vrot.lane.b32.xlu0 %v3117, 126
    %v3175 = vpop.permute.xlu0 %3174
    %3176 = vrot.lane.b32.xlu0 %v3118, 126
    %v3177 = vpop.permute.xlu0 %3176
    %3178 = vrot.lane.b32.xlu0 %v3119, 126
    %v3179 = vpop.permute.xlu0 %3178
    %v3180 = vsel %vm148, %v3141, %v3143
    %v3181 = vsel %vm148, %v3143, %v3145
    %v3182 = vsel %vm148, %v3145, %v3147
    %v3183 = vsel %vm148, %v3147, %v3149
    %v3184 = vsel %vm148, %v3151, %v3153
    %v3185 = vsel %vm148, %v3153, %v3155
    %v3186 = vsel %vm148, %v3155, %v3157
    %v3187 = vsel %vm148, %v3157, %v3159
    %v3188 = vsel %vm148, %v3161, %v3163
    %v3189 = vsel %vm148, %v3163, %v3165
    %v3190 = vsel %vm148, %v3165, %v3167
    %v3191 = vsel %vm148, %v3167, %v3169
    %v3192 = vsel %vm148, %v3171, %v3173
    %v3193 = vsel %vm148, %v3173, %v3175
    %v3194 = vsel %vm148, %v3175, %v3177
    %v3195 = vsel %vm148, %v3177, %v3179
    %v3216 = vmax.f32 %v3100, %v3180
    %v3217 = vmax.f32 %v3101, %v3181
    %v3218 = vmax.f32 %v3102, %v3182
    %v3219 = vmax.f32 %v3103, %v3183
    %v3220 = vmax.f32 %v3104, %v3149
    %v3221 = vmax.f32 %v3105, %v3184
    %v3222 = vmax.f32 %v3106, %v3185
    %v3223 = vmax.f32 %v3107, %v3186
    %v3224 = vmax.f32 %v3108, %v3187
    %v3225 = vmax.f32 %v3109, %v3159
    %v3226 = vmax.f32 %v3110, %v3188
    %v3227 = vmax.f32 %v3111, %v3189
    %v3228 = vmax.f32 %v3112, %v3190
    %v3229 = vmax.f32 %v3113, %v3191
    %v3230 = vmax.f32 %v3114, %v3169
    %v3231 = vmax.f32 %v3115, %v3192
    %v3232 = vmax.f32 %v3116, %v3193
    %v3233 = vmax.f32 %v3117, %v3194
    %v3234 = vmax.f32 %v3118, %v3195
    %v3235 = vmax.f32 %v3119, %v3179
    %3256 = vrot.lane.b32.xlu0 %v3216, 64
    %v3257 = vpop.permute.xlu0 %3256
    %3258 = vrot.lane.b32.xlu0 %v3217, 64
    %v3259 = vpop.permute.xlu0 %3258
    %3260 = vrot.lane.b32.xlu0 %v3218, 64
    %v3261 = vpop.permute.xlu0 %3260
    %3262 = vrot.lane.b32.xlu0 %v3219, 64
    %v3263 = vpop.permute.xlu0 %3262
    %3264 = vrot.lane.b32.xlu0 %v3220, 64
    %v3265 = vpop.permute.xlu0 %3264
    %3266 = vrot.lane.b32.xlu0 %v3221, 64
    %v3267 = vpop.permute.xlu0 %3266
    %3268 = vrot.lane.b32.xlu0 %v3222, 64
    %v3269 = vpop.permute.xlu0 %3268
    %3270 = vrot.lane.b32.xlu0 %v3223, 64
    %v3271 = vpop.permute.xlu0 %3270
    %3272 = vrot.lane.b32.xlu0 %v3224, 64
    %v3273 = vpop.permute.xlu0 %3272
    %3274 = vrot.lane.b32.xlu0 %v3225, 64
    %v3275 = vpop.permute.xlu0 %3274
    %3276 = vrot.lane.b32.xlu0 %v3226, 64
    %v3277 = vpop.permute.xlu0 %3276
    %3278 = vrot.lane.b32.xlu0 %v3227, 64
    %v3279 = vpop.permute.xlu0 %3278
    %3280 = vrot.lane.b32.xlu0 %v3228, 64
    %v3281 = vpop.permute.xlu0 %3280
    %3282 = vrot.lane.b32.xlu0 %v3229, 64
    %v3283 = vpop.permute.xlu0 %3282
    %3284 = vrot.lane.b32.xlu0 %v3230, 64
    %v3285 = vpop.permute.xlu0 %3284
    %3286 = vrot.lane.b32.xlu0 %v3231, 64
    %v3287 = vpop.permute.xlu0 %3286
    %3288 = vrot.lane.b32.xlu0 %v3232, 64
    %v3289 = vpop.permute.xlu0 %3288
    %3290 = vrot.lane.b32.xlu0 %v3233, 64
    %v3291 = vpop.permute.xlu0 %3290
    %3292 = vrot.lane.b32.xlu0 %v3234, 64
    %v3293 = vpop.permute.xlu0 %3292
    %3294 = vrot.lane.b32.xlu0 %v3235, 64
    %v3295 = vpop.permute.xlu0 %3294
    %v3296 = vsel %vm445, %v3257, %v3259
    %v3297 = vsel %vm445, %v3259, %v3261
    %v3298 = vsel %vm445, %v3261, %v3263
    %v3299 = vsel %vm445, %v3263, %v3265
    %v3300 = vsel %vm445, %v3267, %v3269
    %v3301 = vsel %vm445, %v3269, %v3271
    %v3302 = vsel %vm445, %v3271, %v3273
    %v3303 = vsel %vm445, %v3273, %v3275
    %v3304 = vsel %vm445, %v3277, %v3279
    %v3305 = vsel %vm445, %v3279, %v3281
    %v3306 = vsel %vm445, %v3281, %v3283
    %v3307 = vsel %vm445, %v3283, %v3285
    %v3308 = vsel %vm445, %v3287, %v3289
    %v3309 = vsel %vm445, %v3289, %v3291
    %v3310 = vsel %vm445, %v3291, %v3293
    %v3311 = vsel %vm445, %v3293, %v3295
    %v3332 = vmax.f32 %v3216, %v3296
    %v3333 = vmax.f32 %v3217, %v3297
    %v3334 = vmax.f32 %v3218, %v3298
    %v3335 = vmax.f32 %v3219, %v3299
    %v3336 = vmax.f32 %v3220, %v3265
    %v3337 = vmax.f32 %v3221, %v3300
    %v3338 = vmax.f32 %v3222, %v3301
    %v3339 = vmax.f32 %v3223, %v3302
    %v3340 = vmax.f32 %v3224, %v3303
    %v3341 = vmax.f32 %v3225, %v3275
    %v3342 = vmax.f32 %v3226, %v3304
    %v3343 = vmax.f32 %v3227, %v3305
    %v3344 = vmax.f32 %v3228, %v3306
    %v3345 = vmax.f32 %v3229, %v3307
    %v3346 = vmax.f32 %v3230, %v3285
    %v3347 = vmax.f32 %v3231, %v3308
    %v3348 = vmax.f32 %v3232, %v3309
    %v3349 = vmax.f32 %v3233, %v3310
    %v3350 = vmax.f32 %v3234, %v3311
    %v3351 = vmax.f32 %v3235, %v3295
    %v3352 = vld [vmem:[#allocation9] sm:$0xff]
    %v3353 = vld [vmem:[#allocation9 + $0x8] sm:$0xff]
    %v3354 = vld [vmem:[#allocation9 + $0x10] sm:$0xff]
    %v3355 = vld [vmem:[#allocation9 + $0x18] sm:$0xff]
    %v3356 = vld [vmem:[#allocation9 + $0x20] sm:$0xff]
    %v3357 = vld [vmem:[#allocation9 + $0x28] sm:$0xff]
    %v3358 = vld [vmem:[#allocation9 + $0x30] sm:$0xff]
    %v3359 = vld [vmem:[#allocation9 + $0x38] sm:$0xff]
    %v3360 = vld [vmem:[#allocation9 + $0x40] sm:$0xff]
    %v3361 = vld [vmem:[#allocation9 + $0x48] sm:$0xff]
    %v3362 = vld [vmem:[#allocation9 + $0x50] sm:$0xff]
    %v3363 = vld [vmem:[#allocation9 + $0x58] sm:$0xff]
    %v3364 = vld [vmem:[#allocation9 + $0x60] sm:$0xff]
    %v3365 = vld [vmem:[#allocation9 + $0x68] sm:$0xff]
    %v3366 = vld [vmem:[#allocation9 + $0x70] sm:$0xff]
    %v3367 = vld [vmem:[#allocation9 + $0x78] sm:$0xff]
    %v3368 = vld [vmem:[#allocation9 + $0x80] sm:$0xff]
    %v3369 = vld [vmem:[#allocation9 + $0x88] sm:$0xff]
    %v3370 = vld [vmem:[#allocation9 + $0x90] sm:$0xff]
    %v3371 = vld [vmem:[#allocation9 + $0x98] sm:$0xff]
    %v3372 = vld [vmem:[#allocation9 + $0xa0] sm:$0xff]
    %v3373 = vld [vmem:[#allocation9 + $0xa8] sm:$0xff]
    %v3374 = vld [vmem:[#allocation9 + $0xb0] sm:$0xff]
    %v3375 = vld [vmem:[#allocation9 + $0xb8] sm:$0xff]
    %v3376 = vld [vmem:[#allocation9 + $0xc0] sm:$0xff]
    %v3377 = vld [vmem:[#allocation9 + $0xc8] sm:$0xff]
    %v3378 = vld [vmem:[#allocation9 + $0xd0] sm:$0xff]
    %v3379 = vld [vmem:[#allocation9 + $0xd8] sm:$0xff]
    %v3380 = vld [vmem:[#allocation9 + $0xe0] sm:$0xff]
    %v3381 = vld [vmem:[#allocation9 + $0xe8] sm:$0xff]
    %v3382 = vld [vmem:[#allocation9 + $0xf0] sm:$0xff]
    %v3383 = vld [vmem:[#allocation9 + $0xf8] sm:$0xff]
    %v3384 = vld [vmem:[#allocation9 + $0x100] sm:$0xff]
    %v3385 = vld [vmem:[#allocation9 + $0x108] sm:$0xff]
    %v3386 = vld [vmem:[#allocation9 + $0x110] sm:$0xff]
    %v3387 = vld [vmem:[#allocation9 + $0x118] sm:$0xff]
    %v3388 = vld [vmem:[#allocation9 + $0x120] sm:$0xff]
    %v3389 = vld [vmem:[#allocation9 + $0x128] sm:$0xff]
    %v3390 = vld [vmem:[#allocation9 + $0x130] sm:$0xff]
    %v3391 = vld [vmem:[#allocation9 + $0x138] sm:$0xff]
    %v3392 = vld [vmem:[#allocation9 + $0x140] sm:$0xff]
    %v3393 = vld [vmem:[#allocation9 + $0x148] sm:$0xff]
    %v3394 = vld [vmem:[#allocation9 + $0x150] sm:$0xff]
    %v3395 = vld [vmem:[#allocation9 + $0x158] sm:$0xff]
    %v3396 = vld [vmem:[#allocation9 + $0x160] sm:$0xff]
    %v3397 = vld [vmem:[#allocation9 + $0x168] sm:$0xff]
    %v3398 = vld [vmem:[#allocation9 + $0x170] sm:$0xff]
    %v3399 = vld [vmem:[#allocation9 + $0x178] sm:$0xff]
    %v3400 = vld [vmem:[#allocation9 + $0x180] sm:$0xff]
    %v3401 = vld [vmem:[#allocation9 + $0x188] sm:$0xff]
    %v3402 = vld [vmem:[#allocation9 + $0x190] sm:$0xff]
    %v3403 = vld [vmem:[#allocation9 + $0x198] sm:$0xff]
    %v3404 = vld [vmem:[#allocation9 + $0x1a0] sm:$0xff]
    %v3405 = vld [vmem:[#allocation9 + $0x1a8] sm:$0xff]
    %v3406 = vld [vmem:[#allocation9 + $0x1b0] sm:$0xff]
    %v3407 = vld [vmem:[#allocation9 + $0x1b8] sm:$0xff]
    %v3408 = vld [vmem:[#allocation9 + $0x1c0] sm:$0xff]
    %v3409 = vld [vmem:[#allocation9 + $0x1c8] sm:$0xff]
    %v3410 = vld [vmem:[#allocation9 + $0x1d0] sm:$0xff]
    %v3411 = vld [vmem:[#allocation9 + $0x1d8] sm:$0xff]
    %v3412 = vld [vmem:[#allocation9 + $0x1e0] sm:$0xff]
    %v3413 = vld [vmem:[#allocation9 + $0x1e8] sm:$0xff]
    %v3414 = vld [vmem:[#allocation9 + $0x1f0] sm:$0xff]
    %v3415 = vld [vmem:[#allocation9 + $0x1f8] sm:$0xff]
    %v3416 = vld [vmem:[#allocation9 + $0x200] sm:$0xff]
    %v3417 = vld [vmem:[#allocation9 + $0x208] sm:$0xff]
    %v3418 = vld [vmem:[#allocation9 + $0x210] sm:$0xff]
    %v3419 = vld [vmem:[#allocation9 + $0x218] sm:$0xff]
    %v3420 = vld [vmem:[#allocation9 + $0x220] sm:$0xff]
    %v3421 = vld [vmem:[#allocation9 + $0x228] sm:$0xff]
    %v3422 = vld [vmem:[#allocation9 + $0x230] sm:$0xff]
    %v3423 = vld [vmem:[#allocation9 + $0x238] sm:$0xff]
    %v3424 = vld [vmem:[#allocation9 + $0x240] sm:$0xff]
    %v3425 = vld [vmem:[#allocation9 + $0x248] sm:$0xff]
    %v3426 = vld [vmem:[#allocation9 + $0x250] sm:$0xff]
    %v3427 = vld [vmem:[#allocation9 + $0x258] sm:$0xff]
    %v3428 = vld [vmem:[#allocation9 + $0x260] sm:$0xff]
    %v3429 = vld [vmem:[#allocation9 + $0x268] sm:$0xff]
    %v3430 = vld [vmem:[#allocation9 + $0x270] sm:$0xff]
    %v3431 = vld [vmem:[#allocation9 + $0x278] sm:$0xff]
    %v3432 = vld [vmem:[#allocation9 + $0x280] sm:$0xff]
    %v3433 = vld [vmem:[#allocation9 + $0x288] sm:$0xff]
    %v3434 = vld [vmem:[#allocation9 + $0x290] sm:$0xff]
    %v3435 = vld [vmem:[#allocation9 + $0x298] sm:$0xff]
    %v3436 = vld [vmem:[#allocation9 + $0x2a0] sm:$0xff]
    %v3437 = vld [vmem:[#allocation9 + $0x2a8] sm:$0xff]
    %v3438 = vld [vmem:[#allocation9 + $0x2b0] sm:$0xff]
    %v3439 = vld [vmem:[#allocation9 + $0x2b8] sm:$0xff]
    %v3440 = vld [vmem:[#allocation9 + $0x2c0] sm:$0xff]
    %v3441 = vld [vmem:[#allocation9 + $0x2c8] sm:$0xff]
    %v3442 = vld [vmem:[#allocation9 + $0x2d0] sm:$0xff]
    %v3443 = vld [vmem:[#allocation9 + $0x2d8] sm:$0xff]
    %v3444 = vld [vmem:[#allocation9 + $0x2e0] sm:$0xff]
    %v3445 = vld [vmem:[#allocation9 + $0x2e8] sm:$0xff]
    %v3446 = vld [vmem:[#allocation9 + $0x2f0] sm:$0xff]
    %v3447 = vld [vmem:[#allocation9 + $0x2f8] sm:$0xff]
    %v3448 = vld [vmem:[#allocation9 + $0x300] sm:$0xff]
    %v3449 = vld [vmem:[#allocation9 + $0x308] sm:$0xff]
    %v3450 = vld [vmem:[#allocation9 + $0x310] sm:$0xff]
    %v3451 = vld [vmem:[#allocation9 + $0x318] sm:$0xff]
    %v3452 = vld [vmem:[#allocation9 + $0x320] sm:$0xff]
    %v3453 = vld [vmem:[#allocation9 + $0x328] sm:$0xff]
    %v3454 = vld [vmem:[#allocation9 + $0x330] sm:$0xff]
    %v3455 = vld [vmem:[#allocation9 + $0x338] sm:$0xff]
    %v3456 = vld [vmem:[#allocation9 + $0x340] sm:$0xff]
    %v3457 = vld [vmem:[#allocation9 + $0x348] sm:$0xff]
    %v3458 = vld [vmem:[#allocation9 + $0x350] sm:$0xff]
    %v3459 = vld [vmem:[#allocation9 + $0x358] sm:$0xff]
    %v3460 = vld [vmem:[#allocation9 + $0x360] sm:$0xff]
    %v3461 = vld [vmem:[#allocation9 + $0x368] sm:$0xff]
    %v3462 = vld [vmem:[#allocation9 + $0x370] sm:$0xff]
    %v3463 = vld [vmem:[#allocation9 + $0x378] sm:$0xff]
    %v3464 = vld [vmem:[#allocation9 + $0x380] sm:$0xff]
    %v3465 = vld [vmem:[#allocation9 + $0x388] sm:$0xff]
    %v3466 = vld [vmem:[#allocation9 + $0x390] sm:$0xff]
    %v3467 = vld [vmem:[#allocation9 + $0x398] sm:$0xff]
    %v3468 = vld [vmem:[#allocation9 + $0x3a0] sm:$0xff]
    %v3469 = vld [vmem:[#allocation9 + $0x3a8] sm:$0xff]
    %v3470 = vld [vmem:[#allocation9 + $0x3b0] sm:$0xff]
    %v3471 = vld [vmem:[#allocation9 + $0x3b8] sm:$0xff]
    %v3472 = vld [vmem:[#allocation9 + $0x3c0] sm:$0xff]
    %v3473 = vld [vmem:[#allocation9 + $0x3c8] sm:$0xff]
    %v3474 = vld [vmem:[#allocation9 + $0x3d0] sm:$0xff]
    %v3475 = vld [vmem:[#allocation9 + $0x3d8] sm:$0xff]
    %v3476 = vld [vmem:[#allocation9 + $0x3e0] sm:$0xff]
    %v3477 = vld [vmem:[#allocation9 + $0x3e8] sm:$0xff]
    %v3478 = vld [vmem:[#allocation9 + $0x3f0] sm:$0xff]
    %v3479 = vld [vmem:[#allocation9 + $0x3f8] sm:$0xff]
    %v3480 = vld [vmem:[#allocation9 + $0x400] sm:$0xff]
    %v3481 = vld [vmem:[#allocation9 + $0x408] sm:$0xff]
    %v3482 = vld [vmem:[#allocation9 + $0x410] sm:$0xff]
    %v3483 = vld [vmem:[#allocation9 + $0x418] sm:$0xff]
    %v3484 = vld [vmem:[#allocation9 + $0x420] sm:$0xff]
    %v3485 = vld [vmem:[#allocation9 + $0x428] sm:$0xff]
    %v3486 = vld [vmem:[#allocation9 + $0x430] sm:$0xff]
    %v3487 = vld [vmem:[#allocation9 + $0x438] sm:$0xff]
    %v3488 = vld [vmem:[#allocation9 + $0x440] sm:$0xff]
    %v3489 = vld [vmem:[#allocation9 + $0x448] sm:$0xff]
    %v3490 = vld [vmem:[#allocation9 + $0x450] sm:$0xff]
    %v3491 = vld [vmem:[#allocation9 + $0x458] sm:$0xff]
    %v3492 = vld [vmem:[#allocation9 + $0x460] sm:$0xff]
    %v3493 = vld [vmem:[#allocation9 + $0x468] sm:$0xff]
    %v3494 = vld [vmem:[#allocation9 + $0x470] sm:$0xff]
    %v3495 = vld [vmem:[#allocation9 + $0x478] sm:$0xff]
    %v3496 = vld [vmem:[#allocation9 + $0x480] sm:$0xff]
    %v3497 = vld [vmem:[#allocation9 + $0x488] sm:$0xff]
    %v3498 = vld [vmem:[#allocation9 + $0x490] sm:$0xff]
    %v3499 = vld [vmem:[#allocation9 + $0x498] sm:$0xff]
    %v3500 = vld [vmem:[#allocation9 + $0x4a0] sm:$0xff]
    %v3501 = vld [vmem:[#allocation9 + $0x4a8] sm:$0xff]
    %v3502 = vld [vmem:[#allocation9 + $0x4b0] sm:$0xff]
    %v3503 = vld [vmem:[#allocation9 + $0x4b8] sm:$0xff]
    %v3504 = vld [vmem:[#allocation9 + $0x4c0] sm:$0xff]
    %v3505 = vld [vmem:[#allocation9 + $0x4c8] sm:$0xff]
    %v3506 = vld [vmem:[#allocation9 + $0x4d0] sm:$0xff]
    %v3507 = vld [vmem:[#allocation9 + $0x4d8] sm:$0xff]
    %v3508 = vld [vmem:[#allocation9 + $0x4e0] sm:$0xff]
    %v3509 = vld [vmem:[#allocation9 + $0x4e8] sm:$0xff]
    %v3510 = vld [vmem:[#allocation9 + $0x4f0] sm:$0xff]
    %v3511 = vld [vmem:[#allocation9 + $0x4f8] sm:$0xff]
    %v3512 = vld [vmem:[#allocation9 + $0x500] sm:$0xff]
    %v3513 = vld [vmem:[#allocation9 + $0x508] sm:$0xff]
    %v3514 = vld [vmem:[#allocation9 + $0x510] sm:$0xff]
    %v3515 = vld [vmem:[#allocation9 + $0x518] sm:$0xff]
    %v3516 = vld [vmem:[#allocation9 + $0x520] sm:$0xff]
    %v3517 = vld [vmem:[#allocation9 + $0x528] sm:$0xff]
    %v3518 = vld [vmem:[#allocation9 + $0x530] sm:$0xff]
    %v3519 = vld [vmem:[#allocation9 + $0x538] sm:$0xff]
    %v3520 = vld [vmem:[#allocation9 + $0x540] sm:$0xff]
    %v3521 = vld [vmem:[#allocation9 + $0x548] sm:$0xff]
    %v3522 = vld [vmem:[#allocation9 + $0x550] sm:$0xff]
    %v3523 = vld [vmem:[#allocation9 + $0x558] sm:$0xff]
    %v3524 = vld [vmem:[#allocation9 + $0x560] sm:$0xff]
    %v3525 = vld [vmem:[#allocation9 + $0x568] sm:$0xff]
    %v3526 = vld [vmem:[#allocation9 + $0x570] sm:$0xff]
    %v3527 = vld [vmem:[#allocation9 + $0x578] sm:$0xff]
    %v3528 = vld [vmem:[#allocation9 + $0x580] sm:$0xff]
    %v3529 = vld [vmem:[#allocation9 + $0x588] sm:$0xff]
    %v3530 = vld [vmem:[#allocation9 + $0x590] sm:$0xff]
    %v3531 = vld [vmem:[#allocation9 + $0x598] sm:$0xff]
    %v3532 = vld [vmem:[#allocation9 + $0x5a0] sm:$0xff]
    %v3533 = vld [vmem:[#allocation9 + $0x5a8] sm:$0xff]
    %v3534 = vld [vmem:[#allocation9 + $0x5b0] sm:$0xff]
    %v3535 = vld [vmem:[#allocation9 + $0x5b8] sm:$0xff]
    %v3536 = vld [vmem:[#allocation9 + $0x5c0] sm:$0xff]
    %v3537 = vld [vmem:[#allocation9 + $0x5c8] sm:$0xff]
    %v3538 = vld [vmem:[#allocation9 + $0x5d0] sm:$0xff]
    %v3539 = vld [vmem:[#allocation9 + $0x5d8] sm:$0xff]
    %v3540 = vld [vmem:[#allocation9 + $0x5e0] sm:$0xff]
    %v3541 = vld [vmem:[#allocation9 + $0x5e8] sm:$0xff]
    %v3542 = vld [vmem:[#allocation9 + $0x5f0] sm:$0xff]
    %v3543 = vld [vmem:[#allocation9 + $0x5f8] sm:$0xff]
    %v3544 = vld [vmem:[#allocation9 + $0x600] sm:$0xff]
    %v3545 = vld [vmem:[#allocation9 + $0x608] sm:$0xff]
    %v3546 = vld [vmem:[#allocation9 + $0x610] sm:$0xff]
    %v3547 = vld [vmem:[#allocation9 + $0x618] sm:$0xff]
    %v3548 = vld [vmem:[#allocation9 + $0x620] sm:$0xff]
    %v3549 = vld [vmem:[#allocation9 + $0x628] sm:$0xff]
    %v3550 = vld [vmem:[#allocation9 + $0x630] sm:$0xff]
    %v3551 = vld [vmem:[#allocation9 + $0x638] sm:$0xff]
    %v3552 = vld [vmem:[#allocation9 + $0x640] sm:$0xff]
    %v3553 = vld [vmem:[#allocation9 + $0x648] sm:$0xff]
    %v3554 = vld [vmem:[#allocation9 + $0x650] sm:$0xff]
    %v3555 = vld [vmem:[#allocation9 + $0x658] sm:$0xff]
    %v3556 = vld [vmem:[#allocation9 + $0x660] sm:$0xff]
    %v3557 = vld [vmem:[#allocation9 + $0x668] sm:$0xff]
    %v3558 = vld [vmem:[#allocation9 + $0x670] sm:$0xff]
    %v3559 = vld [vmem:[#allocation9 + $0x678] sm:$0xff]
    %v3560 = vld [vmem:[#allocation9 + $0x680] sm:$0xff]
    %v3561 = vld [vmem:[#allocation9 + $0x688] sm:$0xff]
    %v3562 = vld [vmem:[#allocation9 + $0x690] sm:$0xff]
    %v3563 = vld [vmem:[#allocation9 + $0x698] sm:$0xff]
    %v3564 = vld [vmem:[#allocation9 + $0x6a0] sm:$0xff]
    %v3565 = vld [vmem:[#allocation9 + $0x6a8] sm:$0xff]
    %v3566 = vld [vmem:[#allocation9 + $0x6b0] sm:$0xff]
    %v3567 = vld [vmem:[#allocation9 + $0x6b8] sm:$0xff]
    %v3568 = vld [vmem:[#allocation9 + $0x6c0] sm:$0xff]
    %v3569 = vld [vmem:[#allocation9 + $0x6c8] sm:$0xff]
    %v3570 = vld [vmem:[#allocation9 + $0x6d0] sm:$0xff]
    %v3571 = vld [vmem:[#allocation9 + $0x6d8] sm:$0xff]
    %v3572 = vld [vmem:[#allocation9 + $0x6e0] sm:$0xff]
    %v3573 = vld [vmem:[#allocation9 + $0x6e8] sm:$0xff]
    %v3574 = vld [vmem:[#allocation9 + $0x6f0] sm:$0xff]
    %v3575 = vld [vmem:[#allocation9 + $0x6f8] sm:$0xff]
    %v3576 = vld [vmem:[#allocation9 + $0x700] sm:$0xff]
    %v3577 = vld [vmem:[#allocation9 + $0x708] sm:$0xff]
    %v3578 = vld [vmem:[#allocation9 + $0x710] sm:$0xff]
    %v3579 = vld [vmem:[#allocation9 + $0x718] sm:$0xff]
    %v3580 = vld [vmem:[#allocation9 + $0x720] sm:$0xff]
    %v3581 = vld [vmem:[#allocation9 + $0x728] sm:$0xff]
    %v3582 = vld [vmem:[#allocation9 + $0x730] sm:$0xff]
    %v3583 = vld [vmem:[#allocation9 + $0x738] sm:$0xff]
    %v3584 = vld [vmem:[#allocation9 + $0x740] sm:$0xff]
    %v3585 = vld [vmem:[#allocation9 + $0x748] sm:$0xff]
    %v3586 = vld [vmem:[#allocation9 + $0x750] sm:$0xff]
    %v3587 = vld [vmem:[#allocation9 + $0x758] sm:$0xff]
    %v3588 = vld [vmem:[#allocation9 + $0x760] sm:$0xff]
    %v3589 = vld [vmem:[#allocation9 + $0x768] sm:$0xff]
    %v3590 = vld [vmem:[#allocation9 + $0x770] sm:$0xff]
    %v3591 = vld [vmem:[#allocation9 + $0x778] sm:$0xff]
    %v3592 = vld [vmem:[#allocation9 + $0x780] sm:$0xff]
    %v3593 = vld [vmem:[#allocation9 + $0x788] sm:$0xff]
    %v3594 = vld [vmem:[#allocation9 + $0x790] sm:$0xff]
    %v3595 = vld [vmem:[#allocation9 + $0x798] sm:$0xff]
    %v3596 = vld [vmem:[#allocation9 + $0x7a0] sm:$0xff]
    %v3597 = vld [vmem:[#allocation9 + $0x7a8] sm:$0xff]
    %v3598 = vld [vmem:[#allocation9 + $0x7b0] sm:$0xff]
    %v3599 = vld [vmem:[#allocation9 + $0x7b8] sm:$0xff]
    %v3600 = vld [vmem:[#allocation9 + $0x7c0] sm:$0xff]
    %v3601 = vld [vmem:[#allocation9 + $0x7c8] sm:$0xff]
    %v3602 = vld [vmem:[#allocation9 + $0x7d0] sm:$0xff]
    %v3603 = vld [vmem:[#allocation9 + $0x7d8] sm:$0xff]
    %v3604 = vld [vmem:[#allocation9 + $0x7e0] sm:$0xff]
    %v3605 = vld [vmem:[#allocation9 + $0x7e8] sm:$0xff]
    %v3606 = vld [vmem:[#allocation9 + $0x7f0] sm:$0xff]
    %v3607 = vld [vmem:[#allocation9 + $0x7f8] sm:$0xff]
    %v3608 = vld [vmem:[#allocation9 + $0x800] sm:$0xff]
    %v3609 = vld [vmem:[#allocation9 + $0x808] sm:$0xff]
    %v3610 = vld [vmem:[#allocation9 + $0x810] sm:$0xff]
    %v3611 = vld [vmem:[#allocation9 + $0x818] sm:$0xff]
    %v3612 = vld [vmem:[#allocation9 + $0x820] sm:$0xff]
    %v3613 = vld [vmem:[#allocation9 + $0x828] sm:$0xff]
    %v3614 = vld [vmem:[#allocation9 + $0x830] sm:$0xff]
    %v3615 = vld [vmem:[#allocation9 + $0x838] sm:$0xff]
    %v3616 = vld [vmem:[#allocation9 + $0x840] sm:$0x1]
    %v3617 = vld [vmem:[#allocation9 + $0x848] sm:$0x1]
    %v3618 = vld [vmem:[#allocation9 + $0x850] sm:$0x1]
    %v3619 = vld [vmem:[#allocation9 + $0x858] sm:$0x1]
    %v3620 = vld [vmem:[#allocation9 + $0x840] sm:$0xfe]
    %v3621 = vld [vmem:[#allocation9 + $0x848] sm:$0xfe]
    %v3622 = vld [vmem:[#allocation9 + $0x850] sm:$0xfe]
    %v3623 = vld [vmem:[#allocation9 + $0x858] sm:$0xfe]
    %v3624 = vld [vmem:[#allocation9 + $0x860] sm:$0xff]
    %v3625 = vld [vmem:[#allocation9 + $0x868] sm:$0xff]
    %v3626 = vld [vmem:[#allocation9 + $0x870] sm:$0xff]
    %v3627 = vld [vmem:[#allocation9 + $0x878] sm:$0xff]
    %v3628 = vld [vmem:[#allocation9 + $0x880] sm:$0xff]
    %v3629 = vld [vmem:[#allocation9 + $0x888] sm:$0xff]
    %v3630 = vld [vmem:[#allocation9 + $0x890] sm:$0xff]
    %v3631 = vld [vmem:[#allocation9 + $0x898] sm:$0xff]
    %v3632 = vld [vmem:[#allocation9 + $0x8a0] sm:$0xff]
    %v3633 = vld [vmem:[#allocation9 + $0x8a8] sm:$0xff]
    %v3634 = vld [vmem:[#allocation9 + $0x8b0] sm:$0xff]
    %v3635 = vld [vmem:[#allocation9 + $0x8b8] sm:$0xff]
    %v3636 = vld [vmem:[#allocation9 + $0x8c0] sm:$0x1]
    %v3637 = vld [vmem:[#allocation9 + $0x8c8] sm:$0x1]
    %v3638 = vld [vmem:[#allocation9 + $0x8d0] sm:$0x1]
    %v3639 = vld [vmem:[#allocation9 + $0x8d8] sm:$0x1]
    %vm3640 = vcmask 138240
    %v3642 = vsel %vm3640, %v3336, 0
    %v3645 = vsel %vm3640, %v3341, 0
    %v3648 = vsel %vm3640, %v3346, 0
    %v3651 = vsel %vm3640, %v3351, 0
    %vm3653 = vcmask 1040384
    %v3655 = vsel %vm3653, %v3616, 0
    %v3658 = vsel %vm3653, %v3617, 0
    %v3661 = vsel %vm3653, %v3618, 0
    %v3664 = vsel %vm3653, %v3619, 0
    %3666 = vmatprep.subr.mxu0 %v3353
    %3667 = vmatpush1.msra.mxu0 %v3352
    %3668 = vmatprep.subr.mxu0 %v3357
    %3669 = vmatpush1.msra.mxu0 %v3356
    %3670 = vmatprep.subr.mxu0 %v3361
    %3671 = vmatpush1.msra.mxu0 %v3360
    %3672 = vmatprep.subr.mxu0 %v3365
    %3673 = vmatpush1.msra.mxu0 %v3364
    %3674 = vmatprep.subr.mxu0 %v3369
    %3675 = vmatpush1.msra.mxu0 %v3368
    %3676 = vmatprep.subr.mxu0 %v3373
    %3677 = vmatpush1.msra.mxu0 %v3372
    %3678 = vmatprep.subr.mxu0 %v3377
    %3679 = vmatpush1.msra.mxu0 %v3376
    %3680 = vmatprep.subr.mxu0 %v3381
    %3681 = vmatpush1.msra.mxu0 %v3380
    %3682 = vmatprep.subr.mxu0 %v3385
    %3683 = vmatpush1.msra.mxu0 %v3384
    %3684 = vmatprep.subr.mxu0 %v3389
    %3685 = vmatpush1.msra.mxu0 %v3388
    %3686 = vmatprep.subr.mxu0 %v3393
    %3687 = vmatpush1.msra.mxu0 %v3392
    %3688 = vmatprep.subr.mxu0 %v3397
    %3689 = vmatpush1.msra.mxu0 %v3396
    %3690 = vmatprep.subr.mxu0 %v3401
    %3691 = vmatpush1.msra.mxu0 %v3400
    %3692 = vmatprep.subr.mxu0 %v3405
    %3693 = vmatpush1.msra.mxu0 %v3404
    %3694 = vmatprep.subr.mxu0 %v3409
    %3695 = vmatpush1.msra.mxu0 %v3408
    %3696 = vmatprep.subr.mxu0 %v3413
    %3697 = vmatpush1.msra.mxu0 %v3412
    %3698 = vmatprep.subr.mxu0 %v3417
    %3699 = vmatpush1.msra.mxu0 %v3416
    %3700 = vmatprep.subr.mxu0 %v3421
    %3701 = vmatpush1.msra.mxu0 %v3420
    %3702 = vmatprep.subr.mxu0 %v3425
    %3703 = vmatpush1.msra.mxu0 %v3424
    %3704 = vmatprep.subr.mxu0 %v3429
    %3705 = vmatpush1.msra.mxu0 %v3428
    %3706 = vmatprep.subr.mxu0 %v3433
    %3707 = vmatpush1.msra.mxu0 %v3432
    %3708 = vmatprep.subr.mxu0 %v3437
    %3709 = vmatpush1.msra.mxu0 %v3436
    %3710 = vmatprep.subr.mxu0 %v3441
    %3711 = vmatpush1.msra.mxu0 %v3440
    %3712 = vmatprep.subr.mxu0 %v3445
    %3713 = vmatpush1.msra.mxu0 %v3444
    %3714 = vmatprep.subr.mxu0 %v3449
    %3715 = vmatpush1.msra.mxu0 %v3448
    %3716 = vmatprep.subr.mxu0 %v3453
    %3717 = vmatpush1.msra.mxu0 %v3452
    %3718 = vmatprep.subr.mxu0 %v3457
    %3719 = vmatpush1.msra.mxu0 %v3456
    %3720 = vmatprep.subr.mxu0 %v3461
    %3721 = vmatpush1.msra.mxu0 %v3460
    %3722 = vmatprep.subr.mxu0 %v3465
    %3723 = vmatpush1.msra.mxu0 %v3464
    %3724 = vmatprep.subr.mxu0 %v3469
    %3725 = vmatpush1.msra.mxu0 %v3468
    %3726 = vmatprep.subr.mxu0 %v3473
    %3727 = vmatpush1.msra.mxu0 %v3472
    %3728 = vmatprep.subr.mxu0 %v3477
    %3729 = vmatpush1.msra.mxu0 %v3476
    %3730 = vmatprep.mubr.f32.mxu0 %v3333
    %3731 = vmatmul.mubr.f32.gmra.mrb[0].mxu0 %v3332
    %v3732 = vpop.f32.mrb[0].mxu0
    %v3733 = vadd.f32 0.0, %v3732
    %v3734 = vpop.f32.mrb[0].mxu0
    %v3735 = vadd.f32 0.0, %v3734
    %3736 = vmatprep.mubr.f32.mxu0 %v3338
    %3737 = vmatmul.mubr.f32.gmra.mrb[0].mxu0 %v3337
    %v3738 = vpop.f32.mrb[0].mxu0
    %v3739 = vadd.f32 0.0, %v3738
    %v3740 = vpop.f32.mrb[0].mxu0
    %v3741 = vadd.f32 0.0, %v3740
    %3742 = vmatprep.mubr.f32.mxu0 %v3343
    %3743 = vmatmul.mubr.f32.gmra.mrb[0].mxu0 %v3342
    %v3744 = vpop.f32.mrb[0].mxu0
    %v3745 = vadd.f32 0.0, %v3744
    %v3746 = vpop.f32.mrb[0].mxu0
    %v3747 = vadd.f32 0.0, %v3746
    %3748 = vmatprep.mubr.f32.mxu0 %v3348
    %3749 = vmatmul.mubr.f32.gmra.mrb[0].mxu0 %v3347
    %v3750 = vpop.f32.mrb[0].mxu0
    %v3751 = vadd.f32 0.0, %v3750
    %v3752 = vpop.f32.mrb[0].mxu0
    %v3753 = vadd.f32 0.0, %v3752
    %3754 = vdwg.mxu0
    %3755 = vmatprep.subr.mxu0 %v3481
    %3756 = vmatpush1.msra.mxu0 %v3480
    %3757 = vmatprep.subr.mxu0 %v3485
    %3758 = vmatpush1.msra.mxu0 %v3484
    %3759 = vmatprep.subr.mxu0 %v3489
    %3760 = vmatpush1.msra.mxu0 %v3488
    %3761 = vmatprep.subr.mxu0 %v3493
    %3762 = vmatpush1.msra.mxu0 %v3492
    %3763 = vmatprep.subr.mxu0 %v3497
    %3764 = vmatpush1.msra.mxu0 %v3496
    %3765 = vmatprep.subr.mxu0 %v3501
    %3766 = vmatpush1.msra.mxu0 %v3500
    %3767 = vmatprep.subr.mxu0 %v3505
    %3768 = vmatpush1.msra.mxu0 %v3504
    %3769 = vmatprep.subr.mxu0 %v3509
    %3770 = vmatpush1.msra.mxu0 %v3508
    %3771 = vmatprep.subr.mxu0 %v3513
    %3772 = vmatpush1.msra.mxu0 %v3512
    %3773 = vmatprep.subr.mxu0 %v3517
    %3774 = vmatpush1.msra.mxu0 %v3516
    %3775 = vmatprep.subr.mxu0 %v3521
    %3776 = vmatpush1.msra.mxu0 %v3520
    %3777 = vmatprep.subr.mxu0 %v3525
    %3778 = vmatpush1.msra.mxu0 %v3524
    %3779 = vmatprep.subr.mxu0 %v3529
    %3780 = vmatpush1.msra.mxu0 %v3528
    %3781 = vmatprep.subr.mxu0 %v3533
    %3782 = vmatpush1.msra.mxu0 %v3532
    %3783 = vmatprep.subr.mxu0 %v3537
    %3784 = vmatpush1.msra.mxu0 %v3536
    %3785 = vmatprep.subr.mxu0 %v3541
    %3786 = vmatpush1.msra.mxu0 %v3540
    %3787 = vmatprep.subr.mxu0 %v3545
    %3788 = vmatpush1.msra.mxu0 %v3544
    %3789 = vmatprep.subr.mxu0 %v3549
    %3790 = vmatpush1.msra.mxu0 %v3548
    %3791 = vmatprep.subr.mxu0 %v3553
    %3792 = vmatpush1.msra.mxu0 %v3552
    %3793 = vmatprep.subr.mxu0 %v3557
    %3794 = vmatpush1.msra.mxu0 %v3556
    %3795 = vmatprep.subr.mxu0 %v3561
    %3796 = vmatpush1.msra.mxu0 %v3560
    %3797 = vmatprep.subr.mxu0 %v3565
    %3798 = vmatpush1.msra.mxu0 %v3564
    %3799 = vmatprep.subr.mxu0 %v3569
    %3800 = vmatpush1.msra.mxu0 %v3568
    %3801 = vmatprep.subr.mxu0 %v3573
    %3802 = vmatpush1.msra.mxu0 %v3572
    %3803 = vmatprep.subr.mxu0 %v3577
    %3804 = vmatpush1.msra.mxu0 %v3576
    %3805 = vmatprep.subr.mxu0 %v3581
    %3806 = vmatpush1.msra.mxu0 %v3580
    %3807 = vmatprep.subr.mxu0 %v3585
    %3808 = vmatpush1.msra.mxu0 %v3584
    %3809 = vmatprep.subr.mxu0 %v3589
    %3810 = vmatpush1.msra.mxu0 %v3588
    %3811 = vmatprep.subr.mxu0 %v3593
    %3812 = vmatpush1.msra.mxu0 %v3592
    %3813 = vmatprep.subr.mxu0 %v3597
    %3814 = vmatpush1.msra.mxu0 %v3596
    %3815 = vmatprep.subr.mxu0 %v3601
    %3816 = vmatpush1.msra.mxu0 %v3600
    %3817 = vmatprep.subr.mxu0 %v3605
    %3818 = vmatpush1.msra.mxu0 %v3604
    %3819 = vmatprep.mubr.f32.mxu0 %v3335
    %3820 = vmatmul.mubr.f32.gmra.mrb[0].mxu0 %v3334
    %v3821 = vpop.f32.mrb[0].mxu0
    %v3822 = vadd.f32 %v3733, %v3821
    %v3823 = vpop.f32.mrb[0].mxu0
    %v3824 = vadd.f32 %v3735, %v3823
    %3825 = vmatprep.mubr.f32.mxu0 %v3340
    %3826 = vmatmul.mubr.f32.gmra.mrb[0].mxu0 %v3339
    %v3827 = vpop.f32.mrb[0].mxu0
    %v3828 = vadd.f32 %v3739, %v3827
    %v3829 = vpop.f32.mrb[0].mxu0
    %v3830 = vadd.f32 %v3741, %v3829
    %3831 = vmatprep.mubr.f32.mxu0 %v3345
    %3832 = vmatmul.mubr.f32.gmra.mrb[0].mxu0 %v3344
    %v3833 = vpop.f32.mrb[0].mxu0
    %v3834 = vadd.f32 %v3745, %v3833
    %v3835 = vpop.f32.mrb[0].mxu0
    %v3836 = vadd.f32 %v3747, %v3835
    %3837 = vmatprep.mubr.f32.mxu0 %v3350
    %3838 = vmatmul.mubr.f32.gmra.mrb[0].mxu0 %v3349
    %v3839 = vpop.f32.mrb[0].mxu0
    %v3840 = vadd.f32 %v3751, %v3839
    %v3841 = vpop.f32.mrb[0].mxu0
    %v3842 = vadd.f32 %v3753, %v3841
    %3843 = vdwg.mxu0
    %3844 = vmatprep.subr.mxu0 %v3609
    %3845 = vmatpush1.msra.mxu0 %v3608
    %3846 = vmatprep.subr.mxu0 %v3613
    %3847 = vmatpush1.msra.mxu0 %v3612
    %3848 = vmatprep.subr.mxu0 %v3658
    %3849 = vmatpush1.msra.mxu0 %v3655
    %3850 = vmatprep.subr.mxu0 0.0
    %3851 = vmatpush1.msra.mxu0 0.0
    %3852 = vmatprep.subr.mxu0 0.0
    %3853 = vmatpush1.msra.mxu0 0.0
    %3854 = vmatprep.subr.mxu0 0.0
    %3855 = vmatpush1.msra.mxu0 0.0
    %3856 = vmatprep.subr.mxu0 0.0
    %3857 = vmatpush1.msra.mxu0 0.0
    %3858 = vmatprep.subr.mxu0 0.0
    %3859 = vmatpush1.msra.mxu0 0.0
    %3860 = vmatprep.subr.mxu0 0.0
    %3861 = vmatpush1.msra.mxu0 0.0
    %3862 = vmatprep.subr.mxu0 0.0
    %3863 = vmatpush1.msra.mxu0 0.0
    %3864 = vmatprep.subr.mxu0 0.0
    %3865 = vmatpush1.msra.mxu0 0.0
    %3866 = vmatprep.subr.mxu0 0.0
    %3867 = vmatpush1.msra.mxu0 0.0
    %3868 = vmatprep.subr.mxu0 0.0
    %3869 = vmatpush1.msra.mxu0 0.0
    %3870 = vmatprep.subr.mxu0 0.0
    %3871 = vmatpush1.msra.mxu0 0.0
    %3872 = vmatprep.subr.mxu0 0.0
    %3873 = vmatpush1.msra.mxu0 0.0
    %3874 = vmatprep.subr.mxu0 0.0
    %3875 = vmatpush1.msra.mxu0 0.0
    %3876 = vmatprep.subr.mxu0 0.0
    %3877 = vmatpush1.msra.mxu0 0.0
    %3878 = vmatprep.subr.mxu0 0.0
    %3879 = vmatpush1.msra.mxu0 0.0
    %3880 = vmatprep.subr.mxu0 0.0
    %3881 = vmatpush1.msra.mxu0 0.0
    %3882 = vmatprep.subr.mxu0 0.0
    %3883 = vmatpush1.msra.mxu0 0.0
    %3884 = vmatprep.subr.mxu0 0.0
    %3885 = vmatpush1.msra.mxu0 0.0
    %3886 = vmatprep.subr.mxu0 0.0
    %3887 = vmatpush1.msra.mxu0 0.0
    %3888 = vmatprep.subr.mxu0 0.0
    %3889 = vmatpush1.msra.mxu0 0.0
    %3890 = vmatprep.subr.mxu0 0.0
    %3891 = vmatpush1.msra.mxu0 0.0
    %3892 = vmatprep.subr.mxu0 0.0
    %3893 = vmatpush1.msra.mxu0 0.0
    %3894 = vmatprep.subr.mxu0 0.0
    %3895 = vmatpush1.msra.mxu0 0.0
    %3896 = vmatprep.subr.mxu0 0.0
    %3897 = vmatpush1.msra.mxu0 0.0
    %3898 = vmatprep.subr.mxu0 0.0
    %3899 = vmatpush1.msra.mxu0 0.0
    %3900 = vmatprep.subr.mxu0 0.0
    %3901 = vmatpush1.msra.mxu0 0.0
    %3902 = vmatprep.subr.mxu0 0.0
    %3903 = vmatpush1.msra.mxu0 0.0
    %3904 = vmatprep.subr.mxu0 0.0
    %3905 = vmatpush1.msra.mxu0 0.0
    %3906 = vmatprep.subr.mxu0 0.0
    %3907 = vmatpush1.msra.mxu0 0.0
    %3908 = vmatprep.mubr.f32.mxu0 0.0
    %3909 = vmatmul.mubr.f32.gmra.mrb[0].mxu0 %v3642
    %v3910 = vpop.f32.mrb[0].mxu0
    %v3911 = vadd.f32 %v3822, %v3910
    %v3912 = vpop.f32.mrb[0].mxu0
    %v3913 = vadd.f32 %v3824, %v3912
    %3914 = vmatprep.mubr.f32.mxu0 0.0
    %3915 = vmatmul.mubr.f32.gmra.mrb[0].mxu0 %v3645
    %v3916 = vpop.f32.mrb[0].mxu0
    %v3917 = vadd.f32 %v3828, %v3916
    %v3918 = vpop.f32.mrb[0].mxu0
    %v3919 = vadd.f32 %v3830, %v3918
    %3920 = vmatprep.mubr.f32.mxu0 0.0
    %3921 = vmatmul.mubr.f32.gmra.mrb[0].mxu0 %v3648
    %v3922 = vpop.f32.mrb[0].mxu0
    %v3923 = vadd.f32 %v3834, %v3922
    %v3924 = vpop.f32.mrb[0].mxu0
    %v3925 = vadd.f32 %v3836, %v3924
    %3926 = vmatprep.mubr.f32.mxu0 0.0
    %3927 = vmatmul.mubr.f32.gmra.mrb[0].mxu0 %v3651
    %v3928 = vpop.f32.mrb[0].mxu0
    %v3929 = vadd.f32 %v3840, %v3928
    %v3930 = vpop.f32.mrb[0].mxu0
    %v3931 = vadd.f32 %v3842, %v3930
    %3932 = vdwg.mxu0
    %3933 = vmatprep.subr.mxu0 %v3355
    %3934 = vmatpush1.msra.mxu0 %v3354
    %3935 = vmatprep.subr.mxu0 %v3359
    %3936 = vmatpush1.msra.mxu0 %v3358
    %3937 = vmatprep.subr.mxu0 %v3363
    %3938 = vmatpush1.msra.mxu0 %v3362
    %3939 = vmatprep.subr.mxu0 %v3367
    %3940 = vmatpush1.msra.mxu0 %v3366
    %3941 = vmatprep.subr.mxu0 %v3371
    %3942 = vmatpush1.msra.mxu0 %v3370
    %3943 = vmatprep.subr.mxu0 %v3375
    %3944 = vmatpush1.msra.mxu0 %v3374
    %3945 = vmatprep.subr.mxu0 %v3379
    %3946 = vmatpush1.msra.mxu0 %v3378
    %3947 = vmatprep.subr.mxu0 %v3383
    %3948 = vmatpush1.msra.mxu0 %v3382
    %3949 = vmatprep.subr.mxu0 %v3387
    %3950 = vmatpush1.msra.mxu0 %v3386
    %3951 = vmatprep.subr.mxu0 %v3391
    %3952 = vmatpush1.msra.mxu0 %v3390
    %3953 = vmatprep.subr.mxu0 %v3395
    %3954 = vmatpush1.msra.mxu0 %v3394
    %3955 = vmatprep.subr.mxu0 %v3399
    %3956 = vmatpush1.msra.mxu0 %v3398
    %3957 = vmatprep.subr.mxu0 %v3403
    %3958 = vmatpush1.msra.mxu0 %v3402
    %3959 = vmatprep.subr.mxu0 %v3407
    %3960 = vmatpush1.msra.mxu0 %v3406
    %3961 = vmatprep.subr.mxu0 %v3411
    %3962 = vmatpush1.msra.mxu0 %v3410
    %3963 = vmatprep.subr.mxu0 %v3415
    %3964 = vmatpush1.msra.mxu0 %v3414
    %3965 = vmatprep.subr.mxu0 %v3419
    %3966 = vmatpush1.msra.mxu0 %v3418
    %3967 = vmatprep.subr.mxu0 %v3423
    %3968 = vmatpush1.msra.mxu0 %v3422
    %3969 = vmatprep.subr.mxu0 %v3427
    %3970 = vmatpush1.msra.mxu0 %v3426
    %3971 = vmatprep.subr.mxu0 %v3431
    %3972 = vmatpush1.msra.mxu0 %v3430
    %3973 = vmatprep.subr.mxu0 %v3435
    %3974 = vmatpush1.msra.mxu0 %v3434
    %3975 = vmatprep.subr.mxu0 %v3439
    %3976 = vmatpush1.msra.mxu0 %v3438
    %3977 = vmatprep.subr.mxu0 %v3443
    %3978 = vmatpush1.msra.mxu0 %v3442
    %3979 = vmatprep.subr.mxu0 %v3447
    %3980 = vmatpush1.msra.mxu0 %v3446
    %3981 = vmatprep.subr.mxu0 %v3451
    %3982 = vmatpush1.msra.mxu0 %v3450
    %3983 = vmatprep.subr.mxu0 %v3455
    %3984 = vmatpush1.msra.mxu0 %v3454
    %3985 = vmatprep.subr.mxu0 %v3459
    %3986 = vmatpush1.msra.mxu0 %v3458
    %3987 = vmatprep.subr.mxu0 %v3463
    %3988 = vmatpush1.msra.mxu0 %v3462
    %3989 = vmatprep.subr.mxu0 %v3467
    %3990 = vmatpush1.msra.mxu0 %v3466
    %3991 = vmatprep.subr.mxu0 %v3471
    %3992 = vmatpush1.msra.mxu0 %v3470
    %3993 = vmatprep.subr.mxu0 %v3475
    %3994 = vmatpush1.msra.mxu0 %v3474
    %3995 = vmatprep.subr.mxu0 %v3479
    %3996 = vmatpush1.msra.mxu0 %v3478
    %3997 = vmatprep.mubr.f32.mxu0 %v3333
    %3998 = vmatmul.mubr.f32.gmra.mrb[0].mxu0 %v3332
    %v3999 = vpop.f32.mrb[0].mxu0
    %v4000 = vadd.f32 0.0, %v3999
    %v4001 = vpop.f32.mrb[0].mxu0
    %v4002 = vadd.f32 0.0, %v4001
    %4003 = vmatprep.mubr.f32.mxu0 %v3338
    %4004 = vmatmul.mubr.f32.gmra.mrb[0].mxu0 %v3337
    %v4005 = vpop.f32.mrb[0].mxu0
    %v4006 = vadd.f32 0.0, %v4005
    %v4007 = vpop.f32.mrb[0].mxu0
    %v4008 = vadd.f32 0.0, %v4007
    %4009 = vmatprep.mubr.f32.mxu0 %v3343
    %4010 = vmatmul.mubr.f32.gmra.mrb[0].mxu0 %v3342
    %v4011 = vpop.f32.mrb[0].mxu0
    %v4012 = vadd.f32 0.0, %v4011
    %v4013 = vpop.f32.mrb[0].mxu0
    %v4014 = vadd.f32 0.0, %v4013
    %4015 = vmatprep.mubr.f32.mxu0 %v3348
    %4016 = vmatmul.mubr.f32.gmra.mrb[0].mxu0 %v3347
    %v4017 = vpop.f32.mrb[0].mxu0
    %v4018 = vadd.f32 0.0, %v4017
    %v4019 = vpop.f32.mrb[0].mxu0
    %v4020 = vadd.f32 0.0, %v4019
    %4021 = vdwg.mxu0
    %4022 = vmatprep.subr.mxu0 %v3483
    %4023 = vmatpush1.msra.mxu0 %v3482
    %4024 = vmatprep.subr.mxu0 %v3487
    %4025 = vmatpush1.msra.mxu0 %v3486
    %4026 = vmatprep.subr.mxu0 %v3491
    %4027 = vmatpush1.msra.mxu0 %v3490
    %4028 = vmatprep.subr.mxu0 %v3495
    %4029 = vmatpush1.msra.mxu0 %v3494
    %4030 = vmatprep.subr.mxu0 %v3499
    %4031 = vmatpush1.msra.mxu0 %v3498
    %4032 = vmatprep.subr.mxu0 %v3503
    %4033 = vmatpush1.msra.mxu0 %v3502
    %4034 = vmatprep.subr.mxu0 %v3507
    %4035 = vmatpush1.msra.mxu0 %v3506
    %4036 = vmatprep.subr.mxu0 %v3511
    %4037 = vmatpush1.msra.mxu0 %v3510
    %4038 = vmatprep.subr.mxu0 %v3515
    %4039 = vmatpush1.msra.mxu0 %v3514
    %4040 = vmatprep.subr.mxu0 %v3519
    %4041 = vmatpush1.msra.mxu0 %v3518
    %4042 = vmatprep.subr.mxu0 %v3523
    %4043 = vmatpush1.msra.mxu0 %v3522
    %4044 = vmatprep.subr.mxu0 %v3527
    %4045 = vmatpush1.msra.mxu0 %v3526
    %4046 = vmatprep.subr.mxu0 %v3531
    %4047 = vmatpush1.msra.mxu0 %v3530
    %4048 = vmatprep.subr.mxu0 %v3535
    %4049 = vmatpush1.msra.mxu0 %v3534
    %4050 = vmatprep.subr.mxu0 %v3539
    %4051 = vmatpush1.msra.mxu0 %v3538
    %4052 = vmatprep.subr.mxu0 %v3543
    %4053 = vmatpush1.msra.mxu0 %v3542
    %4054 = vmatprep.subr.mxu0 %v3547
    %4055 = vmatpush1.msra.mxu0 %v3546
    %4056 = vmatprep.subr.mxu0 %v3551
    %4057 = vmatpush1.msra.mxu0 %v3550
    %4058 = vmatprep.subr.mxu0 %v3555
    %4059 = vmatpush1.msra.mxu0 %v3554
    %4060 = vmatprep.subr.mxu0 %v3559
    %4061 = vmatpush1.msra.mxu0 %v3558
    %4062 = vmatprep.subr.mxu0 %v3563
    %4063 = vmatpush1.msra.mxu0 %v3562
    %4064 = vmatprep.subr.mxu0 %v3567
    %4065 = vmatpush1.msra.mxu0 %v3566
    %4066 = vmatprep.subr.mxu0 %v3571
    %4067 = vmatpush1.msra.mxu0 %v3570
    %4068 = vmatprep.subr.mxu0 %v3575
    %4069 = vmatpush1.msra.mxu0 %v3574
    %4070 = vmatprep.subr.mxu0 %v3579
    %4071 = vmatpush1.msra.mxu0 %v3578
    %4072 = vmatprep.subr.mxu0 %v3583
    %4073 = vmatpush1.msra.mxu0 %v3582
    %4074 = vmatprep.subr.mxu0 %v3587
    %4075 = vmatpush1.msra.mxu0 %v3586
    %4076 = vmatprep.subr.mxu0 %v3591
    %4077 = vmatpush1.msra.mxu0 %v3590
    %4078 = vmatprep.subr.mxu0 %v3595
    %4079 = vmatpush1.msra.mxu0 %v3594
    %4080 = vmatprep.subr.mxu0 %v3599
    %4081 = vmatpush1.msra.mxu0 %v3598
    %4082 = vmatprep.subr.mxu0 %v3603
    %4083 = vmatpush1.msra.mxu0 %v3602
    %4084 = vmatprep.subr.mxu0 %v3607
    %4085 = vmatpush1.msra.mxu0 %v3606
    %4086 = vmatprep.mubr.f32.mxu0 %v3335
    %4087 = vmatmul.mubr.f32.gmra.mrb[0].mxu0 %v3334
    %v4088 = vpop.f32.mrb[0].mxu0
    %v4089 = vadd.f32 %v4000, %v4088
    %v4090 = vpop.f32.mrb[0].mxu0
    %v4091 = vadd.f32 %v4002, %v4090
    %4092 = vmatprep.mubr.f32.mxu0 %v3340
    %4093 = vmatmul.mubr.f32.gmra.mrb[0].mxu0 %v3339
    %v4094 = vpop.f32.mrb[0].mxu0
    %v4095 = vadd.f32 %v4006, %v4094
    %v4096 = vpop.f32.mrb[0].mxu0
    %v4097 = vadd.f32 %v4008, %v4096
    %4098 = vmatprep.mubr.f32.mxu0 %v3345
    %4099 = vmatmul.mubr.f32.gmra.mrb[0].mxu0 %v3344
    %v4100 = vpop.f32.mrb[0].mxu0
    %v4101 = vadd.f32 %v4012, %v4100
    %v4102 = vpop.f32.mrb[0].mxu0
    %v4103 = vadd.f32 %v4014, %v4102
    %4104 = vmatprep.mubr.f32.mxu0 %v3350
    %4105 = vmatmul.mubr.f32.gmra.mrb[0].mxu0 %v3349
    %v4106 = vpop.f32.mrb[0].mxu0
    %v4107 = vadd.f32 %v4018, %v4106
    %v4108 = vpop.f32.mrb[0].mxu0
    %v4109 = vadd.f32 %v4020, %v4108
    %4110 = vdwg.mxu0
    %4111 = vmatprep.subr.mxu0 %v3611
    %4112 = vmatpush1.msra.mxu0 %v3610
    %4113 = vmatprep.subr.mxu0 %v3615
    %4114 = vmatpush1.msra.mxu0 %v3614
    %4115 = vmatprep.subr.mxu0 %v3664
    %4116 = vmatpush1.msra.mxu0 %v3661
    %4117 = vmatprep.subr.mxu0 0.0
    %4118 = vmatpush1.msra.mxu0 0.0
    %4119 = vmatprep.subr.mxu0 0.0
    %4120 = vmatpush1.msra.mxu0 0.0
    %4121 = vmatprep.subr.mxu0 0.0
    %4122 = vmatpush1.msra.mxu0 0.0
    %4123 = vmatprep.subr.mxu0 0.0
    %4124 = vmatpush1.msra.mxu0 0.0
    %4125 = vmatprep.subr.mxu0 0.0
    %4126 = vmatpush1.msra.mxu0 0.0
    %4127 = vmatprep.subr.mxu0 0.0
    %4128 = vmatpush1.msra.mxu0 0.0
    %4129 = vmatprep.subr.mxu0 0.0
    %4130 = vmatpush1.msra.mxu0 0.0
    %4131 = vmatprep.subr.mxu0 0.0
    %4132 = vmatpush1.msra.mxu0 0.0
    %4133 = vmatprep.subr.mxu0 0.0
    %4134 = vmatpush1.msra.mxu0 0.0
    %4135 = vmatprep.subr.mxu0 0.0
    %4136 = vmatpush1.msra.mxu0 0.0
    %4137 = vmatprep.subr.mxu0 0.0
    %4138 = vmatpush1.msra.mxu0 0.0
    %4139 = vmatprep.subr.mxu0 0.0
    %4140 = vmatpush1.msra.mxu0 0.0
    %4141 = vmatprep.subr.mxu0 0.0
    %4142 = vmatpush1.msra.mxu0 0.0
    %4143 = vmatprep.subr.mxu0 0.0
    %4144 = vmatpush1.msra.mxu0 0.0
    %4145 = vmatprep.subr.mxu0 0.0
    %4146 = vmatpush1.msra.mxu0 0.0
    %4147 = vmatprep.subr.mxu0 0.0
    %4148 = vmatpush1.msra.mxu0 0.0
    %4149 = vmatprep.subr.mxu0 0.0
    %4150 = vmatpush1.msra.mxu0 0.0
    %4151 = vmatprep.subr.mxu0 0.0
    %4152 = vmatpush1.msra.mxu0 0.0
    %4153 = vmatprep.subr.mxu0 0.0
    %4154 = vmatpush1.msra.mxu0 0.0
    %4155 = vmatprep.subr.mxu0 0.0
    %4156 = vmatpush1.msra.mxu0 0.0
    %4157 = vmatprep.subr.mxu0 0.0
    %4158 = vmatpush1.msra.mxu0 0.0
    %4159 = vmatprep.subr.mxu0 0.0
    %4160 = vmatpush1.msra.mxu0 0.0
    %4161 = vmatprep.subr.mxu0 0.0
    %4162 = vmatpush1.msra.mxu0 0.0
    %4163 = vmatprep.subr.mxu0 0.0
    %4164 = vmatpush1.msra.mxu0 0.0
    %4165 = vmatprep.subr.mxu0 0.0
    %4166 = vmatpush1.msra.mxu0 0.0
    %4167 = vmatprep.subr.mxu0 0.0
    %4168 = vmatpush1.msra.mxu0 0.0
    %4169 = vmatprep.subr.mxu0 0.0
    %4170 = vmatpush1.msra.mxu0 0.0
    %4171 = vmatprep.subr.mxu0 0.0
    %4172 = vmatpush1.msra.mxu0 0.0
    %4173 = vmatprep.subr.mxu0 0.0
    %4174 = vmatpush1.msra.mxu0 0.0
    %4175 = vmatprep.mubr.f32.mxu0 0.0
    %4176 = vmatmul.mubr.f32.gmra.mrb[0].mxu0 %v3642
    %v4177 = vpop.f32.mrb[0].mxu0
    %v4178 = vadd.f32 %v4089, %v4177
    %v4179 = vpop.f32.mrb[0].mxu0
    %v4180 = vadd.f32 %v4091, %v4179
    %4181 = vmatprep.mubr.f32.mxu0 0.0
    %4182 = vmatmul.mubr.f32.gmra.mrb[0].mxu0 %v3645
    %v4183 = vpop.f32.mrb[0].mxu0
    %v4184 = vadd.f32 %v4095, %v4183
    %v4185 = vpop.f32.mrb[0].mxu0
    %v4186 = vadd.f32 %v4097, %v4185
    %4187 = vmatprep.mubr.f32.mxu0 0.0
    %4188 = vmatmul.mubr.f32.gmra.mrb[0].mxu0 %v3648
    %v4189 = vpop.f32.mrb[0].mxu0
    %v4190 = vadd.f32 %v4101, %v4189
    %v4191 = vpop.f32.mrb[0].mxu0
    %v4192 = vadd.f32 %v4103, %v4191
    %4193 = vmatprep.mubr.f32.mxu0 0.0
    %4194 = vmatmul.mubr.f32.gmra.mrb[0].mxu0 %v3651
    %v4195 = vpop.f32.mrb[0].mxu0
    %v4196 = vadd.f32 %v4107, %v4195
    %v4197 = vpop.f32.mrb[0].mxu0
    %v4198 = vadd.f32 %v4109, %v4197
    %4199 = vdwg.mxu0
    %vm4220 = vcmask 1046528
    %v4221 = vrot.slane %v3620, 1
    %v4222 = vrot.slane %v3624, 1
    %v4223 = vsel %vm4220, %v4221, %v4222
    %v4224 = vrot.slane %v3621, 1
    %v4225 = vrot.slane %v3625, 1
    %v4226 = vsel %vm4220, %v4224, %v4225
    %v4227 = vrot.slane %v3622, 1
    %v4228 = vrot.slane %v3626, 1
    %v4229 = vsel %vm4220, %v4227, %v4228
    %v4230 = vrot.slane %v3623, 1
    %v4231 = vrot.slane %v3627, 1
    %v4232 = vsel %vm4220, %v4230, %v4231
    %v4233 = vrot.slane %v3628, 1
    %v4234 = vsel %vm4220, %v4222, %v4233
    %v4235 = vrot.slane %v3629, 1
    %v4236 = vsel %vm4220, %v4225, %v4235
    %v4237 = vrot.slane %v3630, 1
    %v4238 = vsel %vm4220, %v4228, %v4237
    %v4239 = vrot.slane %v3631, 1
    %v4240 = vsel %vm4220, %v4231, %v4239
    %v4241 = vrot.slane %v3632, 1
    %v4242 = vsel %vm4220, %v4233, %v4241
    %v4243 = vrot.slane %v3633, 1
    %v4244 = vsel %vm4220, %v4235, %v4243
    %v4245 = vrot.slane %v3634, 1
    %v4246 = vsel %vm4220, %v4237, %v4245
    %v4247 = vrot.slane %v3635, 1
    %v4248 = vsel %vm4220, %v4239, %v4247
    %v4249 = vrot.slane %v3636, 1
    %v4250 = vsel %vm4220, %v4241, %v4249
    %v4251 = vrot.slane %v3637, 1
    %v4252 = vsel %vm4220, %v4243, %v4251
    %v4253 = vrot.slane %v3638, 1
    %v4254 = vsel %vm4220, %v4245, %v4253
    %v4255 = vrot.slane %v3639, 1
    %v4256 = vsel %vm4220, %v4247, %v4255
    %v4273 = vmul.f32 %v3911, %v4223
    %v4274 = vmul.f32 %v3913, %v4226
    %v4275 = vmul.f32 %v4178, %v4229
    %v4276 = vmul.f32 %v4180, %v4232
    %v4277 = vmul.f32 %v3917, %v4234
    %v4278 = vmul.f32 %v3919, %v4236
    %v4279 = vmul.f32 %v4184, %v4238
    %v4280 = vmul.f32 %v4186, %v4240
    %v4281 = vmul.f32 %v3923, %v4242
    %v4282 = vmul.f32 %v3925, %v4244
    %v4283 = vmul.f32 %v4190, %v4246
    %v4284 = vmul.f32 %v4192, %v4248
    %v4285 = vmul.f32 %v3929, %v4250
    %v4286 = vmul.f32 %v3931, %v4252
    %v4287 = vmul.f32 %v4196, %v4254
    %v4288 = vmul.f32 %v4198, %v4256
    %v4289 = vld [vmem:[#allocation10 + $0x300] sm:$0x3]
    %v4291 = vsel %vm635, %v4289, 0
    %4293 = vmatprep.subr.mxu0 %v4274
    %4294 = vmatpush1.msra.mxu0 %v4273
    %4295 = vmatprep.subr.mxu0 %v4278
    %4296 = vmatpush1.msra.mxu0 %v4277
    %4297 = vmatprep.subr.mxu0 %v4282
    %4298 = vmatpush1.msra.mxu0 %v4281
    %4299 = vmatprep.subr.mxu0 %v4286
    %4300 = vmatpush1.msra.mxu0 %v4285
    %4301 = vmatprep.subr.mxu0 0.0
    %4302 = vmatpush1.msra.mxu0 0.0
    %4303 = vmatprep.subr.mxu0 0.0
    %4304 = vmatpush1.msra.mxu0 0.0
    %4305 = vmatprep.subr.mxu0 0.0
    %4306 = vmatpush1.msra.mxu0 0.0
    %4307 = vmatprep.subr.mxu0 0.0
    %4308 = vmatpush1.msra.mxu0 0.0
    %4309 = vmatprep.subr.mxu0 0.0
    %4310 = vmatpush1.msra.mxu0 0.0
    %4311 = vmatprep.subr.mxu0 0.0
    %4312 = vmatpush1.msra.mxu0 0.0
    %4313 = vmatprep.subr.mxu0 0.0
    %4314 = vmatpush1.msra.mxu0 0.0
    %4315 = vmatprep.subr.mxu0 0.0
    %4316 = vmatpush1.msra.mxu0 0.0
    %4317 = vmatprep.subr.mxu0 0.0
    %4318 = vmatpush1.msra.mxu0 0.0
    %4319 = vmatprep.subr.mxu0 0.0
    %4320 = vmatpush1.msra.mxu0 0.0
    %4321 = vmatprep.subr.mxu0 0.0
    %4322 = vmatpush1.msra.mxu0 0.0
    %4323 = vmatprep.subr.mxu0 0.0
    %4324 = vmatpush1.msra.mxu0 0.0
    %4325 = vmatprep.subr.mxu0 0.0
    %4326 = vmatpush1.msra.mxu0 0.0
    %4327 = vmatprep.subr.mxu0 0.0
    %4328 = vmatpush1.msra.mxu0 0.0
    %4329 = vmatprep.subr.mxu0 0.0
    %4330 = vmatpush1.msra.mxu0 0.0
    %4331 = vmatprep.subr.mxu0 0.0
    %4332 = vmatpush1.msra.mxu0 0.0
    %4333 = vmatprep.subr.mxu0 0.0
    %4334 = vmatpush1.msra.mxu0 0.0
    %4335 = vmatprep.subr.mxu0 0.0
    %4336 = vmatpush1.msra.mxu0 0.0
    %4337 = vmatprep.subr.mxu0 0.0
    %4338 = vmatpush1.msra.mxu0 0.0
    %4339 = vmatprep.subr.mxu0 0.0
    %4340 = vmatpush1.msra.mxu0 0.0
    %4341 = vmatprep.subr.mxu0 0.0
    %4342 = vmatpush1.msra.mxu0 0.0
    %4343 = vmatprep.subr.mxu0 0.0
    %4344 = vmatpush1.msra.mxu0 0.0
    %4345 = vmatprep.subr.mxu0 0.0
    %4346 = vmatpush1.msra.mxu0 0.0
    %4347 = vmatprep.subr.mxu0 0.0
    %4348 = vmatpush1.msra.mxu0 0.0
    %4349 = vmatprep.subr.mxu0 0.0
    %4350 = vmatpush1.msra.mxu0 0.0
    %4351 = vmatprep.subr.mxu0 0.0
    %4352 = vmatpush1.msra.mxu0 0.0
    %4353 = vmatprep.subr.mxu0 0.0
    %4354 = vmatpush1.msra.mxu0 0.0
    %4355 = vmatprep.subr.mxu0 0.0
    %4356 = vmatpush1.msra.mxu0 0.0
    %4357 = vmatprep.mubr.f32.mxu0 0.0
    %4358 = vmatmul.mubr.f32.gmra.mrb[0].mxu0 %v4291
    %v4359 = vpop.f32.mrb[0].mxu0
    %v4360 = vadd.f32 0.0, %v4359
    %v4361 = vpop.f32.mrb[0].mxu0
    %v4362 = vadd.f32 0.0, %v4361
    %4363 = vdwg.mxu0
    %4364 = vmatprep.subr.mxu0 %v4276
    %4365 = vmatpush1.msra.mxu0 %v4275
    %4366 = vmatprep.subr.mxu0 %v4280
    %4367 = vmatpush1.msra.mxu0 %v4279
    %4368 = vmatprep.subr.mxu0 %v4284
    %4369 = vmatpush1.msra.mxu0 %v4283
    %4370 = vmatprep.subr.mxu0 %v4288
    %4371 = vmatpush1.msra.mxu0 %v4287
    %4372 = vmatprep.subr.mxu0 0.0
    %4373 = vmatpush1.msra.mxu0 0.0
    %4374 = vmatprep.subr.mxu0 0.0
    %4375 = vmatpush1.msra.mxu0 0.0
    %4376 = vmatprep.subr.mxu0 0.0
    %4377 = vmatpush1.msra.mxu0 0.0
    %4378 = vmatprep.subr.mxu0 0.0
    %4379 = vmatpush1.msra.mxu0 0.0
    %4380 = vmatprep.subr.mxu0 0.0
    %4381 = vmatpush1.msra.mxu0 0.0
    %4382 = vmatprep.subr.mxu0 0.0
    %4383 = vmatpush1.msra.mxu0 0.0
    %4384 = vmatprep.subr.mxu0 0.0
    %4385 = vmatpush1.msra.mxu0 0.0
    %4386 = vmatprep.subr.mxu0 0.0
    %4387 = vmatpush1.msra.mxu0 0.0
    %4388 = vmatprep.subr.mxu0 0.0
    %4389 = vmatpush1.msra.mxu0 0.0
    %4390 = vmatprep.subr.mxu0 0.0
    %4391 = vmatpush1.msra.mxu0 0.0
    %4392 = vmatprep.subr.mxu0 0.0
    %4393 = vmatpush1.msra.mxu0 0.0
    %4394 = vmatprep.subr.mxu0 0.0
    %4395 = vmatpush1.msra.mxu0 0.0
    %4396 = vmatprep.subr.mxu0 0.0
    %4397 = vmatpush1.msra.mxu0 0.0
    %4398 = vmatprep.subr.mxu0 0.0
    %4399 = vmatpush1.msra.mxu0 0.0
    %4400 = vmatprep.subr.mxu0 0.0
    %4401 = vmatpush1.msra.mxu0 0.0
    %4402 = vmatprep.subr.mxu0 0.0
    %4403 = vmatpush1.msra.mxu0 0.0
    %4404 = vmatprep.subr.mxu0 0.0
    %4405 = vmatpush1.msra.mxu0 0.0
    %4406 = vmatprep.subr.mxu0 0.0
    %4407 = vmatpush1.msra.mxu0 0.0
    %4408 = vmatprep.subr.mxu0 0.0
    %4409 = vmatpush1.msra.mxu0 0.0
    %4410 = vmatprep.subr.mxu0 0.0
    %4411 = vmatpush1.msra.mxu0 0.0
    %4412 = vmatprep.subr.mxu0 0.0
    %4413 = vmatpush1.msra.mxu0 0.0
    %4414 = vmatprep.subr.mxu0 0.0
    %4415 = vmatpush1.msra.mxu0 0.0
    %4416 = vmatprep.subr.mxu0 0.0
    %4417 = vmatpush1.msra.mxu0 0.0
    %4418 = vmatprep.subr.mxu0 0.0
    %4419 = vmatpush1.msra.mxu0 0.0
    %4420 = vmatprep.subr.mxu0 0.0
    %4421 = vmatpush1.msra.mxu0 0.0
    %4422 = vmatprep.subr.mxu0 0.0
    %4423 = vmatpush1.msra.mxu0 0.0
    %4424 = vmatprep.subr.mxu0 0.0
    %4425 = vmatpush1.msra.mxu0 0.0
    %4426 = vmatprep.subr.mxu0 0.0
    %4427 = vmatpush1.msra.mxu0 0.0
    %4428 = vmatprep.mubr.f32.mxu0 0.0
    %4429 = vmatmul.mubr.f32.gmra.mrb[0].mxu0 %v4291
    %v4430 = vpop.f32.mrb[0].mxu0
    %v4431 = vadd.f32 0.0, %v4430
    %v4432 = vpop.f32.mrb[0].mxu0
    %v4433 = vadd.f32 0.0, %v4432
    %4434 = vdwg.mxu0
    %v4435 = vld [vmem:[#allocation10] sm:$0xff]
    %v4436 = vld [vmem:[#allocation10 + $0x8] sm:$0xff]
    %v4437 = vld [vmem:[#allocation10 + $0x10] sm:$0xff]
    %v4438 = vld [vmem:[#allocation10 + $0x18] sm:$0xff]
    %v4439 = vld [vmem:[#allocation10 + $0x20] sm:$0xff]
    %v4440 = vld [vmem:[#allocation10 + $0x28] sm:$0xff]
    %v4441 = vld [vmem:[#allocation10 + $0x30] sm:$0xff]
    %v4442 = vld [vmem:[#allocation10 + $0x38] sm:$0xff]
    %v4443 = vld [vmem:[#allocation10 + $0x40] sm:$0xff]
    %v4444 = vld [vmem:[#allocation10 + $0x48] sm:$0xff]
    %v4445 = vld [vmem:[#allocation10 + $0x50] sm:$0xff]
    %v4446 = vld [vmem:[#allocation10 + $0x58] sm:$0xff]
    %v4447 = vld [vmem:[#allocation10 + $0x60] sm:$0xff]
    %v4448 = vld [vmem:[#allocation10 + $0x68] sm:$0xff]
    %v4449 = vld [vmem:[#allocation10 + $0x70] sm:$0xff]
    %v4450 = vld [vmem:[#allocation10 + $0x78] sm:$0xff]
    %v4451 = vld [vmem:[#allocation10 + $0x80] sm:$0xff]
    %v4452 = vld [vmem:[#allocation10 + $0x88] sm:$0xff]
    %v4453 = vld [vmem:[#allocation10 + $0x90] sm:$0xff]
    %v4454 = vld [vmem:[#allocation10 + $0x98] sm:$0xff]
    %v4455 = vld [vmem:[#allocation10 + $0xa0] sm:$0xff]
    %v4456 = vld [vmem:[#allocation10 + $0xa8] sm:$0xff]
    %v4457 = vld [vmem:[#allocation10 + $0xb0] sm:$0xff]
    %v4458 = vld [vmem:[#allocation10 + $0xb8] sm:$0xff]
    %v4459 = vld [vmem:[#allocation10 + $0xc0] sm:$0xff]
    %v4460 = vld [vmem:[#allocation10 + $0xc8] sm:$0xff]
    %v4461 = vld [vmem:[#allocation10 + $0xd0] sm:$0xff]
    %v4462 = vld [vmem:[#allocation10 + $0xd8] sm:$0xff]
    %v4463 = vld [vmem:[#allocation10 + $0xe0] sm:$0xff]
    %v4464 = vld [vmem:[#allocation10 + $0xe8] sm:$0xff]
    %v4465 = vld [vmem:[#allocation10 + $0xf0] sm:$0xff]
    %v4466 = vld [vmem:[#allocation10 + $0xf8] sm:$0xff]
    %v4467 = vld [vmem:[#allocation10 + $0x100] sm:$0xff]
    %v4468 = vld [vmem:[#allocation10 + $0x108] sm:$0xff]
    %v4469 = vld [vmem:[#allocation10 + $0x110] sm:$0xff]
    %v4470 = vld [vmem:[#allocation10 + $0x118] sm:$0xff]
    %v4471 = vld [vmem:[#allocation10 + $0x120] sm:$0xff]
    %v4472 = vld [vmem:[#allocation10 + $0x128] sm:$0xff]
    %v4473 = vld [vmem:[#allocation10 + $0x130] sm:$0xff]
    %v4474 = vld [vmem:[#allocation10 + $0x138] sm:$0xff]
    %v4475 = vld [vmem:[#allocation10 + $0x140] sm:$0xff]
    %v4476 = vld [vmem:[#allocation10 + $0x148] sm:$0xff]
    %v4477 = vld [vmem:[#allocation10 + $0x150] sm:$0xff]
    %v4478 = vld [vmem:[#allocation10 + $0x158] sm:$0xff]
    %v4479 = vld [vmem:[#allocation10 + $0x160] sm:$0xff]
    %v4480 = vld [vmem:[#allocation10 + $0x168] sm:$0xff]
    %v4481 = vld [vmem:[#allocation10 + $0x170] sm:$0xff]
    %v4482 = vld [vmem:[#allocation10 + $0x178] sm:$0xff]
    %v4483 = vld [vmem:[#allocation10 + $0x180] sm:$0xff]
    %v4484 = vld [vmem:[#allocation10 + $0x188] sm:$0xff]
    %v4485 = vld [vmem:[#allocation10 + $0x190] sm:$0xff]
    %v4486 = vld [vmem:[#allocation10 + $0x198] sm:$0xff]
    %v4487 = vld [vmem:[#allocation10 + $0x1a0] sm:$0xff]
    %v4488 = vld [vmem:[#allocation10 + $0x1a8] sm:$0xff]
    %v4489 = vld [vmem:[#allocation10 + $0x1b0] sm:$0xff]
    %v4490 = vld [vmem:[#allocation10 + $0x1b8] sm:$0xff]
    %v4491 = vld [vmem:[#allocation10 + $0x1c0] sm:$0xff]
    %v4492 = vld [vmem:[#allocation10 + $0x1c8] sm:$0xff]
    %v4493 = vld [vmem:[#allocation10 + $0x1d0] sm:$0xff]
    %v4494 = vld [vmem:[#allocation10 + $0x1d8] sm:$0xff]
    %v4495 = vld [vmem:[#allocation10 + $0x1e0] sm:$0xff]
    %v4496 = vld [vmem:[#allocation10 + $0x1e8] sm:$0xff]
    %v4497 = vld [vmem:[#allocation10 + $0x1f0] sm:$0xff]
    %v4498 = vld [vmem:[#allocation10 + $0x1f8] sm:$0xff]
    %v4499 = vld [vmem:[#allocation10 + $0x302] sm:$0x1]
    %v4500 = vlaneseq
    %v4501 = vshrl.u32 %v4500, 7
    %v4502 = vsub.s32 0, %v4501
    %v4503 = vrot.slane %v4499, %v4502
    %4504 = vmatprep.subr.mxu0 0.0
    %4505 = vmatpush1.msra.mxu0 %v4435
    %4506 = vmatprep.subr.mxu0 0.0
    %4507 = vmatpush1.msra.mxu0 %v4436
    %4508 = vmatprep.subr.mxu0 0.0
    %4509 = vmatpush1.msra.mxu0 %v4437
    %4510 = vmatprep.subr.mxu0 0.0
    %4511 = vmatpush1.msra.mxu0 %v4438
    %4512 = vmatprep.subr.mxu0 0.0
    %4513 = vmatpush1.msra.mxu0 %v4439
    %4514 = vmatprep.subr.mxu0 0.0
    %4515 = vmatpush1.msra.mxu0 %v4440
    %4516 = vmatprep.subr.mxu0 0.0
    %4517 = vmatpush1.msra.mxu0 %v4441
    %4518 = vmatprep.subr.mxu0 0.0
    %4519 = vmatpush1.msra.mxu0 %v4442
    %4520 = vmatprep.subr.mxu0 0.0
    %4521 = vmatpush1.msra.mxu0 %v4443
    %4522 = vmatprep.subr.mxu0 0.0
    %4523 = vmatpush1.msra.mxu0 %v4444
    %4524 = vmatprep.subr.mxu0 0.0
    %4525 = vmatpush1.msra.mxu0 %v4445
    %4526 = vmatprep.subr.mxu0 0.0
    %4527 = vmatpush1.msra.mxu0 %v4446
    %4528 = vmatprep.subr.mxu0 0.0
    %4529 = vmatpush1.msra.mxu0 %v4447
    %4530 = vmatprep.subr.mxu0 0.0
    %4531 = vmatpush1.msra.mxu0 %v4448
    %4532 = vmatprep.subr.mxu0 0.0
    %4533 = vmatpush1.msra.mxu0 %v4449
    %4534 = vmatprep.subr.mxu0 0.0
    %4535 = vmatpush1.msra.mxu0 %v4450
    %4536 = vmatprep.subr.mxu0 0.0
    %4537 = vmatpush1.msra.mxu0 %v4451
    %4538 = vmatprep.subr.mxu0 0.0
    %4539 = vmatpush1.msra.mxu0 %v4452
    %4540 = vmatprep.subr.mxu0 0.0
    %4541 = vmatpush1.msra.mxu0 %v4453
    %4542 = vmatprep.subr.mxu0 0.0
    %4543 = vmatpush1.msra.mxu0 %v4454
    %4544 = vmatprep.subr.mxu0 0.0
    %4545 = vmatpush1.msra.mxu0 %v4455
    %4546 = vmatprep.subr.mxu0 0.0
    %4547 = vmatpush1.msra.mxu0 %v4456
    %4548 = vmatprep.subr.mxu0 0.0
    %4549 = vmatpush1.msra.mxu0 %v4457
    %4550 = vmatprep.subr.mxu0 0.0
    %4551 = vmatpush1.msra.mxu0 %v4458
    %4552 = vmatprep.subr.mxu0 0.0
    %4553 = vmatpush1.msra.mxu0 %v4459
    %4554 = vmatprep.subr.mxu0 0.0
    %4555 = vmatpush1.msra.mxu0 %v4460
    %4556 = vmatprep.subr.mxu0 0.0
    %4557 = vmatpush1.msra.mxu0 %v4461
    %4558 = vmatprep.subr.mxu0 0.0
    %4559 = vmatpush1.msra.mxu0 %v4462
    %4560 = vmatprep.subr.mxu0 0.0
    %4561 = vmatpush1.msra.mxu0 %v4463
    %4562 = vmatprep.subr.mxu0 0.0
    %4563 = vmatpush1.msra.mxu0 %v4464
    %4564 = vmatprep.subr.mxu0 0.0
    %4565 = vmatpush1.msra.mxu0 %v4465
    %4566 = vmatprep.subr.mxu0 0.0
    %4567 = vmatpush1.msra.mxu0 %v4466
    %4568 = vmatprep.mubr.f32.mxu0 %v4362
    %4569 = vmatmul.mubr.f32.gmra.mrb[0].mxu0 %v4360
    %v4570 = vpop.f32.mrb[0].mxu0
    %v4571 = vadd.f32 %v4503, %v4570
    %v4572 = vpop.f32.mrb[0].mxu0
    %4573 = vdwg.mxu0
    %4574 = vmatprep.subr.mxu0 0.0
    %4575 = vmatpush1.msra.mxu0 %v4467
    %4576 = vmatprep.subr.mxu0 0.0
    %4577 = vmatpush1.msra.mxu0 %v4468
    %4578 = vmatprep.subr.mxu0 0.0
    %4579 = vmatpush1.msra.mxu0 %v4469
    %4580 = vmatprep.subr.mxu0 0.0
    %4581 = vmatpush1.msra.mxu0 %v4470
    %4582 = vmatprep.subr.mxu0 0.0
    %4583 = vmatpush1.msra.mxu0 %v4471
    %4584 = vmatprep.subr.mxu0 0.0
    %4585 = vmatpush1.msra.mxu0 %v4472
    %4586 = vmatprep.subr.mxu0 0.0
    %4587 = vmatpush1.msra.mxu0 %v4473
    %4588 = vmatprep.subr.mxu0 0.0
    %4589 = vmatpush1.msra.mxu0 %v4474
    %4590 = vmatprep.subr.mxu0 0.0
    %4591 = vmatpush1.msra.mxu0 %v4475
    %4592 = vmatprep.subr.mxu0 0.0
    %4593 = vmatpush1.msra.mxu0 %v4476
    %4594 = vmatprep.subr.mxu0 0.0
    %4595 = vmatpush1.msra.mxu0 %v4477
    %4596 = vmatprep.subr.mxu0 0.0
    %4597 = vmatpush1.msra.mxu0 %v4478
    %4598 = vmatprep.subr.mxu0 0.0
    %4599 = vmatpush1.msra.mxu0 %v4479
    %4600 = vmatprep.subr.mxu0 0.0
    %4601 = vmatpush1.msra.mxu0 %v4480
    %4602 = vmatprep.subr.mxu0 0.0
    %4603 = vmatpush1.msra.mxu0 %v4481
    %4604 = vmatprep.subr.mxu0 0.0
    %4605 = vmatpush1.msra.mxu0 %v4482
    %4606 = vmatprep.subr.mxu0 0.0
    %4607 = vmatpush1.msra.mxu0 %v4483
    %4608 = vmatprep.subr.mxu0 0.0
    %4609 = vmatpush1.msra.mxu0 %v4484
    %4610 = vmatprep.subr.mxu0 0.0
    %4611 = vmatpush1.msra.mxu0 %v4485
    %4612 = vmatprep.subr.mxu0 0.0
    %4613 = vmatpush1.msra.mxu0 %v4486
    %4614 = vmatprep.subr.mxu0 0.0
    %4615 = vmatpush1.msra.mxu0 %v4487
    %4616 = vmatprep.subr.mxu0 0.0
    %4617 = vmatpush1.msra.mxu0 %v4488
    %4618 = vmatprep.subr.mxu0 0.0
    %4619 = vmatpush1.msra.mxu0 %v4489
    %4620 = vmatprep.subr.mxu0 0.0
    %4621 = vmatpush1.msra.mxu0 %v4490
    %4622 = vmatprep.subr.mxu0 0.0
    %4623 = vmatpush1.msra.mxu0 %v4491
    %4624 = vmatprep.subr.mxu0 0.0
    %4625 = vmatpush1.msra.mxu0 %v4492
    %4626 = vmatprep.subr.mxu0 0.0
    %4627 = vmatpush1.msra.mxu0 %v4493
    %4628 = vmatprep.subr.mxu0 0.0
    %4629 = vmatpush1.msra.mxu0 %v4494
    %4630 = vmatprep.subr.mxu0 0.0
    %4631 = vmatpush1.msra.mxu0 %v4495
    %4632 = vmatprep.subr.mxu0 0.0
    %4633 = vmatpush1.msra.mxu0 %v4496
    %4634 = vmatprep.subr.mxu0 0.0
    %4635 = vmatpush1.msra.mxu0 %v4497
    %4636 = vmatprep.subr.mxu0 0.0
    %4637 = vmatpush1.msra.mxu0 %v4498
    %4638 = vmatprep.mubr.f32.mxu0 %v4433
    %4639 = vmatmul.mubr.f32.gmra.mrb[0].mxu0 %v4431
    %v4640 = vpop.f32.mrb[0].mxu0
    %v4641 = vadd.f32 %v4571, %v4640
    %v4642 = vpop.f32.mrb[0].mxu0
    %4643 = vdwg.mxu0
    %v4644 = vmax.f32 %v4641, 0.0
    %v4645 = vld [vmem:[#allocation10 + $0x200] sm:$0xff]
    %v4646 = vld [vmem:[#allocation10 + $0x208] sm:$0xff]
    %v4647 = vld [vmem:[#allocation10 + $0x210] sm:$0xff]
    %v4648 = vld [vmem:[#allocation10 + $0x218] sm:$0xff]
    %v4649 = vld [vmem:[#allocation10 + $0x220] sm:$0xff]
    %v4650 = vld [vmem:[#allocation10 + $0x228] sm:$0xff]
    %v4651 = vld [vmem:[#allocation10 + $0x230] sm:$0xff]
    %v4652 = vld [vmem:[#allocation10 + $0x238] sm:$0xff]
    %v4653 = vld [vmem:[#allocation10 + $0x240] sm:$0xff]
    %v4654 = vld [vmem:[#allocation10 + $0x248] sm:$0xff]
    %v4655 = vld [vmem:[#allocation10 + $0x250] sm:$0xff]
    %v4656 = vld [vmem:[#allocation10 + $0x258] sm:$0xff]
    %v4657 = vld [vmem:[#allocation10 + $0x260] sm:$0xff]
    %v4658 = vld [vmem:[#allocation10 + $0x268] sm:$0xff]
    %v4659 = vld [vmem:[#allocation10 + $0x270] sm:$0xff]
    %v4660 = vld [vmem:[#allocation10 + $0x278] sm:$0xff]
    %v4661 = vld [vmem:[#allocation10 + $0x303] sm:$0x1]
    %v4662 = vlaneseq
    %v4663 = vshrl.u32 %v4662, 7
    %v4664 = vsub.s32 0, %v4663
    %v4665 = vrot.slane %v4661, %v4664
    %4666 = vmatprep.subr.mxu0 0.0
    %4667 = vmatpush1.msra.mxu0 %v4645
    %4668 = vmatprep.subr.mxu0 0.0
    %4669 = vmatpush1.msra.mxu0 %v4646
    %4670 = vmatprep.subr.mxu0 0.0
    %4671 = vmatpush1.msra.mxu0 %v4647
    %4672 = vmatprep.subr.mxu0 0.0
    %4673 = vmatpush1.msra.mxu0 %v4648
    %4674 = vmatprep.subr.mxu0 0.0
    %4675 = vmatpush1.msra.mxu0 %v4649
    %4676 = vmatprep.subr.mxu0 0.0
    %4677 = vmatpush1.msra.mxu0 %v4650
    %4678 = vmatprep.subr.mxu0 0.0
    %4679 = vmatpush1.msra.mxu0 %v4651
    %4680 = vmatprep.subr.mxu0 0.0
    %4681 = vmatpush1.msra.mxu0 %v4652
    %4682 = vmatprep.subr.mxu0 0.0
    %4683 = vmatpush1.msra.mxu0 %v4653
    %4684 = vmatprep.subr.mxu0 0.0
    %4685 = vmatpush1.msra.mxu0 %v4654
    %4686 = vmatprep.subr.mxu0 0.0
    %4687 = vmatpush1.msra.mxu0 %v4655
    %4688 = vmatprep.subr.mxu0 0.0
    %4689 = vmatpush1.msra.mxu0 %v4656
    %4690 = vmatprep.subr.mxu0 0.0
    %4691 = vmatpush1.msra.mxu0 %v4657
    %4692 = vmatprep.subr.mxu0 0.0
    %4693 = vmatpush1.msra.mxu0 %v4658
    %4694 = vmatprep.subr.mxu0 0.0
    %4695 = vmatpush1.msra.mxu0 %v4659
    %4696 = vmatprep.subr.mxu0 0.0
    %4697 = vmatpush1.msra.mxu0 %v4660
    %4698 = vmatprep.subr.mxu0 0.0
    %4699 = vmatpush1.msra.mxu0 0.0
    %4700 = vmatprep.subr.mxu0 0.0
    %4701 = vmatpush1.msra.mxu0 0.0
    %4702 = vmatprep.subr.mxu0 0.0
    %4703 = vmatpush1.msra.mxu0 0.0
    %4704 = vmatprep.subr.mxu0 0.0
    %4705 = vmatpush1.msra.mxu0 0.0
    %4706 = vmatprep.subr.mxu0 0.0
    %4707 = vmatpush1.msra.mxu0 0.0
    %4708 = vmatprep.subr.mxu0 0.0
    %4709 = vmatpush1.msra.mxu0 0.0
    %4710 = vmatprep.subr.mxu0 0.0
    %4711 = vmatpush1.msra.mxu0 0.0
    %4712 = vmatprep.subr.mxu0 0.0
    %4713 = vmatpush1.msra.mxu0 0.0
    %4714 = vmatprep.subr.mxu0 0.0
    %4715 = vmatpush1.msra.mxu0 0.0
    %4716 = vmatprep.subr.mxu0 0.0
    %4717 = vmatpush1.msra.mxu0 0.0
    %4718 = vmatprep.subr.mxu0 0.0
    %4719 = vmatpush1.msra.mxu0 0.0
    %4720 = vmatprep.subr.mxu0 0.0
    %4721 = vmatpush1.msra.mxu0 0.0
    %4722 = vmatprep.subr.mxu0 0.0
    %4723 = vmatpush1.msra.mxu0 0.0
    %4724 = vmatprep.subr.mxu0 0.0
    %4725 = vmatpush1.msra.mxu0 0.0
    %4726 = vmatprep.subr.mxu0 0.0
    %4727 = vmatpush1.msra.mxu0 0.0
    %4728 = vmatprep.subr.mxu0 0.0
    %4729 = vmatpush1.msra.mxu0 0.0
    %4730 = vmatprep.mubr.f32.mxu0 0.0
    %4731 = vmatmul.mubr.f32.gmra.mrb[0].mxu0 %v4644
    %v4732 = vpop.f32.mrb[0].mxu0
    %v4733 = vadd.f32 %v4665, %v4732
    %v4734 = vpop.f32.mrb[0].mxu0
    %4735 = vdwg.mxu0
    %v4736 = vmax.f32 %v4733, 0.0
    %v4737 = vld [vmem:[#allocation10 + $0x280] sm:$0xff]
    %v4738 = vld [vmem:[#allocation10 + $0x288] sm:$0xff]
    %v4739 = vld [vmem:[#allocation10 + $0x290] sm:$0xff]
    %v4740 = vld [vmem:[#allocation10 + $0x298] sm:$0xff]
    %v4741 = vld [vmem:[#allocation10 + $0x2a0] sm:$0xff]
    %v4742 = vld [vmem:[#allocation10 + $0x2a8] sm:$0xff]
    %v4743 = vld [vmem:[#allocation10 + $0x2b0] sm:$0xff]
    %v4744 = vld [vmem:[#allocation10 + $0x2b8] sm:$0xff]
    %v4745 = vld [vmem:[#allocation10 + $0x2c0] sm:$0xff]
    %v4746 = vld [vmem:[#allocation10 + $0x2c8] sm:$0xff]
    %v4747 = vld [vmem:[#allocation10 + $0x2d0] sm:$0xff]
    %v4748 = vld [vmem:[#allocation10 + $0x2d8] sm:$0xff]
    %v4749 = vld [vmem:[#allocation10 + $0x2e0] sm:$0xff]
    %v4750 = vld [vmem:[#allocation10 + $0x2e8] sm:$0xff]
    %v4751 = vld [vmem:[#allocation10 + $0x2f0] sm:$0xff]
    %v4752 = vld [vmem:[#allocation10 + $0x2f8] sm:$0xff]
    %v4753 = vld [vmem:[#allocation10 + $0x304] sm:$0x1]
    %v4754 = vlaneseq
    %v4755 = vshrl.u32 %v4754, 7
    %v4756 = vsub.s32 0, %v4755
    %v4757 = vrot.slane %v4753, %v4756
    %4758 = vmatprep.subr.mxu0 0.0
    %4759 = vmatpush1.msra.mxu0 %v4737
    %4760 = vmatprep.subr.mxu0 0.0
    %4761 = vmatpush1.msra.mxu0 %v4738
    %4762 = vmatprep.subr.mxu0 0.0
    %4763 = vmatpush1.msra.mxu0 %v4739
    %4764 = vmatprep.subr.mxu0 0.0
    %4765 = vmatpush1.msra.mxu0 %v4740
    %4766 = vmatprep.subr.mxu0 0.0
    %4767 = vmatpush1.msra.mxu0 %v4741
    %4768 = vmatprep.subr.mxu0 0.0
    %4769 = vmatpush1.msra.mxu0 %v4742
    %4770 = vmatprep.subr.mxu0 0.0
    %4771 = vmatpush1.msra.mxu0 %v4743
    %4772 = vmatprep.subr.mxu0 0.0
    %4773 = vmatpush1.msra.mxu0 %v4744
    %4774 = vmatprep.subr.mxu0 0.0
    %4775 = vmatpush1.msra.mxu0 %v4745
    %4776 = vmatprep.subr.mxu0 0.0
    %4777 = vmatpush1.msra.mxu0 %v4746
    %4778 = vmatprep.subr.mxu0 0.0
    %4779 = vmatpush1.msra.mxu0 %v4747
    %4780 = vmatprep.subr.mxu0 0.0
    %4781 = vmatpush1.msra.mxu0 %v4748
    %4782 = vmatprep.subr.mxu0 0.0
    %4783 = vmatpush1.msra.mxu0 %v4749
    %4784 = vmatprep.subr.mxu0 0.0
    %4785 = vmatpush1.msra.mxu0 %v4750
    %4786 = vmatprep.subr.mxu0 0.0
    %4787 = vmatpush1.msra.mxu0 %v4751
    %4788 = vmatprep.subr.mxu0 0.0
    %4789 = vmatpush1.msra.mxu0 %v4752
    %4790 = vmatprep.subr.mxu0 0.0
    %4791 = vmatpush1.msra.mxu0 0.0
    %4792 = vmatprep.subr.mxu0 0.0
    %4793 = vmatpush1.msra.mxu0 0.0
    %4794 = vmatprep.subr.mxu0 0.0
    %4795 = vmatpush1.msra.mxu0 0.0
    %4796 = vmatprep.subr.mxu0 0.0
    %4797 = vmatpush1.msra.mxu0 0.0
    %4798 = vmatprep.subr.mxu0 0.0
    %4799 = vmatpush1.msra.mxu0 0.0
    %4800 = vmatprep.subr.mxu0 0.0
    %4801 = vmatpush1.msra.mxu0 0.0
    %4802 = vmatprep.subr.mxu0 0.0
    %4803 = vmatpush1.msra.mxu0 0.0
    %4804 = vmatprep.subr.mxu0 0.0
    %4805 = vmatpush1.msra.mxu0 0.0
    %4806 = vmatprep.subr.mxu0 0.0
    %4807 = vmatpush1.msra.mxu0 0.0
    %4808 = vmatprep.subr.mxu0 0.0
    %4809 = vmatpush1.msra.mxu0 0.0
    %4810 = vmatprep.subr.mxu0 0.0
    %4811 = vmatpush1.msra.mxu0 0.0
    %4812 = vmatprep.subr.mxu0 0.0
    %4813 = vmatpush1.msra.mxu0 0.0
    %4814 = vmatprep.subr.mxu0 0.0
    %4815 = vmatpush1.msra.mxu0 0.0
    %4816 = vmatprep.subr.mxu0 0.0
    %4817 = vmatpush1.msra.mxu0 0.0
    %4818 = vmatprep.subr.mxu0 0.0
    %4819 = vmatpush1.msra.mxu0 0.0
    %4820 = vmatprep.subr.mxu0 0.0
    %4821 = vmatpush1.msra.mxu0 0.0
    %4822 = vmatprep.mubr.f32.mxu0 0.0
    %4823 = vmatmul.mubr.f32.gmra.mrb[0].mxu0 %v4736
    %v4824 = vpop.f32.mrb[0].mxu0
    %v4825 = vadd.f32 %v4757, %v4824
    %v4826 = vpop.f32.mrb[0].mxu0
    %4827 = vdwg.mxu0
    %4828 = vst [vmem:[#allocation12] sm:$0x3] %v4825
    // Predicated region
    $region38: #{custom_prediction_forward.1} parent=1 // pred_check
      _
    $region39: #{custom_prediction_forward.1} parent=1 // pred_check_branch
      %4830 = sbr.rel (0) target = $region41
    $region40: #{custom_prediction_forward.1} parent=1 // pred_region
      %s4832 = ssub.s32 32, 32
      %4833 = vsyncadd [#allocation6], %s4832
      %s4835 = sshll.u32 [#allocation12], 4
      %s4836 = int_to_ptr.vmem [resolvable:$true] %s4835
      %4838 = dma.vmem_to_hbm [thread:$0]  %s4836, 32, %s5, [#allocation6]
    $region41: #{custom_prediction_forward.1} parent=1 // pred_fallthru
      _
    // Predicated region
    $region42: #{custom_prediction_forward.1} parent=1 // pred_check
      _
    $region43: #{custom_prediction_forward.1} parent=1 // pred_check_branch
      %4840 = sbr.rel (0) target = $region45
    $region44: #{custom_prediction_forward.1} parent=1 // pred_region
      %4841 = dma.done [#allocation6], 32
    $region45: #{custom_prediction_forward.1} parent=1 // pred_fallthru
      _
    %4842 = vsyncpa [#allocation5], 1
    %4843 = vsyncpa [#allocation8], 1
    %4844 = vsyncpa [#allocation11], 1
    %4845 = vsyncpa [#allocation6], 1

</llo_original>
